<compile_context>
chip_gen: v6e
topology: v6e:2x2x1
jax: 0.10.0
libtpu: 0.0.40
codegen_flags: <defaults>
</compile_context>

<pallas_src>
import jax
import jax.numpy as jnp
from jax.experimental import pallas as pl
from jax.experimental.pallas import tpu as pltpu


def conv_block_kernel(xp_ref, w1_ref, t1_ref, w2_ref, t2_ref,
                      o_ref, patch1_ref, mid_ref, patch2_ref):
    # xp_ref    : (1, H+4, W+2, Cinp)  bf16 zero-padded input (whole image)
    # w1_ref    : (9*Cinp, Cp)         bf16 conv1 weights (BN1 scale folded in)
    # w2_ref    : (9*Cp, Cp)           bf16 conv2 weights (BN2 scale folded in)
    # t*_ref    : (1, Cp)              f32 folded conv-bias + BN shift
    # o_ref     : (1, TH, W, Cp)       f32 output row tile
    # patch1_ref: (TH+2, W, 9*Cinp)    bf16 scratch: conv1 im2col patch
    # mid_ref   : (TH+2, W+2, Cp)      bf16 scratch: padded intermediate
    # patch2_ref: (TH,   W, 9*Cp)      bf16 scratch: conv2 im2col patch
    TH, W, Cp = o_ref.shape[1], o_ref.shape[2], o_ref.shape[3]
    Cinp = xp_ref.shape[3]
    Hext = TH + 2
    r = pl.program_id(1)

    # (TH+4) padded input rows feed this tile's (TH+2) conv1 output rows.
    row0 = pl.multiple_of(r * TH, TH)

    # ---- conv1: im2col -> single (M, 9*Cinp) x (9*Cinp, Cp) matmul ----
    # Each tap is loaded directly from the ref (shifted window) and stored to
    # a lane-aligned channel block of the patch scratch.
    for dy in range(3):
        for dx in range(3):
            c0 = (dy * 3 + dx) * Cinp
            patch1_ref[:, :, c0:c0 + Cinp] = xp_ref[
                0, pl.ds(row0 + dy, Hext), dx:dx + W, :]
    acc1 = jnp.dot(patch1_ref[...].reshape(Hext * W, 9 * Cinp), w1_ref[...],
                   preferred_element_type=jnp.float32)
    y1 = jnp.maximum(acc1 + t1_ref[...], 0.0)      # shift + ReLU (scale in w1)

    # Stage the zero-padded intermediate: interior = y1, borders = 0.
    mid_ref[:, 1:W + 1, :] = y1.astype(jnp.bfloat16).reshape(Hext, W, Cp)
    zcol = jnp.zeros((Hext, 1, Cp), jnp.bfloat16)
    mid_ref[:, 0:1, :] = zcol
    mid_ref[:, W + 1:W + 2, :] = zcol
    zrow = jnp.zeros((1, W + 2, Cp), jnp.bfloat16)

    @pl.when(r == 0)                       # top halo row is conv2's zero pad
    def _():
        mid_ref[0:1, :, :] = zrow

    @pl.when(r == pl.num_programs(1) - 1)  # bottom halo row is zero pad
    def _():
        mid_ref[Hext - 1:Hext, :, :] = zrow

    # ---- conv2: im2col -> single (M, 9*Cp) x (9*Cp, Cp) matmul ----
    for dy in range(3):
        for dx in range(3):
            c0 = (dy * 3 + dx) * Cp
            patch2_ref[:, :, c0:c0 + Cp] = mid_ref[dy:dy + TH, dx:dx + W, :]
    acc2 = jnp.dot(patch2_ref[...].reshape(TH * W, 9 * Cp), w2_ref[...],
                   preferred_element_type=jnp.float32)
    y2 = jnp.maximum(acc2 + t2_ref[...], 0.0)      # shift + ReLU (scale in w2)

    # Dropout(p=0.3) in eval mode is the identity.
    o_ref[...] = y2.reshape(1, TH, W, Cp)


def _round_up(v, m):
    return ((v + m - 1) // m) * m


def conv_block_forward(x_nchw, params, eps=1e-5, tile_h=8):
    """conv_block forward (inference). Input/output NCHW like PyTorch."""
    (w1, b1, g1, beta1, m1, v1, w2, b2, g2, beta2, m2, v2) = params
    N, Cin, H, W = x_nchw.shape
    Cout = w1.shape[0]

    # Lane-dense channel padding (multiple of 128); sliced off at the end.
    Cinp = _round_up(Cin, 128)
    Cp = _round_up(Cout, 128)

    # Row-tile height: largest divisor of H that is <= tile_h.
    # (On v7x use roughly half the tile_h of v5e/v6e for real UNet sizes.)
    TH = min(tile_h, H)
    while H % TH:
        TH -= 1
    R = H // TH

    # NCHW -> NHWC; pad H by 2 / W by 1 (conv1 halo so conv2's halo rows can
    # be recomputed per tile); pad channels; cast to bf16 (f32 accumulation).
    x = jnp.transpose(x_nchw, (0, 2, 3, 1)).astype(jnp.float32)
    xp = jnp.pad(x, ((0, 0), (2, 2), (1, 1), (0, Cinp - Cin)))
    xp = xp.astype(jnp.bfloat16)

    # Fold BatchNorm (inference) into the convs:
    #   bn(conv(x, W) + b) = conv(x, W * s) + ((b - mean) * s + beta),
    #   s = gamma / sqrt(var + eps)   (scale folded into weights, shift kept).
    s1 = (g1 / jnp.sqrt(v1 + eps)).astype(jnp.float32)
    t1 = ((b1 - m1) * s1 + beta1).astype(jnp.float32)
    s2 = (g2 / jnp.sqrt(v2 + eps)).astype(jnp.float32)
    t2 = ((b2 - m2) * s2 + beta2).astype(jnp.float32)

    # OIHW -> HWIO, scale Cout axis, zero-pad channels, reshape to
    # (9*Cin, Cout) so each conv is a single matmul with (dy, dx, cin) order.
    w1h = jnp.transpose(w1, (2, 3, 1, 0)).astype(jnp.float32) * s1
    w1h = jnp.pad(w1h, ((0, 0), (0, 0), (0, Cinp - Cin), (0, Cp - Cout)))
    w1r = w1h.reshape(9 * Cinp, Cp).astype(jnp.bfloat16)
    w2h = jnp.transpose(w2, (2, 3, 1, 0)).astype(jnp.float32) * s2
    w2h = jnp.pad(w2h, ((0, 0), (0, 0), (0, Cp - Cout), (0, Cp - Cout)))
    w2r = w2h.reshape(9 * Cp, Cp).astype(jnp.bfloat16)

    padc = lambda a: jnp.pad(a, (0, Cp - Cout)).reshape(1, Cp)
    t1, t2 = padc(t1), padc(t2)

    out_nhwc = pl.pallas_call(
        conv_block_kernel,
        out_shape=jax.ShapeDtypeStruct((N, H, W, Cp), jnp.float32),
        grid_spec=pltpu.PrefetchScalarGridSpec(
            num_scalar_prefetch=0,
            grid=(N, R),
            in_specs=[
                pl.BlockSpec((1, H + 4, W + 2, Cinp), lambda n, r: (n, 0, 0, 0)),
                pl.BlockSpec((9 * Cinp, Cp), lambda n, r: (0, 0)),
                pl.BlockSpec((1, Cp), lambda n, r: (0, 0)),
                pl.BlockSpec((9 * Cp, Cp), lambda n, r: (0, 0)),
                pl.BlockSpec((1, Cp), lambda n, r: (0, 0)),
            ],
            out_specs=pl.BlockSpec((1, TH, W, Cp), lambda n, r: (n, r, 0, 0)),
            scratch_shapes=[
                pltpu.VMEM((TH + 2, W, 9 * Cinp), jnp.bfloat16),
                pltpu.VMEM((TH + 2, W + 2, Cp), jnp.bfloat16),
                pltpu.VMEM((TH, W, 9 * Cp), jnp.bfloat16),
            ],
        ),
        compiler_params=pltpu.CompilerParams(
            dimension_semantics=("parallel", "parallel"),
            vmem_limit_bytes=32 * 1024 * 1024),
    )(xp, w1r, t1, w2r, t2)

    # Drop channel padding, NHWC -> NCHW to match PyTorch.
    return jnp.transpose(out_nhwc[..., :Cout], (0, 3, 1, 2))


def conv_block_reference(x_nchw, params, eps=1e-5):
    """XLA reference with the kernel's precision policy (bf16 operands, f32 acc)."""
    (w1, b1, g1, beta1, m1, v1, w2, b2, g2, beta2, m2, v2) = params

    def conv(x, w, b):
        y = jax.lax.conv_general_dilated(
            x.astype(jnp.bfloat16), w.astype(jnp.bfloat16),
            window_strides=(1, 1), padding=((1, 1), (1, 1)),
            dimension_numbers=("NCHW", "OIHW", "NCHW"),
            preferred_element_type=jnp.float32)
        return y + b[None, :, None, None]

    def bn_relu(y, g, beta, m, v):
        y = (y - m[None, :, None, None]) / jnp.sqrt(v + eps)[None, :, None, None]
        y = y * g[None, :, None, None] + beta[None, :, None, None]
        return jnp.maximum(y, 0.0)

    y = bn_relu(conv(x_nchw, w1, b1), g1, beta1, m1, v1)
    y = bn_relu(conv(y, w2, b2), g2, beta2, m2, v2)
    return y  # dropout = identity in eval mode


if __name__ == "__main__":
    N, Cin, Cout, H, W = 2, 4, 8, 16, 16

    key = jax.random.PRNGKey(0)
    ks = jax.random.split(key, 14)

    w1 = 0.1 * jax.random.normal(ks[0], (Cout, Cin, 3, 3), jnp.float32)
    b1 = 0.1 * jax.random.normal(ks[1], (Cout,), jnp.float32)
    g1 = 1.0 + 0.1 * jax.random.normal(ks[2], (Cout,), jnp.float32)
    beta1 = 0.1 * jax.random.normal(ks[3], (Cout,), jnp.float32)
    m1 = 0.1 * jax.random.normal(ks[4], (Cout,), jnp.float32)
    v1 = 1.0 + 0.5 * jax.random.uniform(ks[5], (Cout,), jnp.float32)

    w2 = 0.1 * jax.random.normal(ks[6], (Cout, Cout, 3, 3), jnp.float32)
    b2 = 0.1 * jax.random.normal(ks[7], (Cout,), jnp.float32)
    g2 = 1.0 + 0.1 * jax.random.normal(ks[8], (Cout,), jnp.float32)
    beta2 = 0.1 * jax.random.normal(ks[9], (Cout,), jnp.float32)
    m2 = 0.1 * jax.random.normal(ks[10], (Cout,), jnp.float32)
    v2 = 1.0 + 0.5 * jax.random.uniform(ks[11], (Cout,), jnp.float32)

    params = (w1, b1, g1, beta1, m1, v1, w2, b2, g2, beta2, m2, v2)

    x = jax.random.normal(ks[12], (N, Cin, H, W), jnp.float32)

    out = jax.block_until_ready(conv_block_forward(x, params))
    ref = jax.block_until_ready(conv_block_reference(x, params))

    assert out.shape == (N, Cout, H, W), out.shape
    assert jnp.allclose(out, ref, rtol=1e-2, atol=1e-2), (
        float(jnp.max(jnp.abs(out - ref))))

    print("KERNEL_OK")
</pallas_src>

<mosaic_0001>
module attributes {stable_mosaic.version = 11 : i64} {
  func.func @conv_block_kernel(%arg0: i32, %arg1: i32, %arg2: memref<1x20x18x128xbf16, #tpu.memory_space<vmem>>, %arg3: memref<1152x128xbf16, #tpu.memory_space<vmem>>, %arg4: memref<1x128xf32, #tpu.memory_space<vmem>>, %arg5: memref<1152x128xbf16, #tpu.memory_space<vmem>>, %arg6: memref<1x128xf32, #tpu.memory_space<vmem>>, %arg7: memref<1x8x16x128xf32, #tpu.memory_space<vmem>>, %arg8: memref<10x16x1152xbf16, #tpu.memory_space<vmem>>, %arg9: memref<10x18x128xbf16, #tpu.memory_space<vmem>>, %arg10: memref<8x16x1152xbf16, #tpu.memory_space<vmem>>) attributes {dimension_semantics = [#tpu.dimension_semantics<parallel>, #tpu.dimension_semantics<parallel>], iteration_bounds = array<i64: 2, 2>, scalar_prefetch = 0 : i64, scratch_operands = 3 : i64, tpu.core_type = #tpu.core_type<tc>, window_params = [{transform_indices = @transform_0, window_bounds = array<i64: 1, 20, 18, 128>}, {pipeline_mode = #tpu.pipeline_mode<synchronous>, transform_indices = @transform_1, window_bounds = array<i64: 1152, 128>}, {pipeline_mode = #tpu.pipeline_mode<synchronous>, transform_indices = @transform_2, window_bounds = array<i64: 1, 128>}, {pipeline_mode = #tpu.pipeline_mode<synchronous>, transform_indices = @transform_3, window_bounds = array<i64: 1152, 128>}, {pipeline_mode = #tpu.pipeline_mode<synchronous>, transform_indices = @transform_4, window_bounds = array<i64: 1, 128>}, {transform_indices = @transform_5, window_bounds = array<i64: 1, 8, 16, 128>}]} {
    %c8_i32 = arith.constant 8 : i32
    %0 = arith.muli %arg1, %c8_i32 : i32
    %1 = tpu.assume_multiple %0, 8 : i32
    %c0_i32 = arith.constant 0 : i32
    %2 = arith.addi %1, %c0_i32 : i32
    %c0 = arith.constant 0 : index
    %3 = arith.index_cast %2 : i32 to index
    %c0_0 = arith.constant 0 : index
    %c0_1 = arith.constant 0 : index
    %4 = vector.load %arg2[%c0, %3, %c0_0, %c0_1] : memref<1x20x18x128xbf16, #tpu.memory_space<vmem>>, vector<1x10x16x128xbf16>
    %5 = vector.shape_cast %4 : vector<1x10x16x128xbf16> to vector<10x16x128xbf16>
    %c0_2 = arith.constant 0 : index
    %c0_3 = arith.constant 0 : index
    %c0_4 = arith.constant 0 : index
    %6 = vector.load %arg8[%c0_2, %c0_3, %c0_4] : memref<10x16x1152xbf16, #tpu.memory_space<vmem>>, vector<10x16x128xbf16>
    tpu.vector_store %arg8[%c0_2, %c0_3, %c0_4], %5 {strides = array<i32>} : memref<10x16x1152xbf16, #tpu.memory_space<vmem>>, vector<10x16x128xbf16>,
    %c0_i32_5 = arith.constant 0 : i32
    %7 = arith.addi %1, %c0_i32_5 : i32
    %c0_6 = arith.constant 0 : index
    %8 = arith.index_cast %7 : i32 to index
    %c1 = arith.constant 1 : index
    %c0_7 = arith.constant 0 : index
    %9 = vector.load %arg2[%c0_6, %8, %c1, %c0_7] : memref<1x20x18x128xbf16, #tpu.memory_space<vmem>>, vector<1x10x16x128xbf16>
    %10 = vector.shape_cast %9 : vector<1x10x16x128xbf16> to vector<10x16x128xbf16>
    %c0_8 = arith.constant 0 : index
    %c0_9 = arith.constant 0 : index
    %c128 = arith.constant 128 : index
    %11 = vector.load %arg8[%c0_8, %c0_9, %c128] : memref<10x16x1152xbf16, #tpu.memory_space<vmem>>, vector<10x16x128xbf16>
    tpu.vector_store %arg8[%c0_8, %c0_9, %c128], %10 {strides = array<i32>} : memref<10x16x1152xbf16, #tpu.memory_space<vmem>>, vector<10x16x128xbf16>,
    %c0_i32_10 = arith.constant 0 : i32
    %12 = arith.addi %1, %c0_i32_10 : i32
    %c0_11 = arith.constant 0 : index
    %13 = arith.index_cast %12 : i32 to index
    %c2 = arith.constant 2 : index
    %c0_12 = arith.constant 0 : index
    %14 = vector.load %arg2[%c0_11, %13, %c2, %c0_12] : memref<1x20x18x128xbf16, #tpu.memory_space<vmem>>, vector<1x10x16x128xbf16>
    %15 = vector.shape_cast %14 : vector<1x10x16x128xbf16> to vector<10x16x128xbf16>
    %c0_13 = arith.constant 0 : index
    %c0_14 = arith.constant 0 : index
    %c256 = arith.constant 256 : index
    %16 = vector.load %arg8[%c0_13, %c0_14, %c256] : memref<10x16x1152xbf16, #tpu.memory_space<vmem>>, vector<10x16x128xbf16>
    tpu.vector_store %arg8[%c0_13, %c0_14, %c256], %15 {strides = array<i32>} : memref<10x16x1152xbf16, #tpu.memory_space<vmem>>, vector<10x16x128xbf16>,
    %c1_i32 = arith.constant 1 : i32
    %17 = arith.addi %1, %c1_i32 : i32
    %c0_15 = arith.constant 0 : index
    %18 = arith.index_cast %17 : i32 to index
    %c0_16 = arith.constant 0 : index
    %c0_17 = arith.constant 0 : index
    %19 = vector.load %arg2[%c0_15, %18, %c0_16, %c0_17] : memref<1x20x18x128xbf16, #tpu.memory_space<vmem>>, vector<1x10x16x128xbf16>
    %20 = vector.shape_cast %19 : vector<1x10x16x128xbf16> to vector<10x16x128xbf16>
    %c0_18 = arith.constant 0 : index
    %c0_19 = arith.constant 0 : index
    %c384 = arith.constant 384 : index
    %21 = vector.load %arg8[%c0_18, %c0_19, %c384] : memref<10x16x1152xbf16, #tpu.memory_space<vmem>>, vector<10x16x128xbf16>
    tpu.vector_store %arg8[%c0_18, %c0_19, %c384], %20 {strides = array<i32>} : memref<10x16x1152xbf16, #tpu.memory_space<vmem>>, vector<10x16x128xbf16>,
    %c1_i32_20 = arith.constant 1 : i32
    %22 = arith.addi %1, %c1_i32_20 : i32
    %c0_21 = arith.constant 0 : index
    %23 = arith.index_cast %22 : i32 to index
    %c1_22 = arith.constant 1 : index
    %c0_23 = arith.constant 0 : index
    %24 = vector.load %arg2[%c0_21, %23, %c1_22, %c0_23] : memref<1x20x18x128xbf16, #tpu.memory_space<vmem>>, vector<1x10x16x128xbf16>
    %25 = vector.shape_cast %24 : vector<1x10x16x128xbf16> to vector<10x16x128xbf16>
    %c0_24 = arith.constant 0 : index
    %c0_25 = arith.constant 0 : index
    %c512 = arith.constant 512 : index
    %26 = vector.load %arg8[%c0_24, %c0_25, %c512] : memref<10x16x1152xbf16, #tpu.memory_space<vmem>>, vector<10x16x128xbf16>
    tpu.vector_store %arg8[%c0_24, %c0_25, %c512], %25 {strides = array<i32>} : memref<10x16x1152xbf16, #tpu.memory_space<vmem>>, vector<10x16x128xbf16>,
    %c1_i32_26 = arith.constant 1 : i32
    %27 = arith.addi %1, %c1_i32_26 : i32
    %c0_27 = arith.constant 0 : index
    %28 = arith.index_cast %27 : i32 to index
    %c2_28 = arith.constant 2 : index
    %c0_29 = arith.constant 0 : index
    %29 = vector.load %arg2[%c0_27, %28, %c2_28, %c0_29] : memref<1x20x18x128xbf16, #tpu.memory_space<vmem>>, vector<1x10x16x128xbf16>
    %30 = vector.shape_cast %29 : vector<1x10x16x128xbf16> to vector<10x16x128xbf16>
    %c0_30 = arith.constant 0 : index
    %c0_31 = arith.constant 0 : index
    %c640 = arith.constant 640 : index
    %31 = vector.load %arg8[%c0_30, %c0_31, %c640] : memref<10x16x1152xbf16, #tpu.memory_space<vmem>>, vector<10x16x128xbf16>
    tpu.vector_store %arg8[%c0_30, %c0_31, %c640], %30 {strides = array<i32>} : memref<10x16x1152xbf16, #tpu.memory_space<vmem>>, vector<10x16x128xbf16>,
    %c2_i32 = arith.constant 2 : i32
    %32 = arith.addi %1, %c2_i32 : i32
    %c0_32 = arith.constant 0 : index
    %33 = arith.index_cast %32 : i32 to index
    %c0_33 = arith.constant 0 : index
    %c0_34 = arith.constant 0 : index
    %34 = vector.load %arg2[%c0_32, %33, %c0_33, %c0_34] : memref<1x20x18x128xbf16, #tpu.memory_space<vmem>>, vector<1x10x16x128xbf16>
    %35 = vector.shape_cast %34 : vector<1x10x16x128xbf16> to vector<10x16x128xbf16>
    %c0_35 = arith.constant 0 : index
    %c0_36 = arith.constant 0 : index
    %c768 = arith.constant 768 : index
    %36 = vector.load %arg8[%c0_35, %c0_36, %c768] : memref<10x16x1152xbf16, #tpu.memory_space<vmem>>, vector<10x16x128xbf16>
    tpu.vector_store %arg8[%c0_35, %c0_36, %c768], %35 {strides = array<i32>} : memref<10x16x1152xbf16, #tpu.memory_space<vmem>>, vector<10x16x128xbf16>,
    %c2_i32_37 = arith.constant 2 : i32
    %37 = arith.addi %1, %c2_i32_37 : i32
    %c0_38 = arith.constant 0 : index
    %38 = arith.index_cast %37 : i32 to index
    %c1_39 = arith.constant 1 : index
    %c0_40 = arith.constant 0 : index
    %39 = vector.load %arg2[%c0_38, %38, %c1_39, %c0_40] : memref<1x20x18x128xbf16, #tpu.memory_space<vmem>>, vector<1x10x16x128xbf16>
    %40 = vector.shape_cast %39 : vector<1x10x16x128xbf16> to vector<10x16x128xbf16>
    %c0_41 = arith.constant 0 : index
    %c0_42 = arith.constant 0 : index
    %c896 = arith.constant 896 : index
    %41 = vector.load %arg8[%c0_41, %c0_42, %c896] : memref<10x16x1152xbf16, #tpu.memory_space<vmem>>, vector<10x16x128xbf16>
    tpu.vector_store %arg8[%c0_41, %c0_42, %c896], %40 {strides = array<i32>} : memref<10x16x1152xbf16, #tpu.memory_space<vmem>>, vector<10x16x128xbf16>,
    %c2_i32_43 = arith.constant 2 : i32
    %42 = arith.addi %1, %c2_i32_43 : i32
    %c0_44 = arith.constant 0 : index
    %43 = arith.index_cast %42 : i32 to index
    %c2_45 = arith.constant 2 : index
    %c0_46 = arith.constant 0 : index
    %44 = vector.load %arg2[%c0_44, %43, %c2_45, %c0_46] : memref<1x20x18x128xbf16, #tpu.memory_space<vmem>>, vector<1x10x16x128xbf16>
    %45 = vector.shape_cast %44 : vector<1x10x16x128xbf16> to vector<10x16x128xbf16>
    %c0_47 = arith.constant 0 : index
    %c0_48 = arith.constant 0 : index
    %c1024 = arith.constant 1024 : index
    %46 = vector.load %arg8[%c0_47, %c0_48, %c1024] : memref<10x16x1152xbf16, #tpu.memory_space<vmem>>, vector<10x16x128xbf16>
    tpu.vector_store %arg8[%c0_47, %c0_48, %c1024], %45 {strides = array<i32>} : memref<10x16x1152xbf16, #tpu.memory_space<vmem>>, vector<10x16x128xbf16>,
    %c0_49 = arith.constant 0 : index
    %c0_50 = arith.constant 0 : index
    %c0_51 = arith.constant 0 : index
    %47 = vector.load %arg8[%c0_49, %c0_50, %c0_51] : memref<10x16x1152xbf16, #tpu.memory_space<vmem>>, vector<10x16x1152xbf16>
    %48 = vector.shape_cast %47 : vector<10x16x1152xbf16> to vector<160x1152xbf16>
    %c0_52 = arith.constant 0 : index
    %c0_53 = arith.constant 0 : index
    %49 = vector.load %arg3[%c0_52, %c0_53] : memref<1152x128xbf16, #tpu.memory_space<vmem>>, vector<1152x128xbf16>
    %cst = arith.constant dense<0.000000e+00> : vector<160x128xf32>
    %50 = tpu.matmul %48, %49, %cst {dimension_numbers = #tpu.dot_dimension_numbers<[1], [0], [0], [1], [0, 0, 1, 1], [], []>} : vector<160x1152xbf16>, vector<1152x128xbf16>, vector<160x128xf32> -> vector<160x128xf32>
    %c0_54 = arith.constant 0 : index
    %c0_55 = arith.constant 0 : index
    %51 = vector.load %arg4[%c0_54, %c0_55] : memref<1x128xf32, #tpu.memory_space<vmem>>, vector<1x128xf32>
    %52 = vector.broadcast %51 : vector<1x128xf32> to vector<160x128xf32>
    %53 = arith.addf %50, %52 : vector<160x128xf32>
    %cst_56 = arith.constant 0.000000e+00 : f32
    %54 = vector.broadcast %cst_56 : f32 to vector<160x128xf32>
    %55 = arith.maximumf %53, %54 : vector<160x128xf32>
    %56 = arith.truncf %55 : vector<160x128xf32> to vector<160x128xbf16>
    %57 = vector.shape_cast %56 : vector<160x128xbf16> to vector<10x16x128xbf16>
    %c0_57 = arith.constant 0 : index
    %c1_58 = arith.constant 1 : index
    %c0_59 = arith.constant 0 : index
    %58 = vector.load %arg9[%c0_57, %c1_58, %c0_59] : memref<10x18x128xbf16, #tpu.memory_space<vmem>>, vector<10x16x128xbf16>
    tpu.vector_store %arg9[%c0_57, %c1_58, %c0_59], %57 {strides = array<i32>} : memref<10x18x128xbf16, #tpu.memory_space<vmem>>, vector<10x16x128xbf16>,
    %cst_60 = arith.constant 0.000000e+00 : bf16
    %59 = vector.broadcast %cst_60 : bf16 to vector<10x1x128xbf16>
    %c0_61 = arith.constant 0 : index
    %c0_62 = arith.constant 0 : index
    %c0_63 = arith.constant 0 : index
    %60 = vector.load %arg9[%c0_61, %c0_62, %c0_63] : memref<10x18x128xbf16, #tpu.memory_space<vmem>>, vector<10x1x128xbf16>
    tpu.vector_store %arg9[%c0_61, %c0_62, %c0_63], %59 {strides = array<i32>} : memref<10x18x128xbf16, #tpu.memory_space<vmem>>, vector<10x1x128xbf16>,
    %c0_64 = arith.constant 0 : index
    %c17 = arith.constant 17 : index
    %c0_65 = arith.constant 0 : index
    %61 = vector.load %arg9[%c0_64, %c17, %c0_65] : memref<10x18x128xbf16, #tpu.memory_space<vmem>>, vector<10x1x128xbf16>
    tpu.vector_store %arg9[%c0_64, %c17, %c0_65], %59 {strides = array<i32>} : memref<10x18x128xbf16, #tpu.memory_space<vmem>>, vector<10x1x128xbf16>,
    %cst_66 = arith.constant 0.000000e+00 : bf16
    %62 = vector.broadcast %cst_66 : bf16 to vector<1x18x128xbf16>
    %c0_i32_67 = arith.constant 0 : i32
    %63 = arith.cmpi eq, %arg1, %c0_i32_67 : i32
    %64 = arith.extui %63 : i1 to i32
    %c0_i32_68 = arith.constant 0 : i32
    %65 = arith.cmpi ne, %64, %c0_i32_68 : i32
    scf.if %65 {
      %c0_138 = arith.constant 0 : index
      %c0_139 = arith.constant 0 : index
      %c0_140 = arith.constant 0 : index
      %98 = vector.load %arg9[%c0_138, %c0_139, %c0_140] : memref<10x18x128xbf16, #tpu.memory_space<vmem>>, vector<1x18x128xbf16>
      tpu.vector_store %arg9[%c0_138, %c0_139, %c0_140], %62 {strides = array<i32>} : memref<10x18x128xbf16, #tpu.memory_space<vmem>>, vector<1x18x128xbf16>,
    } else {
    }
    %c1_i32_69 = arith.constant 1 : i32
    %66 = arith.cmpi eq, %arg1, %c1_i32_69 : i32
    %67 = arith.extui %66 : i1 to i32
    %c0_i32_70 = arith.constant 0 : i32
    %68 = arith.cmpi ne, %67, %c0_i32_70 : i32
    scf.if %68 {
      %c9 = arith.constant 9 : index
      %c0_138 = arith.constant 0 : index
      %c0_139 = arith.constant 0 : index
      %98 = vector.load %arg9[%c9, %c0_138, %c0_139] : memref<10x18x128xbf16, #tpu.memory_space<vmem>>, vector<1x18x128xbf16>
      tpu.vector_store %arg9[%c9, %c0_138, %c0_139], %62 {strides = array<i32>} : memref<10x18x128xbf16, #tpu.memory_space<vmem>>, vector<1x18x128xbf16>,
    } else {
    }
    %c0_71 = arith.constant 0 : index
    %c0_72 = arith.constant 0 : index
    %c0_73 = arith.constant 0 : index
    %69 = vector.load %arg9[%c0_71, %c0_72, %c0_73] : memref<10x18x128xbf16, #tpu.memory_space<vmem>>, vector<8x16x128xbf16>
    %c0_74 = arith.constant 0 : index
    %c0_75 = arith.constant 0 : index
    %c0_76 = arith.constant 0 : index
    %70 = vector.load %arg10[%c0_74, %c0_75, %c0_76] : memref<8x16x1152xbf16, #tpu.memory_space<vmem>>, vector<8x16x128xbf16>
    tpu.vector_store %arg10[%c0_74, %c0_75, %c0_76], %69 {strides = array<i32>} : memref<8x16x1152xbf16, #tpu.memory_space<vmem>>, vector<8x16x128xbf16>,
    %c0_77 = arith.constant 0 : index
    %c1_78 = arith.constant 1 : index
    %c0_79 = arith.constant 0 : index
    %71 = vector.load %arg9[%c0_77, %c1_78, %c0_79] : memref<10x18x128xbf16, #tpu.memory_space<vmem>>, vector<8x16x128xbf16>
    %c0_80 = arith.constant 0 : index
    %c0_81 = arith.constant 0 : index
    %c128_82 = arith.constant 128 : index
    %72 = vector.load %arg10[%c0_80, %c0_81, %c128_82] : memref<8x16x1152xbf16, #tpu.memory_space<vmem>>, vector<8x16x128xbf16>
    tpu.vector_store %arg10[%c0_80, %c0_81, %c128_82], %71 {strides = array<i32>} : memref<8x16x1152xbf16, #tpu.memory_space<vmem>>, vector<8x16x128xbf16>,
    %c0_83 = arith.constant 0 : index
    %c2_84 = arith.constant 2 : index
    %c0_85 = arith.constant 0 : index
    %73 = vector.load %arg9[%c0_83, %c2_84, %c0_85] : memref<10x18x128xbf16, #tpu.memory_space<vmem>>, vector<8x16x128xbf16>
    %c0_86 = arith.constant 0 : index
    %c0_87 = arith.constant 0 : index
    %c256_88 = arith.constant 256 : index
    %74 = vector.load %arg10[%c0_86, %c0_87, %c256_88] : memref<8x16x1152xbf16, #tpu.memory_space<vmem>>, vector<8x16x128xbf16>
    tpu.vector_store %arg10[%c0_86, %c0_87, %c256_88], %73 {strides = array<i32>} : memref<8x16x1152xbf16, #tpu.memory_space<vmem>>, vector<8x16x128xbf16>,
    %c1_89 = arith.constant 1 : index
    %c0_90 = arith.constant 0 : index
    %c0_91 = arith.constant 0 : index
    %75 = vector.load %arg9[%c1_89, %c0_90, %c0_91] : memref<10x18x128xbf16, #tpu.memory_space<vmem>>, vector<8x16x128xbf16>
    %c0_92 = arith.constant 0 : index
    %c0_93 = arith.constant 0 : index
    %c384_94 = arith.constant 384 : index
    %76 = vector.load %arg10[%c0_92, %c0_93, %c384_94] : memref<8x16x1152xbf16, #tpu.memory_space<vmem>>, vector<8x16x128xbf16>
    tpu.vector_store %arg10[%c0_92, %c0_93, %c384_94], %75 {strides = array<i32>} : memref<8x16x1152xbf16, #tpu.memory_space<vmem>>, vector<8x16x128xbf16>,
    %c1_95 = arith.constant 1 : index
    %c1_96 = arith.constant 1 : index
    %c0_97 = arith.constant 0 : index
    %77 = vector.load %arg9[%c1_95, %c1_96, %c0_97] : memref<10x18x128xbf16, #tpu.memory_space<vmem>>, vector<8x16x128xbf16>
    %c0_98 = arith.constant 0 : index
    %c0_99 = arith.constant 0 : index
    %c512_100 = arith.constant 512 : index
    %78 = vector.load %arg10[%c0_98, %c0_99, %c512_100] : memref<8x16x1152xbf16, #tpu.memory_space<vmem>>, vector<8x16x128xbf16>
    tpu.vector_store %arg10[%c0_98, %c0_99, %c512_100], %77 {strides = array<i32>} : memref<8x16x1152xbf16, #tpu.memory_space<vmem>>, vector<8x16x128xbf16>,
    %c1_101 = arith.constant 1 : index
    %c2_102 = arith.constant 2 : index
    %c0_103 = arith.constant 0 : index
    %79 = vector.load %arg9[%c1_101, %c2_102, %c0_103] : memref<10x18x128xbf16, #tpu.memory_space<vmem>>, vector<8x16x128xbf16>
    %c0_104 = arith.constant 0 : index
    %c0_105 = arith.constant 0 : index
    %c640_106 = arith.constant 640 : index
    %80 = vector.load %arg10[%c0_104, %c0_105, %c640_106] : memref<8x16x1152xbf16, #tpu.memory_space<vmem>>, vector<8x16x128xbf16>
    tpu.vector_store %arg10[%c0_104, %c0_105, %c640_106], %79 {strides = array<i32>} : memref<8x16x1152xbf16, #tpu.memory_space<vmem>>, vector<8x16x128xbf16>,
    %c2_107 = arith.constant 2 : index
    %c0_108 = arith.constant 0 : index
    %c0_109 = arith.constant 0 : index
    %81 = vector.load %arg9[%c2_107, %c0_108, %c0_109] : memref<10x18x128xbf16, #tpu.memory_space<vmem>>, vector<8x16x128xbf16>
    %c0_110 = arith.constant 0 : index
    %c0_111 = arith.constant 0 : index
    %c768_112 = arith.constant 768 : index
    %82 = vector.load %arg10[%c0_110, %c0_111, %c768_112] : memref<8x16x1152xbf16, #tpu.memory_space<vmem>>, vector<8x16x128xbf16>
    tpu.vector_store %arg10[%c0_110, %c0_111, %c768_112], %81 {strides = array<i32>} : memref<8x16x1152xbf16, #tpu.memory_space<vmem>>, vector<8x16x128xbf16>,
    %c2_113 = arith.constant 2 : index
    %c1_114 = arith.constant 1 : index
    %c0_115 = arith.constant 0 : index
    %83 = vector.load %arg9[%c2_113, %c1_114, %c0_115] : memref<10x18x128xbf16, #tpu.memory_space<vmem>>, vector<8x16x128xbf16>
    %c0_116 = arith.constant 0 : index
    %c0_117 = arith.constant 0 : index
    %c896_118 = arith.constant 896 : index
    %84 = vector.load %arg10[%c0_116, %c0_117, %c896_118] : memref<8x16x1152xbf16, #tpu.memory_space<vmem>>, vector<8x16x128xbf16>
    tpu.vector_store %arg10[%c0_116, %c0_117, %c896_118], %83 {strides = array<i32>} : memref<8x16x1152xbf16, #tpu.memory_space<vmem>>, vector<8x16x128xbf16>,
    %c2_119 = arith.constant 2 : index
    %c2_120 = arith.constant 2 : index
    %c0_121 = arith.constant 0 : index
    %85 = vector.load %arg9[%c2_119, %c2_120, %c0_121] : memref<10x18x128xbf16, #tpu.memory_space<vmem>>, vector<8x16x128xbf16>
    %c0_122 = arith.constant 0 : index
    %c0_123 = arith.constant 0 : index
    %c1024_124 = arith.constant 1024 : index
    %86 = vector.load %arg10[%c0_122, %c0_123, %c1024_124] : memref<8x16x1152xbf16, #tpu.memory_space<vmem>>, vector<8x16x128xbf16>
    tpu.vector_store %arg10[%c0_122, %c0_123, %c1024_124], %85 {strides = array<i32>} : memref<8x16x1152xbf16, #tpu.memory_space<vmem>>, vector<8x16x128xbf16>,
    %c0_125 = arith.constant 0 : index
    %c0_126 = arith.constant 0 : index
    %c0_127 = arith.constant 0 : index
    %87 = vector.load %arg10[%c0_125, %c0_126, %c0_127] : memref<8x16x1152xbf16, #tpu.memory_space<vmem>>, vector<8x16x1152xbf16>
    %88 = vector.shape_cast %87 : vector<8x16x1152xbf16> to vector<128x1152xbf16>
    %c0_128 = arith.constant 0 : index
    %c0_129 = arith.constant 0 : index
    %89 = vector.load %arg5[%c0_128, %c0_129] : memref<1152x128xbf16, #tpu.memory_space<vmem>>, vector<1152x128xbf16>
    %cst_130 = arith.constant dense<0.000000e+00> : vector<128x128xf32>
    %90 = tpu.matmul %88, %89, %cst_130 {dimension_numbers = #tpu.dot_dimension_numbers<[1], [0], [0], [1], [0, 0, 1, 1], [], []>} : vector<128x1152xbf16>, vector<1152x128xbf16>, vector<128x128xf32> -> vector<128x128xf32>
    %c0_131 = arith.constant 0 : index
    %c0_132 = arith.constant 0 : index
    %91 = vector.load %arg6[%c0_131, %c0_132] : memref<1x128xf32, #tpu.memory_space<vmem>>, vector<1x128xf32>
    %92 = vector.broadcast %91 : vector<1x128xf32> to vector<128x128xf32>
    %93 = arith.addf %90, %92 : vector<128x128xf32>
    %cst_133 = arith.constant 0.000000e+00 : f32
    %94 = vector.broadcast %cst_133 : f32 to vector<128x128xf32>
    %95 = arith.maximumf %93, %94 : vector<128x128xf32>
    %96 = vector.shape_cast %95 : vector<128x128xf32> to vector<1x8x16x128xf32>
    %c0_134 = arith.constant 0 : index
    %c0_135 = arith.constant 0 : index
    %c0_136 = arith.constant 0 : index
    %c0_137 = arith.constant 0 : index
    %97 = vector.load %arg7[%c0_134, %c0_135, %c0_136, %c0_137] : memref<1x8x16x128xf32, #tpu.memory_space<vmem>>, vector<1x8x16x128xf32>
    tpu.vector_store %arg7[%c0_134, %c0_135, %c0_136, %c0_137], %96 {strides = array<i32>} : memref<1x8x16x128xf32, #tpu.memory_space<vmem>>, vector<1x8x16x128xf32>,
    return
  }
  func.func @transform_0(%arg0: i32, %arg1: i32) -> (i32, i32, i32, i32) {
    %c0_i32 = arith.constant 0 : i32
    %c0_i32_0 = arith.constant 0 : i32
    %c0_i32_1 = arith.constant 0 : i32
    %c0_i32_2 = arith.constant 0 : i32
    return %arg0, %c0_i32, %c0_i32_0, %c0_i32_1 : i32, i32, i32, i32
  }
  func.func @transform_1(%arg0: i32, %arg1: i32) -> (i32, i32) {
    %c0_i32 = arith.constant 0 : i32
    %c0_i32_0 = arith.constant 0 : i32
    %c0_i32_1 = arith.constant 0 : i32
    return %c0_i32, %c0_i32_0 : i32, i32
  }
  func.func @transform_2(%arg0: i32, %arg1: i32) -> (i32, i32) {
    %c0_i32 = arith.constant 0 : i32
    %c0_i32_0 = arith.constant 0 : i32
    %c0_i32_1 = arith.constant 0 : i32
    return %c0_i32, %c0_i32_0 : i32, i32
  }
  func.func @transform_3(%arg0: i32, %arg1: i32) -> (i32, i32) {
    %c0_i32 = arith.constant 0 : i32
    %c0_i32_0 = arith.constant 0 : i32
    %c0_i32_1 = arith.constant 0 : i32
    return %c0_i32, %c0_i32_0 : i32, i32
  }
  func.func @transform_4(%arg0: i32, %arg1: i32) -> (i32, i32) {
    %c0_i32 = arith.constant 0 : i32
    %c0_i32_0 = arith.constant 0 : i32
    %c0_i32_1 = arith.constant 0 : i32
    return %c0_i32, %c0_i32_0 : i32, i32
  }
  func.func @transform_5(%arg0: i32, %arg1: i32) -> (i32, i32, i32, i32) {
    %c0_i32 = arith.constant 0 : i32
    %c0_i32_0 = arith.constant 0 : i32
    %c0_i32_1 = arith.constant 0 : i32
    return %arg0, %arg1, %c0_i32, %c0_i32_0 : i32, i32, i32, i32
  }
}

</mosaic_0001>

<llo_original>
// kernel: tpu_custom_call.1
$region0: #{tpu_custom_call.1}
  #allocation0 [shape = 'u32[]', space=smem, size = 0x4, offset = 0x4, fixed_abs, tag = 'smem constant byte address 0x4 - core index']
  #allocation1 [shape = 'u32[144,128]{1,0:T(1,128)}', space=vmem, size = 0x12000, scoped, tag = 'internal scratch']
  #allocation2 [shape = 'bf16[10,16,1152]{2,1,0:T(8,128)(2,1)}', space=vmem, size = 0x5a000, scoped, tag = 'scratch operand']
  #allocation3 [shape = 'bf16[10,18,128]{2,1,0:T(8,128)(2,1)}', space=vmem, size = 0xf000, scoped, tag = 'scratch operand']
  #allocation4 [shape = 'bf16[8,16,1152]{2,1,0:T(8,128)(2,1)}', space=vmem, size = 0x48000, scoped, tag = 'scratch operand']
  %s0 = inlined_call_operand.vmem [shape: bf16[2,20,18,128], index: 0, kind: input, shape index: {}]
  %s1 = inlined_call_operand.vmem [shape: bf16[1152,128], index: 1, kind: input, shape index: {}]
  %s2 = inlined_call_operand.vmem [shape: f32[1,128], index: 2, kind: input, shape index: {}]
  %s3 = inlined_call_operand.hbm [shape: bf16[1152,128], index: 3, kind: input, shape index: {}]
  %s4 = inlined_call_operand.vmem [shape: f32[1,128], index: 4, kind: input, shape index: {}]
  %s5 = inlined_call_operand.hbm [shape: f32[2,16,16,128], index: 5, kind: output, shape index: {}]
  %s6 = sld [smem:[#allocation0]]
  $region65: #{tpu_custom_call.1} parent=0
    _
  %s8 = ssub.s32 1, %s6
  %s9 = scalar_select 0, %s8, %s6
  $region1: #{tpu_custom_call.1} parent=0
    #allocation5 [shape = 'u8[294912]{0}', space=vmem, size = 0x48000, scoped, tag = 'input window, operand 3, single buffered']
    #allocation6 [shape = 's32[2]{0}', space=sflag, size = 0x8, scoped, tag = 'scoped memory for tpu_custom_call.1']
    #allocation7 [shape = 's32[2]{0}', space=sflag, size = 0x8, scoped, tag = 'scoped memory for tpu_custom_call.1']
    #allocation8 [shape = 'u8[131072]{0}', space=vmem, size = 0x20000, scoped, tag = 'output window, operand 0']
    %10 = vsyncpa [#allocation6], 0
    %11 = vsyncpa [#allocation7], 0
    %s12 = scalar_lea.sflag [#allocation7], 1
    %13 = vsyncpa %s12, 0
    loop: start=0, step=1, limit=6
    $region2: #{tpu_custom_call.1} parent=1 // loop_pre_header
      _
    $region3: #{tpu_custom_call.1} parent=1 // loop_header
      %s15 = sphi 0, %s19
      %p16 = scmp.ge.s32.totalorder %s15, 6
      %s22 = sphi 0, %s34
      %s23 = sphi 0, %s30
      %s24 = sphi 0, %s22
      %s25 = sphi 0, %s23
      %s26 = sphi 0, %s24
      %s27 = sphi 0, %s25
      %s37 = sphi 0, %s39
      %s40 = sphi 0, %s37
      %s41 = sphi 0, %s40
      %s57 = sphi 0, %s41
      %s61 = sphi 0, %s61
      %s63 = sphi 0, %s61
      %s64 = sphi 0, %s63
      %s78 = sphi 0, %s64
      %s82 = sphi 0, %s82
      %s84 = sphi 0, %s82
      %s85 = sphi 0, %s84
      %s99 = sphi 0, %s85
      %s103 = sphi 0, %s103
      %s105 = sphi 0, %s103
      %s106 = sphi 0, %s105
      %s120 = sphi 0, %s106
      %s124 = sphi 0, %s124
      %s126 = sphi 0, %s124
      %s127 = sphi 0, %s126
      %s141 = sphi 0, %s127
      %s149 = sphi 0, %s151
      %s152 = sphi 0, %s149
      %s153 = sphi 0, %s152
      %s169 = sphi 0, %s153
    $region4: #{tpu_custom_call.1} parent=1 // loop_header_branch
      %18 = sbr.rel (%p16) target = $region8
    $region5: #{tpu_custom_call.1} parent=1 // loop_body
      %s20 = ssub.s32 %s15, 1
      %s21 = ssub.s32 %s15, 2
      %s28 = sadd.s32 1, %s23
      %p29 = scmp.ge.s32.totalorder %s28, 2
      %s30 = scalar_select %p29, 0, %s28
      %s31 = sadd.s32 1, %s22
      %s32 = scalar_select %p29, %s31, %s22
      %p33 = scmp.ge.s32.totalorder %s32, 2
      %s34 = scalar_select %p33, 0, %s32
      %s35 = ssub.s32 %s22, %s34
      %p36 = scmp.eq.s32.totalorder %s35, 0
      %s38 = sadd.s32 %s37, 1
      %s39 = scalar_select %p36, %s37, %s38
      %p42 = pneg %p36
      %p43 = scmp.eq.s32.totalorder %s15, 3
      %p44 = por %p42, %p43
      %p45 = scmp.ne.s32.totalorder %s37, %s40
      %p46 = scmp.eq.s32.totalorder %s15, 0
      %p47 = por %p45, %p46
      %p48 = scmp.ne.s32.totalorder %s37, %s40
      %p49 = scmp.eq.s32.totalorder %s20, 3
      %p50 = por %p48, %p49
      %p51 = scmp.ne.s32.totalorder %s40, %s41
      %p52 = scmp.eq.s32.totalorder %s20, 0
      %p53 = por %p51, %p52
      %p54 = scmp.ne.s32.totalorder %s40, %s41
      %p55 = scmp.eq.s32.totalorder %s21, 3
      %p56 = por %p54, %p55
      %p58 = scmp.ne.s32.totalorder %s41, %s57
      %p59 = scmp.eq.s32.totalorder %s21, 0
      %p60 = por %p58, %p59
      %s62 = sadd.s32 %s61, 1
      %p65 = scmp.eq.s32.totalorder %s15, 3
      %p66 = scmp.ne.s32.totalorder %s61, %s63
      %p67 = scmp.eq.s32.totalorder %s15, 0
      %p68 = por %p66, %p67
      %p69 = scmp.ne.s32.totalorder %s61, %s63
      %p70 = scmp.eq.s32.totalorder %s20, 3
      %p71 = por %p69, %p70
      %p72 = scmp.ne.s32.totalorder %s63, %s64
      %p73 = scmp.eq.s32.totalorder %s20, 0
      %p74 = por %p72, %p73
      %p75 = scmp.ne.s32.totalorder %s63, %s64
      %p76 = scmp.eq.s32.totalorder %s21, 3
      %p77 = por %p75, %p76
      %p79 = scmp.ne.s32.totalorder %s64, %s78
      %p80 = scmp.eq.s32.totalorder %s21, 0
      %p81 = por %p79, %p80
      %s83 = sadd.s32 %s82, 1
      %p86 = scmp.eq.s32.totalorder %s15, 3
      %p87 = scmp.ne.s32.totalorder %s82, %s84
      %p88 = scmp.eq.s32.totalorder %s15, 0
      %p89 = por %p87, %p88
      %p90 = scmp.ne.s32.totalorder %s82, %s84
      %p91 = scmp.eq.s32.totalorder %s20, 3
      %p92 = por %p90, %p91
      %p93 = scmp.ne.s32.totalorder %s84, %s85
      %p94 = scmp.eq.s32.totalorder %s20, 0
      %p95 = por %p93, %p94
      %p96 = scmp.ne.s32.totalorder %s84, %s85
      %p97 = scmp.eq.s32.totalorder %s21, 3
      %p98 = por %p96, %p97
      %p100 = scmp.ne.s32.totalorder %s85, %s99
      %p101 = scmp.eq.s32.totalorder %s21, 0
      %p102 = por %p100, %p101
      %s104 = sadd.s32 %s103, 1
      %p107 = scmp.eq.s32.totalorder %s15, 3
      %p108 = scmp.ne.s32.totalorder %s103, %s105
      %p109 = scmp.eq.s32.totalorder %s15, 0
      %p110 = por %p108, %p109
      %p111 = scmp.ne.s32.totalorder %s103, %s105
      %p112 = scmp.eq.s32.totalorder %s20, 3
      %p113 = por %p111, %p112
      %p114 = scmp.ne.s32.totalorder %s105, %s106
      %p115 = scmp.eq.s32.totalorder %s20, 0
      %p116 = por %p114, %p115
      %p117 = scmp.ne.s32.totalorder %s105, %s106
      %p118 = scmp.eq.s32.totalorder %s21, 3
      %p119 = por %p117, %p118
      %p121 = scmp.ne.s32.totalorder %s106, %s120
      %p122 = scmp.eq.s32.totalorder %s21, 0
      %p123 = por %p121, %p122
      %s125 = sadd.s32 %s124, 1
      %p128 = scmp.eq.s32.totalorder %s15, 3
      %p129 = scmp.ne.s32.totalorder %s124, %s126
      %p130 = scmp.eq.s32.totalorder %s15, 0
      %p131 = por %p129, %p130
      %p132 = scmp.ne.s32.totalorder %s124, %s126
      %p133 = scmp.eq.s32.totalorder %s20, 3
      %p134 = por %p132, %p133
      %p135 = scmp.ne.s32.totalorder %s126, %s127
      %p136 = scmp.eq.s32.totalorder %s20, 0
      %p137 = por %p135, %p136
      %p138 = scmp.ne.s32.totalorder %s126, %s127
      %p139 = scmp.eq.s32.totalorder %s21, 3
      %p140 = por %p138, %p139
      %p142 = scmp.ne.s32.totalorder %s127, %s141
      %p143 = scmp.eq.s32.totalorder %s21, 0
      %p144 = por %p142, %p143
      %s145 = ssub.s32 %s22, %s34
      %s146 = ssub.s32 %s23, %s30
      %s147 = sor.u32 %s145, %s146
      %p148 = scmp.eq.s32.totalorder %s147, 0
      %s150 = sadd.s32 %s149, 1
      %s151 = scalar_select %p148, %s149, %s150
      %p154 = pneg %p148
      %p155 = scmp.eq.s32.totalorder %s15, 3
      %p156 = por %p154, %p155
      %p157 = scmp.ne.s32.totalorder %s149, %s152
      %p158 = scmp.eq.s32.totalorder %s15, 0
      %p159 = por %p157, %p158
      %p160 = scmp.ne.s32.totalorder %s149, %s152
      %p161 = scmp.eq.s32.totalorder %s20, 3
      %p162 = por %p160, %p161
      %p163 = scmp.ne.s32.totalorder %s152, %s153
      %p164 = scmp.eq.s32.totalorder %s20, 0
      %p165 = por %p163, %p164
      %p166 = scmp.ne.s32.totalorder %s152, %s153
      %p167 = scmp.eq.s32.totalorder %s21, 3
      %p168 = por %p166, %p167
      %p170 = scmp.ne.s32.totalorder %s153, %s169
      %p171 = scmp.eq.s32.totalorder %s21, 0
      %p172 = por %p170, %p171
      %p173 = scmp.le.s32.totalorder 1, %s15
      %p174 = scmp.lt.s32.totalorder %s15, 5
      %p175 = pnand %p173, %p174
      %p176 = pneg %p175
      // Predicated region
      $region9: #{tpu_custom_call.1} parent=5 // pred_check
        _
      $region10: #{tpu_custom_call.1} parent=5 // pred_check_branch
        %178 = sbr.rel (%p175) target = $region12
      $region11: #{tpu_custom_call.1} parent=5 // pred_region
        %s179 = ssub.s32 %s15, 1
        // Predicated region
        $region13: #{tpu_custom_call.1} parent=11 // pred_check
          %p180 = pneg %p74
        $region14: #{tpu_custom_call.1} parent=11 // pred_check_branch
          %182 = sbr.rel (%p180) target = $region16
        $region15: #{tpu_custom_call.1} parent=11 // pred_region
          _
        $region16: #{tpu_custom_call.1} parent=11 // pred_fallthru
          _
        // Predicated region
        $region17: #{tpu_custom_call.1} parent=11 // pred_check
          %p183 = pneg %p95
        $region18: #{tpu_custom_call.1} parent=11 // pred_check_branch
          %185 = sbr.rel (%p183) target = $region20
        $region19: #{tpu_custom_call.1} parent=11 // pred_region
          _
        $region20: #{tpu_custom_call.1} parent=11 // pred_fallthru
          _
        // Predicated region
        $region21: #{tpu_custom_call.1} parent=11 // pred_check
          %p186 = pneg %p116
        $region22: #{tpu_custom_call.1} parent=11 // pred_check_branch
          %188 = sbr.rel (%p186) target = $region24
        $region23: #{tpu_custom_call.1} parent=11 // pred_region
          %s190 = ssub.s32 9216, 9216
          %191 = vsyncadd [#allocation6], %s190
          %s192 = sshll.u32 [#allocation5], 4
          %s193 = int_to_ptr.vmem [resolvable:$true] %s192
          %198 = dma.hbm_to_vmem [thread:$0]  %s3, 9216, %s193, [#allocation6], 64, 64, 4
        $region24: #{tpu_custom_call.1} parent=11 // pred_fallthru
          _
        // Predicated region
        $region25: #{tpu_custom_call.1} parent=11 // pred_check
          %p199 = pneg %p137
        $region26: #{tpu_custom_call.1} parent=11 // pred_check_branch
          %201 = sbr.rel (%p199) target = $region28
        $region27: #{tpu_custom_call.1} parent=11 // pred_region
          _
        $region28: #{tpu_custom_call.1} parent=11 // pred_fallthru
          _
      $region12: #{tpu_custom_call.1} parent=5 // pred_fallthru
        _
      %p202 = scmp.lt.s32.totalorder %s15, 4
      // Predicated region
      $region29: #{tpu_custom_call.1} parent=5 // pred_check
        %p203 = pneg %p202
      $region30: #{tpu_custom_call.1} parent=5 // pred_check_branch
        %205 = sbr.rel (%p203) target = $region32
      $region31: #{tpu_custom_call.1} parent=5 // pred_region
        // Predicated region
        $region33: #{tpu_custom_call.1} parent=31 // pred_check
          %p206 = pneg %p47
        $region34: #{tpu_custom_call.1} parent=31 // pred_check_branch
          %208 = sbr.rel (%p206) target = $region36
        $region35: #{tpu_custom_call.1} parent=31 // pred_region
          %p209 = scmp.lt.s32.totalorder %s22, 1
          %s210 = scalar_select %p209, %s22, 1
          %s211 = smul.addr %s210, 60
          %s212 = smul.addr %s211, 4
          %s213 = scalar_lea.vmem %s0, %s212
        $region36: #{tpu_custom_call.1} parent=31 // pred_fallthru
          _
      $region32: #{tpu_custom_call.1} parent=5 // pred_fallthru
        _
      %p214 = scmp.le.s32.totalorder 1, %s15
      %p215 = scmp.lt.s32.totalorder %s15, 5
      %p216 = pnand %p214, %p215
      %p217 = pneg %p216
      // Predicated region
      $region37: #{tpu_custom_call.1} parent=5 // pred_check
        _
      $region38: #{tpu_custom_call.1} parent=5 // pred_check_branch
        %219 = sbr.rel (%p216) target = $region40
      $region39: #{tpu_custom_call.1} parent=5 // pred_region
        %s220 = ssub.s32 %s15, 1
        // Predicated region
        $region41: #{tpu_custom_call.1} parent=39 // pred_check
          %p221 = pneg %p116
        $region42: #{tpu_custom_call.1} parent=39 // pred_check_branch
          %223 = sbr.rel (%p221) target = $region44
        $region43: #{tpu_custom_call.1} parent=39 // pred_region
          %224 = dma.done [#allocation6], 9216
        $region44: #{tpu_custom_call.1} parent=39 // pred_fallthru
          _
        %p225 = scmp.lt.s32.totalorder %s24, 1
        %s226 = scalar_select %p225, %s24, 1
        %s227 = smul.addr %s226, 60
        %s228 = smul.addr %s227, 4
        %s229 = scalar_lea.vmem %s0, %s228
        %p230 = pneg %p53
        %p231 = pneg %p50
        %p232 = pneg %p74
        %p233 = pneg %p71
        %p234 = pneg %p95
        %p235 = pneg %p92
        %p236 = pneg %p116
        %p237 = pneg %p113
        %p238 = pneg %p137
        %p239 = pneg %p134
        %p240 = pneg %p165
        %p241 = pneg %p162
        %s242 = sand.u32 %s152, 1
        %s243 = scalar_lea.sflag [#allocation7], %s242
        %s244 = sand.u32 %s152, 1
        %s245 = smul.addr %s244, 128
        %s246 = scalar_lea.vmem [#allocation8], %s245
        %p247 = scmp.lt.s32.totalorder %s24, 1
        %s248 = scalar_select %p247, %s24, 1
        %s249 = smul.addr %s248, 60
        %s250 = smul.addr %s249, 4
        %s251 = scalar_lea.vmem %s0, %s250
        %s252 = smul.u32 8, %s25
        %s254 = smul.u32 %s25, 8
        %s255 = smul.u32 %s254, 3
        %s256 = smul.addr %s255, 4
        %s257 = scalar_lea.vmem %s251, %s256
        %v258 = vld [vmem:[%s257] sm:$0xf]
        %v259 = vld [vmem:[%s257 + $0x4] sm:$0xf]
        %v260 = vld [vmem:[%s257 + $0xc] sm:$0xf]
        %v261 = vld [vmem:[%s257 + $0x10] sm:$0xf]
        %v262 = vld [vmem:[%s257 + $0x18] sm:$0xf]
        %v263 = vld [vmem:[%s257 + $0x1c] sm:$0xf]
        %v264 = vld [vmem:[%s257 + $0x24] sm:$0xf]
        %v265 = vld [vmem:[%s257 + $0x28] sm:$0xf]
        %v266 = vld [vmem:[%s257 + $0x30] sm:$0xf]
        %v267 = vld [vmem:[%s257 + $0x34] sm:$0xf]
        %v268 = vld [vmem:[%s257 + $0x3c] sm:$0xf]
        %v269 = vld [vmem:[%s257 + $0x40] sm:$0xf]
        %v270 = vld [vmem:[%s257 + $0x48] sm:$0xf]
        %v271 = vld [vmem:[%s257 + $0x4c] sm:$0xf]
        %v272 = vld [vmem:[%s257 + $0x54] sm:$0xf]
        %v273 = vld [vmem:[%s257 + $0x58] sm:$0xf]
        %v274 = vld [vmem:[%s257 + $0x60] sm:$0xf]
        %v275 = vld [vmem:[%s257 + $0x64] sm:$0xf]
        %v276 = vld [vmem:[%s257 + $0x6c] sm:$0xf]
        %v277 = vld [vmem:[%s257 + $0x70] sm:$0xf]
        %278 = vst [vmem:[#allocation2] sm:$0xf] %v258
        %279 = vst [vmem:[#allocation2 + $0x24] sm:$0xf] %v259
        %280 = vst [vmem:[#allocation2 + $0x48] sm:$0xf] %v260
        %281 = vst [vmem:[#allocation2 + $0x6c] sm:$0xf] %v261
        %282 = vst [vmem:[#allocation2 + $0x90] sm:$0xf] %v262
        %283 = vst [vmem:[#allocation2 + $0xb4] sm:$0xf] %v263
        %284 = vst [vmem:[#allocation2 + $0xd8] sm:$0xf] %v264
        %285 = vst [vmem:[#allocation2 + $0xfc] sm:$0xf] %v265
        %286 = vst [vmem:[#allocation2 + $0x120] sm:$0xf] %v266
        %287 = vst [vmem:[#allocation2 + $0x144] sm:$0xf] %v267
        %288 = vst [vmem:[#allocation2 + $0x168] sm:$0xf] %v268
        %289 = vst [vmem:[#allocation2 + $0x18c] sm:$0xf] %v269
        %290 = vst [vmem:[#allocation2 + $0x1b0] sm:$0xf] %v270
        %291 = vst [vmem:[#allocation2 + $0x1d4] sm:$0xf] %v271
        %292 = vst [vmem:[#allocation2 + $0x1f8] sm:$0xf] %v272
        %293 = vst [vmem:[#allocation2 + $0x21c] sm:$0xf] %v273
        %294 = vst [vmem:[#allocation2 + $0x240] sm:$0xf] %v274
        %295 = vst [vmem:[#allocation2 + $0x264] sm:$0xf] %v275
        %296 = vst [vmem:[#allocation2 + $0x288] sm:$0xf] %v276
        %297 = vst [vmem:[#allocation2 + $0x2ac] sm:$0xf] %v277
        %v298 = vld [vmem:[%s257] sm:$0xf]
        %v299 = vld [vmem:[%s257 + $0x4] sm:$0xf]
        %v300 = vld [vmem:[%s257 + $0x8] sm:$0x1]
        %v301 = vld [vmem:[%s257 + $0xc] sm:$0xf]
        %v302 = vld [vmem:[%s257 + $0x10] sm:$0xf]
        %v303 = vld [vmem:[%s257 + $0x14] sm:$0x1]
        %v304 = vld [vmem:[%s257 + $0x18] sm:$0xf]
        %v305 = vld [vmem:[%s257 + $0x1c] sm:$0xf]
        %v306 = vld [vmem:[%s257 + $0x20] sm:$0x1]
        %v307 = vld [vmem:[%s257 + $0x24] sm:$0xf]
        %v308 = vld [vmem:[%s257 + $0x28] sm:$0xf]
        %v309 = vld [vmem:[%s257 + $0x2c] sm:$0x1]
        %v310 = vld [vmem:[%s257 + $0x30] sm:$0xf]
        %v311 = vld [vmem:[%s257 + $0x34] sm:$0xf]
        %v312 = vld [vmem:[%s257 + $0x38] sm:$0x1]
        %v313 = vld [vmem:[%s257 + $0x3c] sm:$0xf]
        %v314 = vld [vmem:[%s257 + $0x40] sm:$0xf]
        %v315 = vld [vmem:[%s257 + $0x44] sm:$0x1]
        %v316 = vld [vmem:[%s257 + $0x48] sm:$0xf]
        %v317 = vld [vmem:[%s257 + $0x4c] sm:$0xf]
        %v318 = vld [vmem:[%s257 + $0x50] sm:$0x1]
        %v319 = vld [vmem:[%s257 + $0x54] sm:$0xf]
        %v320 = vld [vmem:[%s257 + $0x58] sm:$0xf]
        %v321 = vld [vmem:[%s257 + $0x5c] sm:$0x1]
        %v322 = vld [vmem:[%s257 + $0x60] sm:$0xf]
        %v323 = vld [vmem:[%s257 + $0x64] sm:$0xf]
        %v324 = vld [vmem:[%s257 + $0x68] sm:$0x1]
        %v325 = vld [vmem:[%s257 + $0x6c] sm:$0xf]
        %v326 = vld [vmem:[%s257 + $0x70] sm:$0xf]
        %v327 = vld [vmem:[%s257 + $0x74] sm:$0x1]
        %vm328 = vsmask.f32 3328
        %vm329 = vsmask.f32 7440
        %vm330 = vmor %vm328, %vm329
        %v332 = vshrl.u32 %v298, 16
        %v334 = vrot.slane %v332, 4
        %v335 = vshll.u32 %v298, 16
        %v337 = vrot.slane %v335, 5
        %v338 = vor.u32 %v334, %v337
        %v339 = vrot.slane %v338, 4
        %v341 = vshll.u32 %v299, 16
        %v343 = vrot.slane %v341, 5
        %v344 = vsel %vm330, %v339, %v343
        %v345 = vshrl.u32 %v299, 16
        %v347 = vrot.slane %v345, 4
        %v348 = vor.u32 %v347, %v343
        %v349 = vrot.slane %v348, 4
        %v351 = vshll.u32 %v300, 16
        %v353 = vrot.slane %v351, 5
        %v354 = vsel %vm330, %v349, %v353
        %v356 = vshrl.u32 %v301, 16
        %v358 = vrot.slane %v356, 4
        %v359 = vshll.u32 %v301, 16
        %v361 = vrot.slane %v359, 5
        %v362 = vor.u32 %v358, %v361
        %v363 = vrot.slane %v362, 4
        %v365 = vshll.u32 %v302, 16
        %v367 = vrot.slane %v365, 5
        %v368 = vsel %vm330, %v363, %v367
        %v369 = vshrl.u32 %v302, 16
        %v371 = vrot.slane %v369, 4
        %v372 = vor.u32 %v371, %v367
        %v373 = vrot.slane %v372, 4
        %v375 = vshll.u32 %v303, 16
        %v377 = vrot.slane %v375, 5
        %v378 = vsel %vm330, %v373, %v377
        %v380 = vshrl.u32 %v304, 16
        %v382 = vrot.slane %v380, 4
        %v383 = vshll.u32 %v304, 16
        %v385 = vrot.slane %v383, 5
        %v386 = vor.u32 %v382, %v385
        %v387 = vrot.slane %v386, 4
        %v389 = vshll.u32 %v305, 16
        %v391 = vrot.slane %v389, 5
        %v392 = vsel %vm330, %v387, %v391
        %v393 = vshrl.u32 %v305, 16
        %v395 = vrot.slane %v393, 4
        %v396 = vor.u32 %v395, %v391
        %v397 = vrot.slane %v396, 4
        %v399 = vshll.u32 %v306, 16
        %v401 = vrot.slane %v399, 5
        %v402 = vsel %vm330, %v397, %v401
        %v404 = vshrl.u32 %v307, 16
        %v406 = vrot.slane %v404, 4
        %v407 = vshll.u32 %v307, 16
        %v409 = vrot.slane %v407, 5
        %v410 = vor.u32 %v406, %v409
        %v411 = vrot.slane %v410, 4
        %v413 = vshll.u32 %v308, 16
        %v415 = vrot.slane %v413, 5
        %v416 = vsel %vm330, %v411, %v415
        %v417 = vshrl.u32 %v308, 16
        %v419 = vrot.slane %v417, 4
        %v420 = vor.u32 %v419, %v415
        %v421 = vrot.slane %v420, 4
        %v423 = vshll.u32 %v309, 16
        %v425 = vrot.slane %v423, 5
        %v426 = vsel %vm330, %v421, %v425
        %v428 = vshrl.u32 %v310, 16
        %v430 = vrot.slane %v428, 4
        %v431 = vshll.u32 %v310, 16
        %v433 = vrot.slane %v431, 5
        %v434 = vor.u32 %v430, %v433
        %v435 = vrot.slane %v434, 4
        %v437 = vshll.u32 %v311, 16
        %v439 = vrot.slane %v437, 5
        %v440 = vsel %vm330, %v435, %v439
        %v441 = vshrl.u32 %v311, 16
        %v443 = vrot.slane %v441, 4
        %v444 = vor.u32 %v443, %v439
        %v445 = vrot.slane %v444, 4
        %v447 = vshll.u32 %v312, 16
        %v449 = vrot.slane %v447, 5
        %v450 = vsel %vm330, %v445, %v449
        %v452 = vshrl.u32 %v313, 16
        %v454 = vrot.slane %v452, 4
        %v455 = vshll.u32 %v313, 16
        %v457 = vrot.slane %v455, 5
        %v458 = vor.u32 %v454, %v457
        %v459 = vrot.slane %v458, 4
        %v461 = vshll.u32 %v314, 16
        %v463 = vrot.slane %v461, 5
        %v464 = vsel %vm330, %v459, %v463
        %v465 = vshrl.u32 %v314, 16
        %v467 = vrot.slane %v465, 4
        %v468 = vor.u32 %v467, %v463
        %v469 = vrot.slane %v468, 4
        %v471 = vshll.u32 %v315, 16
        %v473 = vrot.slane %v471, 5
        %v474 = vsel %vm330, %v469, %v473
        %v476 = vshrl.u32 %v316, 16
        %v478 = vrot.slane %v476, 4
        %v479 = vshll.u32 %v316, 16
        %v481 = vrot.slane %v479, 5
        %v482 = vor.u32 %v478, %v481
        %v483 = vrot.slane %v482, 4
        %v485 = vshll.u32 %v317, 16
        %v487 = vrot.slane %v485, 5
        %v488 = vsel %vm330, %v483, %v487
        %v489 = vshrl.u32 %v317, 16
        %v491 = vrot.slane %v489, 4
        %v492 = vor.u32 %v491, %v487
        %v493 = vrot.slane %v492, 4
        %v495 = vshll.u32 %v318, 16
        %v497 = vrot.slane %v495, 5
        %v498 = vsel %vm330, %v493, %v497
        %v500 = vshrl.u32 %v319, 16
        %v502 = vrot.slane %v500, 4
        %v503 = vshll.u32 %v319, 16
        %v505 = vrot.slane %v503, 5
        %v506 = vor.u32 %v502, %v505
        %v507 = vrot.slane %v506, 4
        %v509 = vshll.u32 %v320, 16
        %v511 = vrot.slane %v509, 5
        %v512 = vsel %vm330, %v507, %v511
        %v513 = vshrl.u32 %v320, 16
        %v515 = vrot.slane %v513, 4
        %v516 = vor.u32 %v515, %v511
        %v517 = vrot.slane %v516, 4
        %v519 = vshll.u32 %v321, 16
        %v521 = vrot.slane %v519, 5
        %v522 = vsel %vm330, %v517, %v521
        %v524 = vshrl.u32 %v322, 16
        %v526 = vrot.slane %v524, 4
        %v527 = vshll.u32 %v322, 16
        %v529 = vrot.slane %v527, 5
        %v530 = vor.u32 %v526, %v529
        %v531 = vrot.slane %v530, 4
        %v533 = vshll.u32 %v323, 16
        %v535 = vrot.slane %v533, 5
        %v536 = vsel %vm330, %v531, %v535
        %v537 = vshrl.u32 %v323, 16
        %v539 = vrot.slane %v537, 4
        %v540 = vor.u32 %v539, %v535
        %v541 = vrot.slane %v540, 4
        %v543 = vshll.u32 %v324, 16
        %v545 = vrot.slane %v543, 5
        %v546 = vsel %vm330, %v541, %v545
        %v548 = vshrl.u32 %v325, 16
        %v550 = vrot.slane %v548, 4
        %v551 = vshll.u32 %v325, 16
        %v553 = vrot.slane %v551, 5
        %v554 = vor.u32 %v550, %v553
        %v555 = vrot.slane %v554, 4
        %v557 = vshll.u32 %v326, 16
        %v559 = vrot.slane %v557, 5
        %v560 = vsel %vm330, %v555, %v559
        %v561 = vshrl.u32 %v326, 16
        %v563 = vrot.slane %v561, 4
        %v564 = vor.u32 %v563, %v559
        %v565 = vrot.slane %v564, 4
        %v567 = vshll.u32 %v327, 16
        %v569 = vrot.slane %v567, 5
        %v570 = vsel %vm330, %v565, %v569
        %591 = vst [vmem:[#allocation2 + $0x4] sm:$0xf] %v344
        %592 = vst [vmem:[#allocation2 + $0x28] sm:$0xf] %v354
        %593 = vst [vmem:[#allocation2 + $0x4c] sm:$0xf] %v368
        %594 = vst [vmem:[#allocation2 + $0x70] sm:$0xf] %v378
        %595 = vst [vmem:[#allocation2 + $0x94] sm:$0xf] %v392
        %596 = vst [vmem:[#allocation2 + $0xb8] sm:$0xf] %v402
        %597 = vst [vmem:[#allocation2 + $0xdc] sm:$0xf] %v416
        %598 = vst [vmem:[#allocation2 + $0x100] sm:$0xf] %v426
        %599 = vst [vmem:[#allocation2 + $0x124] sm:$0xf] %v440
        %600 = vst [vmem:[#allocation2 + $0x148] sm:$0xf] %v450
        %601 = vst [vmem:[#allocation2 + $0x16c] sm:$0xf] %v464
        %602 = vst [vmem:[#allocation2 + $0x190] sm:$0xf] %v474
        %603 = vst [vmem:[#allocation2 + $0x1b4] sm:$0xf] %v488
        %604 = vst [vmem:[#allocation2 + $0x1d8] sm:$0xf] %v498
        %605 = vst [vmem:[#allocation2 + $0x1fc] sm:$0xf] %v512
        %606 = vst [vmem:[#allocation2 + $0x220] sm:$0xf] %v522
        %607 = vst [vmem:[#allocation2 + $0x244] sm:$0xf] %v536
        %608 = vst [vmem:[#allocation2 + $0x268] sm:$0xf] %v546
        %609 = vst [vmem:[#allocation2 + $0x28c] sm:$0xf] %v560
        %610 = vst [vmem:[#allocation2 + $0x2b0] sm:$0xf] %v570
        %v611 = vld [vmem:[%s257] sm:$0xe]
        %v612 = vld [vmem:[%s257 + $0x4] sm:$0xf]
        %v613 = vld [vmem:[%s257 + $0x8] sm:$0x1]
        %v614 = vld [vmem:[%s257 + $0xc] sm:$0xe]
        %v615 = vld [vmem:[%s257 + $0x10] sm:$0xf]
        %v616 = vld [vmem:[%s257 + $0x14] sm:$0x1]
        %v617 = vld [vmem:[%s257 + $0x18] sm:$0xe]
        %v618 = vld [vmem:[%s257 + $0x1c] sm:$0xf]
        %v619 = vld [vmem:[%s257 + $0x20] sm:$0x1]
        %v620 = vld [vmem:[%s257 + $0x24] sm:$0xe]
        %v621 = vld [vmem:[%s257 + $0x28] sm:$0xf]
        %v622 = vld [vmem:[%s257 + $0x2c] sm:$0x1]
        %v623 = vld [vmem:[%s257 + $0x30] sm:$0xe]
        %v624 = vld [vmem:[%s257 + $0x34] sm:$0xf]
        %v625 = vld [vmem:[%s257 + $0x38] sm:$0x1]
        %v626 = vld [vmem:[%s257 + $0x3c] sm:$0xe]
        %v627 = vld [vmem:[%s257 + $0x40] sm:$0xf]
        %v628 = vld [vmem:[%s257 + $0x44] sm:$0x1]
        %v629 = vld [vmem:[%s257 + $0x48] sm:$0xe]
        %v630 = vld [vmem:[%s257 + $0x4c] sm:$0xf]
        %v631 = vld [vmem:[%s257 + $0x50] sm:$0x1]
        %v632 = vld [vmem:[%s257 + $0x54] sm:$0xe]
        %v633 = vld [vmem:[%s257 + $0x58] sm:$0xf]
        %v634 = vld [vmem:[%s257 + $0x5c] sm:$0x1]
        %v635 = vld [vmem:[%s257 + $0x60] sm:$0xe]
        %v636 = vld [vmem:[%s257 + $0x64] sm:$0xf]
        %v637 = vld [vmem:[%s257 + $0x68] sm:$0x1]
        %v638 = vld [vmem:[%s257 + $0x6c] sm:$0xe]
        %v639 = vld [vmem:[%s257 + $0x70] sm:$0xf]
        %v640 = vld [vmem:[%s257 + $0x74] sm:$0x1]
        %vm671 = vcmask 1042432
        %vm672 = vcmask 1046532
        %vm673 = vmor %vm671, %vm672
        %v674 = vrot.slane %v611, 5
        %v675 = vrot.slane %v674, 4
        %v676 = vrot.slane %v612, 5
        %v677 = vsel %vm673, %v675, %v676
        %v678 = vrot.slane %v676, 4
        %v679 = vrot.slane %v613, 5
        %v680 = vsel %vm673, %v678, %v679
        %v681 = vrot.slane %v614, 5
        %v682 = vrot.slane %v681, 4
        %v683 = vrot.slane %v615, 5
        %v684 = vsel %vm673, %v682, %v683
        %v685 = vrot.slane %v683, 4
        %v686 = vrot.slane %v616, 5
        %v687 = vsel %vm673, %v685, %v686
        %v688 = vrot.slane %v617, 5
        %v689 = vrot.slane %v688, 4
        %v690 = vrot.slane %v618, 5
        %v691 = vsel %vm673, %v689, %v690
        %v692 = vrot.slane %v690, 4
        %v693 = vrot.slane %v619, 5
        %v694 = vsel %vm673, %v692, %v693
        %v695 = vrot.slane %v620, 5
        %v696 = vrot.slane %v695, 4
        %v697 = vrot.slane %v621, 5
        %v698 = vsel %vm673, %v696, %v697
        %v699 = vrot.slane %v697, 4
        %v700 = vrot.slane %v622, 5
        %v701 = vsel %vm673, %v699, %v700
        %v702 = vrot.slane %v623, 5
        %v703 = vrot.slane %v702, 4
        %v704 = vrot.slane %v624, 5
        %v705 = vsel %vm673, %v703, %v704
        %v706 = vrot.slane %v704, 4
        %v707 = vrot.slane %v625, 5
        %v708 = vsel %vm673, %v706, %v707
        %v709 = vrot.slane %v626, 5
        %v710 = vrot.slane %v709, 4
        %v711 = vrot.slane %v627, 5
        %v712 = vsel %vm673, %v710, %v711
        %v713 = vrot.slane %v711, 4
        %v714 = vrot.slane %v628, 5
        %v715 = vsel %vm673, %v713, %v714
        %v716 = vrot.slane %v629, 5
        %v717 = vrot.slane %v716, 4
        %v718 = vrot.slane %v630, 5
        %v719 = vsel %vm673, %v717, %v718
        %v720 = vrot.slane %v718, 4
        %v721 = vrot.slane %v631, 5
        %v722 = vsel %vm673, %v720, %v721
        %v723 = vrot.slane %v632, 5
        %v724 = vrot.slane %v723, 4
        %v725 = vrot.slane %v633, 5
        %v726 = vsel %vm673, %v724, %v725
        %v727 = vrot.slane %v725, 4
        %v728 = vrot.slane %v634, 5
        %v729 = vsel %vm673, %v727, %v728
        %v730 = vrot.slane %v635, 5
        %v731 = vrot.slane %v730, 4
        %v732 = vrot.slane %v636, 5
        %v733 = vsel %vm673, %v731, %v732
        %v734 = vrot.slane %v732, 4
        %v735 = vrot.slane %v637, 5
        %v736 = vsel %vm673, %v734, %v735
        %v737 = vrot.slane %v638, 5
        %v738 = vrot.slane %v737, 4
        %v739 = vrot.slane %v639, 5
        %v740 = vsel %vm673, %v738, %v739
        %v741 = vrot.slane %v739, 4
        %v742 = vrot.slane %v640, 5
        %v743 = vsel %vm673, %v741, %v742
        %764 = vst [vmem:[#allocation2 + $0x8] sm:$0xf] %v677
        %765 = vst [vmem:[#allocation2 + $0x2c] sm:$0xf] %v680
        %766 = vst [vmem:[#allocation2 + $0x50] sm:$0xf] %v684
        %767 = vst [vmem:[#allocation2 + $0x74] sm:$0xf] %v687
        %768 = vst [vmem:[#allocation2 + $0x98] sm:$0xf] %v691
        %769 = vst [vmem:[#allocation2 + $0xbc] sm:$0xf] %v694
        %770 = vst [vmem:[#allocation2 + $0xe0] sm:$0xf] %v698
        %771 = vst [vmem:[#allocation2 + $0x104] sm:$0xf] %v701
        %772 = vst [vmem:[#allocation2 + $0x128] sm:$0xf] %v705
        %773 = vst [vmem:[#allocation2 + $0x14c] sm:$0xf] %v708
        %774 = vst [vmem:[#allocation2 + $0x170] sm:$0xf] %v712
        %775 = vst [vmem:[#allocation2 + $0x194] sm:$0xf] %v715
        %776 = vst [vmem:[#allocation2 + $0x1b8] sm:$0xf] %v719
        %777 = vst [vmem:[#allocation2 + $0x1dc] sm:$0xf] %v722
        %778 = vst [vmem:[#allocation2 + $0x200] sm:$0xf] %v726
        %779 = vst [vmem:[#allocation2 + $0x224] sm:$0xf] %v729
        %780 = vst [vmem:[#allocation2 + $0x248] sm:$0xf] %v733
        %781 = vst [vmem:[#allocation2 + $0x26c] sm:$0xf] %v736
        %782 = vst [vmem:[#allocation2 + $0x290] sm:$0xf] %v740
        %783 = vst [vmem:[#allocation2 + $0x2b4] sm:$0xf] %v743
        %s784 = sadd.s32 %s254, 1
        %s785 = smul.u32 %s784, 3
        %s786 = smul.addr %s785, 4
        %s787 = scalar_lea.vmem %s251, %s786
        %v788 = vld [vmem:[%s787] sm:$0xf]
        %v789 = vld [vmem:[%s787 + $0x4] sm:$0xf]
        %v790 = vld [vmem:[%s787 + $0xc] sm:$0xf]
        %v791 = vld [vmem:[%s787 + $0x10] sm:$0xf]
        %v792 = vld [vmem:[%s787 + $0x18] sm:$0xf]
        %v793 = vld [vmem:[%s787 + $0x1c] sm:$0xf]
        %v794 = vld [vmem:[%s787 + $0x24] sm:$0xf]
        %v795 = vld [vmem:[%s787 + $0x28] sm:$0xf]
        %v796 = vld [vmem:[%s787 + $0x30] sm:$0xf]
        %v797 = vld [vmem:[%s787 + $0x34] sm:$0xf]
        %v798 = vld [vmem:[%s787 + $0x3c] sm:$0xf]
        %v799 = vld [vmem:[%s787 + $0x40] sm:$0xf]
        %v800 = vld [vmem:[%s787 + $0x48] sm:$0xf]
        %v801 = vld [vmem:[%s787 + $0x4c] sm:$0xf]
        %v802 = vld [vmem:[%s787 + $0x54] sm:$0xf]
        %v803 = vld [vmem:[%s787 + $0x58] sm:$0xf]
        %v804 = vld [vmem:[%s787 + $0x60] sm:$0xf]
        %v805 = vld [vmem:[%s787 + $0x64] sm:$0xf]
        %v806 = vld [vmem:[%s787 + $0x6c] sm:$0xf]
        %v807 = vld [vmem:[%s787 + $0x70] sm:$0xf]
        %808 = vst [vmem:[#allocation2 + $0xc] sm:$0xf] %v788
        %809 = vst [vmem:[#allocation2 + $0x30] sm:$0xf] %v789
        %810 = vst [vmem:[#allocation2 + $0x54] sm:$0xf] %v790
        %811 = vst [vmem:[#allocation2 + $0x78] sm:$0xf] %v791
        %812 = vst [vmem:[#allocation2 + $0x9c] sm:$0xf] %v792
        %813 = vst [vmem:[#allocation2 + $0xc0] sm:$0xf] %v793
        %814 = vst [vmem:[#allocation2 + $0xe4] sm:$0xf] %v794
        %815 = vst [vmem:[#allocation2 + $0x108] sm:$0xf] %v795
        %816 = vst [vmem:[#allocation2 + $0x12c] sm:$0xf] %v796
        %817 = vst [vmem:[#allocation2 + $0x150] sm:$0xf] %v797
        %818 = vst [vmem:[#allocation2 + $0x174] sm:$0xf] %v798
        %819 = vst [vmem:[#allocation2 + $0x198] sm:$0xf] %v799
        %820 = vst [vmem:[#allocation2 + $0x1bc] sm:$0xf] %v800
        %821 = vst [vmem:[#allocation2 + $0x1e0] sm:$0xf] %v801
        %822 = vst [vmem:[#allocation2 + $0x204] sm:$0xf] %v802
        %823 = vst [vmem:[#allocation2 + $0x228] sm:$0xf] %v803
        %824 = vst [vmem:[#allocation2 + $0x24c] sm:$0xf] %v804
        %825 = vst [vmem:[#allocation2 + $0x270] sm:$0xf] %v805
        %826 = vst [vmem:[#allocation2 + $0x294] sm:$0xf] %v806
        %827 = vst [vmem:[#allocation2 + $0x2b8] sm:$0xf] %v807
        %v828 = vld [vmem:[%s787] sm:$0xf]
        %v829 = vld [vmem:[%s787 + $0x4] sm:$0xf]
        %v830 = vld [vmem:[%s787 + $0x8] sm:$0x1]
        %v831 = vld [vmem:[%s787 + $0xc] sm:$0xf]
        %v832 = vld [vmem:[%s787 + $0x10] sm:$0xf]
        %v833 = vld [vmem:[%s787 + $0x14] sm:$0x1]
        %v834 = vld [vmem:[%s787 + $0x18] sm:$0xf]
        %v835 = vld [vmem:[%s787 + $0x1c] sm:$0xf]
        %v836 = vld [vmem:[%s787 + $0x20] sm:$0x1]
        %v837 = vld [vmem:[%s787 + $0x24] sm:$0xf]
        %v838 = vld [vmem:[%s787 + $0x28] sm:$0xf]
        %v839 = vld [vmem:[%s787 + $0x2c] sm:$0x1]
        %v840 = vld [vmem:[%s787 + $0x30] sm:$0xf]
        %v841 = vld [vmem:[%s787 + $0x34] sm:$0xf]
        %v842 = vld [vmem:[%s787 + $0x38] sm:$0x1]
        %v843 = vld [vmem:[%s787 + $0x3c] sm:$0xf]
        %v844 = vld [vmem:[%s787 + $0x40] sm:$0xf]
        %v845 = vld [vmem:[%s787 + $0x44] sm:$0x1]
        %v846 = vld [vmem:[%s787 + $0x48] sm:$0xf]
        %v847 = vld [vmem:[%s787 + $0x4c] sm:$0xf]
        %v848 = vld [vmem:[%s787 + $0x50] sm:$0x1]
        %v849 = vld [vmem:[%s787 + $0x54] sm:$0xf]
        %v850 = vld [vmem:[%s787 + $0x58] sm:$0xf]
        %v851 = vld [vmem:[%s787 + $0x5c] sm:$0x1]
        %v852 = vld [vmem:[%s787 + $0x60] sm:$0xf]
        %v853 = vld [vmem:[%s787 + $0x64] sm:$0xf]
        %v854 = vld [vmem:[%s787 + $0x68] sm:$0x1]
        %v855 = vld [vmem:[%s787 + $0x6c] sm:$0xf]
        %v856 = vld [vmem:[%s787 + $0x70] sm:$0xf]
        %v857 = vld [vmem:[%s787 + $0x74] sm:$0x1]
        %v859 = vshrl.u32 %v828, 16
        %v861 = vrot.slane %v859, 4
        %v862 = vshll.u32 %v828, 16
        %v864 = vrot.slane %v862, 5
        %v865 = vor.u32 %v861, %v864
        %v866 = vrot.slane %v865, 4
        %v868 = vshll.u32 %v829, 16
        %v870 = vrot.slane %v868, 5
        %v871 = vsel %vm330, %v866, %v870
        %v872 = vshrl.u32 %v829, 16
        %v874 = vrot.slane %v872, 4
        %v875 = vor.u32 %v874, %v870
        %v876 = vrot.slane %v875, 4
        %v878 = vshll.u32 %v830, 16
        %v880 = vrot.slane %v878, 5
        %v881 = vsel %vm330, %v876, %v880
        %v883 = vshrl.u32 %v831, 16
        %v885 = vrot.slane %v883, 4
        %v886 = vshll.u32 %v831, 16
        %v888 = vrot.slane %v886, 5
        %v889 = vor.u32 %v885, %v888
        %v890 = vrot.slane %v889, 4
        %v892 = vshll.u32 %v832, 16
        %v894 = vrot.slane %v892, 5
        %v895 = vsel %vm330, %v890, %v894
        %v896 = vshrl.u32 %v832, 16
        %v898 = vrot.slane %v896, 4
        %v899 = vor.u32 %v898, %v894
        %v900 = vrot.slane %v899, 4
        %v902 = vshll.u32 %v833, 16
        %v904 = vrot.slane %v902, 5
        %v905 = vsel %vm330, %v900, %v904
        %v907 = vshrl.u32 %v834, 16
        %v909 = vrot.slane %v907, 4
        %v910 = vshll.u32 %v834, 16
        %v912 = vrot.slane %v910, 5
        %v913 = vor.u32 %v909, %v912
        %v914 = vrot.slane %v913, 4
        %v916 = vshll.u32 %v835, 16
        %v918 = vrot.slane %v916, 5
        %v919 = vsel %vm330, %v914, %v918
        %v920 = vshrl.u32 %v835, 16
        %v922 = vrot.slane %v920, 4
        %v923 = vor.u32 %v922, %v918
        %v924 = vrot.slane %v923, 4
        %v926 = vshll.u32 %v836, 16
        %v928 = vrot.slane %v926, 5
        %v929 = vsel %vm330, %v924, %v928
        %v931 = vshrl.u32 %v837, 16
        %v933 = vrot.slane %v931, 4
        %v934 = vshll.u32 %v837, 16
        %v936 = vrot.slane %v934, 5
        %v937 = vor.u32 %v933, %v936
        %v938 = vrot.slane %v937, 4
        %v940 = vshll.u32 %v838, 16
        %v942 = vrot.slane %v940, 5
        %v943 = vsel %vm330, %v938, %v942
        %v944 = vshrl.u32 %v838, 16
        %v946 = vrot.slane %v944, 4
        %v947 = vor.u32 %v946, %v942
        %v948 = vrot.slane %v947, 4
        %v950 = vshll.u32 %v839, 16
        %v952 = vrot.slane %v950, 5
        %v953 = vsel %vm330, %v948, %v952
        %v955 = vshrl.u32 %v840, 16
        %v957 = vrot.slane %v955, 4
        %v958 = vshll.u32 %v840, 16
        %v960 = vrot.slane %v958, 5
        %v961 = vor.u32 %v957, %v960
        %v962 = vrot.slane %v961, 4
        %v964 = vshll.u32 %v841, 16
        %v966 = vrot.slane %v964, 5
        %v967 = vsel %vm330, %v962, %v966
        %v968 = vshrl.u32 %v841, 16
        %v970 = vrot.slane %v968, 4
        %v971 = vor.u32 %v970, %v966
        %v972 = vrot.slane %v971, 4
        %v974 = vshll.u32 %v842, 16
        %v976 = vrot.slane %v974, 5
        %v977 = vsel %vm330, %v972, %v976
        %v979 = vshrl.u32 %v843, 16
        %v981 = vrot.slane %v979, 4
        %v982 = vshll.u32 %v843, 16
        %v984 = vrot.slane %v982, 5
        %v985 = vor.u32 %v981, %v984
        %v986 = vrot.slane %v985, 4
        %v988 = vshll.u32 %v844, 16
        %v990 = vrot.slane %v988, 5
        %v991 = vsel %vm330, %v986, %v990
        %v992 = vshrl.u32 %v844, 16
        %v994 = vrot.slane %v992, 4
        %v995 = vor.u32 %v994, %v990
        %v996 = vrot.slane %v995, 4
        %v998 = vshll.u32 %v845, 16
        %v1000 = vrot.slane %v998, 5
        %v1001 = vsel %vm330, %v996, %v1000
        %v1003 = vshrl.u32 %v846, 16
        %v1005 = vrot.slane %v1003, 4
        %v1006 = vshll.u32 %v846, 16
        %v1008 = vrot.slane %v1006, 5
        %v1009 = vor.u32 %v1005, %v1008
        %v1010 = vrot.slane %v1009, 4
        %v1012 = vshll.u32 %v847, 16
        %v1014 = vrot.slane %v1012, 5
        %v1015 = vsel %vm330, %v1010, %v1014
        %v1016 = vshrl.u32 %v847, 16
        %v1018 = vrot.slane %v1016, 4
        %v1019 = vor.u32 %v1018, %v1014
        %v1020 = vrot.slane %v1019, 4
        %v1022 = vshll.u32 %v848, 16
        %v1024 = vrot.slane %v1022, 5
        %v1025 = vsel %vm330, %v1020, %v1024
        %v1027 = vshrl.u32 %v849, 16
        %v1029 = vrot.slane %v1027, 4
        %v1030 = vshll.u32 %v849, 16
        %v1032 = vrot.slane %v1030, 5
        %v1033 = vor.u32 %v1029, %v1032
        %v1034 = vrot.slane %v1033, 4
        %v1036 = vshll.u32 %v850, 16
        %v1038 = vrot.slane %v1036, 5
        %v1039 = vsel %vm330, %v1034, %v1038
        %v1040 = vshrl.u32 %v850, 16
        %v1042 = vrot.slane %v1040, 4
        %v1043 = vor.u32 %v1042, %v1038
        %v1044 = vrot.slane %v1043, 4
        %v1046 = vshll.u32 %v851, 16
        %v1048 = vrot.slane %v1046, 5
        %v1049 = vsel %vm330, %v1044, %v1048
        %v1051 = vshrl.u32 %v852, 16
        %v1053 = vrot.slane %v1051, 4
        %v1054 = vshll.u32 %v852, 16
        %v1056 = vrot.slane %v1054, 5
        %v1057 = vor.u32 %v1053, %v1056
        %v1058 = vrot.slane %v1057, 4
        %v1060 = vshll.u32 %v853, 16
        %v1062 = vrot.slane %v1060, 5
        %v1063 = vsel %vm330, %v1058, %v1062
        %v1064 = vshrl.u32 %v853, 16
        %v1066 = vrot.slane %v1064, 4
        %v1067 = vor.u32 %v1066, %v1062
        %v1068 = vrot.slane %v1067, 4
        %v1070 = vshll.u32 %v854, 16
        %v1072 = vrot.slane %v1070, 5
        %v1073 = vsel %vm330, %v1068, %v1072
        %v1075 = vshrl.u32 %v855, 16
        %v1077 = vrot.slane %v1075, 4
        %v1078 = vshll.u32 %v855, 16
        %v1080 = vrot.slane %v1078, 5
        %v1081 = vor.u32 %v1077, %v1080
        %v1082 = vrot.slane %v1081, 4
        %v1084 = vshll.u32 %v856, 16
        %v1086 = vrot.slane %v1084, 5
        %v1087 = vsel %vm330, %v1082, %v1086
        %v1088 = vshrl.u32 %v856, 16
        %v1090 = vrot.slane %v1088, 4
        %v1091 = vor.u32 %v1090, %v1086
        %v1092 = vrot.slane %v1091, 4
        %v1094 = vshll.u32 %v857, 16
        %v1096 = vrot.slane %v1094, 5
        %v1097 = vsel %vm330, %v1092, %v1096
        %1118 = vst [vmem:[#allocation2 + $0x10] sm:$0xf] %v871
        %1119 = vst [vmem:[#allocation2 + $0x34] sm:$0xf] %v881
        %1120 = vst [vmem:[#allocation2 + $0x58] sm:$0xf] %v895
        %1121 = vst [vmem:[#allocation2 + $0x7c] sm:$0xf] %v905
        %1122 = vst [vmem:[#allocation2 + $0xa0] sm:$0xf] %v919
        %1123 = vst [vmem:[#allocation2 + $0xc4] sm:$0xf] %v929
        %1124 = vst [vmem:[#allocation2 + $0xe8] sm:$0xf] %v943
        %1125 = vst [vmem:[#allocation2 + $0x10c] sm:$0xf] %v953
        %1126 = vst [vmem:[#allocation2 + $0x130] sm:$0xf] %v967
        %1127 = vst [vmem:[#allocation2 + $0x154] sm:$0xf] %v977
        %1128 = vst [vmem:[#allocation2 + $0x178] sm:$0xf] %v991
        %1129 = vst [vmem:[#allocation2 + $0x19c] sm:$0xf] %v1001
        %1130 = vst [vmem:[#allocation2 + $0x1c0] sm:$0xf] %v1015
        %1131 = vst [vmem:[#allocation2 + $0x1e4] sm:$0xf] %v1025
        %1132 = vst [vmem:[#allocation2 + $0x208] sm:$0xf] %v1039
        %1133 = vst [vmem:[#allocation2 + $0x22c] sm:$0xf] %v1049
        %1134 = vst [vmem:[#allocation2 + $0x250] sm:$0xf] %v1063
        %1135 = vst [vmem:[#allocation2 + $0x274] sm:$0xf] %v1073
        %1136 = vst [vmem:[#allocation2 + $0x298] sm:$0xf] %v1087
        %1137 = vst [vmem:[#allocation2 + $0x2bc] sm:$0xf] %v1097
        %v1138 = vld [vmem:[%s787] sm:$0xe]
        %v1139 = vld [vmem:[%s787 + $0x4] sm:$0xf]
        %v1140 = vld [vmem:[%s787 + $0x8] sm:$0x1]
        %v1141 = vld [vmem:[%s787 + $0xc] sm:$0xe]
        %v1142 = vld [vmem:[%s787 + $0x10] sm:$0xf]
        %v1143 = vld [vmem:[%s787 + $0x14] sm:$0x1]
        %v1144 = vld [vmem:[%s787 + $0x18] sm:$0xe]
        %v1145 = vld [vmem:[%s787 + $0x1c] sm:$0xf]
        %v1146 = vld [vmem:[%s787 + $0x20] sm:$0x1]
        %v1147 = vld [vmem:[%s787 + $0x24] sm:$0xe]
        %v1148 = vld [vmem:[%s787 + $0x28] sm:$0xf]
        %v1149 = vld [vmem:[%s787 + $0x2c] sm:$0x1]
        %v1150 = vld [vmem:[%s787 + $0x30] sm:$0xe]
        %v1151 = vld [vmem:[%s787 + $0x34] sm:$0xf]
        %v1152 = vld [vmem:[%s787 + $0x38] sm:$0x1]
        %v1153 = vld [vmem:[%s787 + $0x3c] sm:$0xe]
        %v1154 = vld [vmem:[%s787 + $0x40] sm:$0xf]
        %v1155 = vld [vmem:[%s787 + $0x44] sm:$0x1]
        %v1156 = vld [vmem:[%s787 + $0x48] sm:$0xe]
        %v1157 = vld [vmem:[%s787 + $0x4c] sm:$0xf]
        %v1158 = vld [vmem:[%s787 + $0x50] sm:$0x1]
        %v1159 = vld [vmem:[%s787 + $0x54] sm:$0xe]
        %v1160 = vld [vmem:[%s787 + $0x58] sm:$0xf]
        %v1161 = vld [vmem:[%s787 + $0x5c] sm:$0x1]
        %v1162 = vld [vmem:[%s787 + $0x60] sm:$0xe]
        %v1163 = vld [vmem:[%s787 + $0x64] sm:$0xf]
        %v1164 = vld [vmem:[%s787 + $0x68] sm:$0x1]
        %v1165 = vld [vmem:[%s787 + $0x6c] sm:$0xe]
        %v1166 = vld [vmem:[%s787 + $0x70] sm:$0xf]
        %v1167 = vld [vmem:[%s787 + $0x74] sm:$0x1]
        %v1198 = vrot.slane %v1138, 5
        %v1199 = vrot.slane %v1198, 4
        %v1200 = vrot.slane %v1139, 5
        %v1201 = vsel %vm673, %v1199, %v1200
        %v1202 = vrot.slane %v1200, 4
        %v1203 = vrot.slane %v1140, 5
        %v1204 = vsel %vm673, %v1202, %v1203
        %v1205 = vrot.slane %v1141, 5
        %v1206 = vrot.slane %v1205, 4
        %v1207 = vrot.slane %v1142, 5
        %v1208 = vsel %vm673, %v1206, %v1207
        %v1209 = vrot.slane %v1207, 4
        %v1210 = vrot.slane %v1143, 5
        %v1211 = vsel %vm673, %v1209, %v1210
        %v1212 = vrot.slane %v1144, 5
        %v1213 = vrot.slane %v1212, 4
        %v1214 = vrot.slane %v1145, 5
        %v1215 = vsel %vm673, %v1213, %v1214
        %v1216 = vrot.slane %v1214, 4
        %v1217 = vrot.slane %v1146, 5
        %v1218 = vsel %vm673, %v1216, %v1217
        %v1219 = vrot.slane %v1147, 5
        %v1220 = vrot.slane %v1219, 4
        %v1221 = vrot.slane %v1148, 5
        %v1222 = vsel %vm673, %v1220, %v1221
        %v1223 = vrot.slane %v1221, 4
        %v1224 = vrot.slane %v1149, 5
        %v1225 = vsel %vm673, %v1223, %v1224
        %v1226 = vrot.slane %v1150, 5
        %v1227 = vrot.slane %v1226, 4
        %v1228 = vrot.slane %v1151, 5
        %v1229 = vsel %vm673, %v1227, %v1228
        %v1230 = vrot.slane %v1228, 4
        %v1231 = vrot.slane %v1152, 5
        %v1232 = vsel %vm673, %v1230, %v1231
        %v1233 = vrot.slane %v1153, 5
        %v1234 = vrot.slane %v1233, 4
        %v1235 = vrot.slane %v1154, 5
        %v1236 = vsel %vm673, %v1234, %v1235
        %v1237 = vrot.slane %v1235, 4
        %v1238 = vrot.slane %v1155, 5
        %v1239 = vsel %vm673, %v1237, %v1238
        %v1240 = vrot.slane %v1156, 5
        %v1241 = vrot.slane %v1240, 4
        %v1242 = vrot.slane %v1157, 5
        %v1243 = vsel %vm673, %v1241, %v1242
        %v1244 = vrot.slane %v1242, 4
        %v1245 = vrot.slane %v1158, 5
        %v1246 = vsel %vm673, %v1244, %v1245
        %v1247 = vrot.slane %v1159, 5
        %v1248 = vrot.slane %v1247, 4
        %v1249 = vrot.slane %v1160, 5
        %v1250 = vsel %vm673, %v1248, %v1249
        %v1251 = vrot.slane %v1249, 4
        %v1252 = vrot.slane %v1161, 5
        %v1253 = vsel %vm673, %v1251, %v1252
        %v1254 = vrot.slane %v1162, 5
        %v1255 = vrot.slane %v1254, 4
        %v1256 = vrot.slane %v1163, 5
        %v1257 = vsel %vm673, %v1255, %v1256
        %v1258 = vrot.slane %v1256, 4
        %v1259 = vrot.slane %v1164, 5
        %v1260 = vsel %vm673, %v1258, %v1259
        %v1261 = vrot.slane %v1165, 5
        %v1262 = vrot.slane %v1261, 4
        %v1263 = vrot.slane %v1166, 5
        %v1264 = vsel %vm673, %v1262, %v1263
        %v1265 = vrot.slane %v1263, 4
        %v1266 = vrot.slane %v1167, 5
        %v1267 = vsel %vm673, %v1265, %v1266
        %1288 = vst [vmem:[#allocation2 + $0x14] sm:$0xf] %v1201
        %1289 = vst [vmem:[#allocation2 + $0x38] sm:$0xf] %v1204
        %1290 = vst [vmem:[#allocation2 + $0x5c] sm:$0xf] %v1208
        %1291 = vst [vmem:[#allocation2 + $0x80] sm:$0xf] %v1211
        %1292 = vst [vmem:[#allocation2 + $0xa4] sm:$0xf] %v1215
        %1293 = vst [vmem:[#allocation2 + $0xc8] sm:$0xf] %v1218
        %1294 = vst [vmem:[#allocation2 + $0xec] sm:$0xf] %v1222
        %1295 = vst [vmem:[#allocation2 + $0x110] sm:$0xf] %v1225
        %1296 = vst [vmem:[#allocation2 + $0x134] sm:$0xf] %v1229
        %1297 = vst [vmem:[#allocation2 + $0x158] sm:$0xf] %v1232
        %1298 = vst [vmem:[#allocation2 + $0x17c] sm:$0xf] %v1236
        %1299 = vst [vmem:[#allocation2 + $0x1a0] sm:$0xf] %v1239
        %1300 = vst [vmem:[#allocation2 + $0x1c4] sm:$0xf] %v1243
        %1301 = vst [vmem:[#allocation2 + $0x1e8] sm:$0xf] %v1246
        %1302 = vst [vmem:[#allocation2 + $0x20c] sm:$0xf] %v1250
        %1303 = vst [vmem:[#allocation2 + $0x230] sm:$0xf] %v1253
        %1304 = vst [vmem:[#allocation2 + $0x254] sm:$0xf] %v1257
        %1305 = vst [vmem:[#allocation2 + $0x278] sm:$0xf] %v1260
        %1306 = vst [vmem:[#allocation2 + $0x29c] sm:$0xf] %v1264
        %1307 = vst [vmem:[#allocation2 + $0x2c0] sm:$0xf] %v1267
        %s1308 = sadd.s32 %s254, 2
        %s1309 = smul.u32 %s1308, 3
        %s1310 = smul.addr %s1309, 4
        %s1311 = scalar_lea.vmem %s251, %s1310
        %v1312 = vld [vmem:[%s1311] sm:$0xf]
        %v1313 = vld [vmem:[%s1311 + $0x4] sm:$0xf]
        %v1314 = vld [vmem:[%s1311 + $0xc] sm:$0xf]
        %v1315 = vld [vmem:[%s1311 + $0x10] sm:$0xf]
        %v1316 = vld [vmem:[%s1311 + $0x18] sm:$0xf]
        %v1317 = vld [vmem:[%s1311 + $0x1c] sm:$0xf]
        %v1318 = vld [vmem:[%s1311 + $0x24] sm:$0xf]
        %v1319 = vld [vmem:[%s1311 + $0x28] sm:$0xf]
        %v1320 = vld [vmem:[%s1311 + $0x30] sm:$0xf]
        %v1321 = vld [vmem:[%s1311 + $0x34] sm:$0xf]
        %v1322 = vld [vmem:[%s1311 + $0x3c] sm:$0xf]
        %v1323 = vld [vmem:[%s1311 + $0x40] sm:$0xf]
        %v1324 = vld [vmem:[%s1311 + $0x48] sm:$0xf]
        %v1325 = vld [vmem:[%s1311 + $0x4c] sm:$0xf]
        %v1326 = vld [vmem:[%s1311 + $0x54] sm:$0xf]
        %v1327 = vld [vmem:[%s1311 + $0x58] sm:$0xf]
        %v1328 = vld [vmem:[%s1311 + $0x60] sm:$0xf]
        %v1329 = vld [vmem:[%s1311 + $0x64] sm:$0xf]
        %v1330 = vld [vmem:[%s1311 + $0x6c] sm:$0xf]
        %v1331 = vld [vmem:[%s1311 + $0x70] sm:$0xf]
        %1332 = vst [vmem:[#allocation2 + $0x18] sm:$0xf] %v1312
        %1333 = vst [vmem:[#allocation2 + $0x3c] sm:$0xf] %v1313
        %1334 = vst [vmem:[#allocation2 + $0x60] sm:$0xf] %v1314
        %1335 = vst [vmem:[#allocation2 + $0x84] sm:$0xf] %v1315
        %1336 = vst [vmem:[#allocation2 + $0xa8] sm:$0xf] %v1316
        %1337 = vst [vmem:[#allocation2 + $0xcc] sm:$0xf] %v1317
        %1338 = vst [vmem:[#allocation2 + $0xf0] sm:$0xf] %v1318
        %1339 = vst [vmem:[#allocation2 + $0x114] sm:$0xf] %v1319
        %1340 = vst [vmem:[#allocation2 + $0x138] sm:$0xf] %v1320
        %1341 = vst [vmem:[#allocation2 + $0x15c] sm:$0xf] %v1321
        %1342 = vst [vmem:[#allocation2 + $0x180] sm:$0xf] %v1322
        %1343 = vst [vmem:[#allocation2 + $0x1a4] sm:$0xf] %v1323
        %1344 = vst [vmem:[#allocation2 + $0x1c8] sm:$0xf] %v1324
        %1345 = vst [vmem:[#allocation2 + $0x1ec] sm:$0xf] %v1325
        %1346 = vst [vmem:[#allocation2 + $0x210] sm:$0xf] %v1326
        %1347 = vst [vmem:[#allocation2 + $0x234] sm:$0xf] %v1327
        %1348 = vst [vmem:[#allocation2 + $0x258] sm:$0xf] %v1328
        %1349 = vst [vmem:[#allocation2 + $0x27c] sm:$0xf] %v1329
        %1350 = vst [vmem:[#allocation2 + $0x2a0] sm:$0xf] %v1330
        %1351 = vst [vmem:[#allocation2 + $0x2c4] sm:$0xf] %v1331
        %v1352 = vld [vmem:[%s1311] sm:$0xf]
        %v1353 = vld [vmem:[%s1311 + $0x4] sm:$0xf]
        %v1354 = vld [vmem:[%s1311 + $0x8] sm:$0x1]
        %v1355 = vld [vmem:[%s1311 + $0xc] sm:$0xf]
        %v1356 = vld [vmem:[%s1311 + $0x10] sm:$0xf]
        %v1357 = vld [vmem:[%s1311 + $0x14] sm:$0x1]
        %v1358 = vld [vmem:[%s1311 + $0x18] sm:$0xf]
        %v1359 = vld [vmem:[%s1311 + $0x1c] sm:$0xf]
        %v1360 = vld [vmem:[%s1311 + $0x20] sm:$0x1]
        %v1361 = vld [vmem:[%s1311 + $0x24] sm:$0xf]
        %v1362 = vld [vmem:[%s1311 + $0x28] sm:$0xf]
        %v1363 = vld [vmem:[%s1311 + $0x2c] sm:$0x1]
        %v1364 = vld [vmem:[%s1311 + $0x30] sm:$0xf]
        %v1365 = vld [vmem:[%s1311 + $0x34] sm:$0xf]
        %v1366 = vld [vmem:[%s1311 + $0x38] sm:$0x1]
        %v1367 = vld [vmem:[%s1311 + $0x3c] sm:$0xf]
        %v1368 = vld [vmem:[%s1311 + $0x40] sm:$0xf]
        %v1369 = vld [vmem:[%s1311 + $0x44] sm:$0x1]
        %v1370 = vld [vmem:[%s1311 + $0x48] sm:$0xf]
        %v1371 = vld [vmem:[%s1311 + $0x4c] sm:$0xf]
        %v1372 = vld [vmem:[%s1311 + $0x50] sm:$0x1]
        %v1373 = vld [vmem:[%s1311 + $0x54] sm:$0xf]
        %v1374 = vld [vmem:[%s1311 + $0x58] sm:$0xf]
        %v1375 = vld [vmem:[%s1311 + $0x5c] sm:$0x1]
        %v1376 = vld [vmem:[%s1311 + $0x60] sm:$0xf]
        %v1377 = vld [vmem:[%s1311 + $0x64] sm:$0xf]
        %v1378 = vld [vmem:[%s1311 + $0x68] sm:$0x1]
        %v1379 = vld [vmem:[%s1311 + $0x6c] sm:$0xf]
        %v1380 = vld [vmem:[%s1311 + $0x70] sm:$0xf]
        %v1381 = vld [vmem:[%s1311 + $0x74] sm:$0x1]
        %v1383 = vshrl.u32 %v1352, 16
        %v1385 = vrot.slane %v1383, 4
        %v1386 = vshll.u32 %v1352, 16
        %v1388 = vrot.slane %v1386, 5
        %v1389 = vor.u32 %v1385, %v1388
        %v1390 = vrot.slane %v1389, 4
        %v1392 = vshll.u32 %v1353, 16
        %v1394 = vrot.slane %v1392, 5
        %v1395 = vsel %vm330, %v1390, %v1394
        %v1396 = vshrl.u32 %v1353, 16
        %v1398 = vrot.slane %v1396, 4
        %v1399 = vor.u32 %v1398, %v1394
        %v1400 = vrot.slane %v1399, 4
        %v1402 = vshll.u32 %v1354, 16
        %v1404 = vrot.slane %v1402, 5
        %v1405 = vsel %vm330, %v1400, %v1404
        %v1407 = vshrl.u32 %v1355, 16
        %v1409 = vrot.slane %v1407, 4
        %v1410 = vshll.u32 %v1355, 16
        %v1412 = vrot.slane %v1410, 5
        %v1413 = vor.u32 %v1409, %v1412
        %v1414 = vrot.slane %v1413, 4
        %v1416 = vshll.u32 %v1356, 16
        %v1418 = vrot.slane %v1416, 5
        %v1419 = vsel %vm330, %v1414, %v1418
        %v1420 = vshrl.u32 %v1356, 16
        %v1422 = vrot.slane %v1420, 4
        %v1423 = vor.u32 %v1422, %v1418
        %v1424 = vrot.slane %v1423, 4
        %v1426 = vshll.u32 %v1357, 16
        %v1428 = vrot.slane %v1426, 5
        %v1429 = vsel %vm330, %v1424, %v1428
        %v1431 = vshrl.u32 %v1358, 16
        %v1433 = vrot.slane %v1431, 4
        %v1434 = vshll.u32 %v1358, 16
        %v1436 = vrot.slane %v1434, 5
        %v1437 = vor.u32 %v1433, %v1436
        %v1438 = vrot.slane %v1437, 4
        %v1440 = vshll.u32 %v1359, 16
        %v1442 = vrot.slane %v1440, 5
        %v1443 = vsel %vm330, %v1438, %v1442
        %v1444 = vshrl.u32 %v1359, 16
        %v1446 = vrot.slane %v1444, 4
        %v1447 = vor.u32 %v1446, %v1442
        %v1448 = vrot.slane %v1447, 4
        %v1450 = vshll.u32 %v1360, 16
        %v1452 = vrot.slane %v1450, 5
        %v1453 = vsel %vm330, %v1448, %v1452
        %v1455 = vshrl.u32 %v1361, 16
        %v1457 = vrot.slane %v1455, 4
        %v1458 = vshll.u32 %v1361, 16
        %v1460 = vrot.slane %v1458, 5
        %v1461 = vor.u32 %v1457, %v1460
        %v1462 = vrot.slane %v1461, 4
        %v1464 = vshll.u32 %v1362, 16
        %v1466 = vrot.slane %v1464, 5
        %v1467 = vsel %vm330, %v1462, %v1466
        %v1468 = vshrl.u32 %v1362, 16
        %v1470 = vrot.slane %v1468, 4
        %v1471 = vor.u32 %v1470, %v1466
        %v1472 = vrot.slane %v1471, 4
        %v1474 = vshll.u32 %v1363, 16
        %v1476 = vrot.slane %v1474, 5
        %v1477 = vsel %vm330, %v1472, %v1476
        %v1479 = vshrl.u32 %v1364, 16
        %v1481 = vrot.slane %v1479, 4
        %v1482 = vshll.u32 %v1364, 16
        %v1484 = vrot.slane %v1482, 5
        %v1485 = vor.u32 %v1481, %v1484
        %v1486 = vrot.slane %v1485, 4
        %v1488 = vshll.u32 %v1365, 16
        %v1490 = vrot.slane %v1488, 5
        %v1491 = vsel %vm330, %v1486, %v1490
        %v1492 = vshrl.u32 %v1365, 16
        %v1494 = vrot.slane %v1492, 4
        %v1495 = vor.u32 %v1494, %v1490
        %v1496 = vrot.slane %v1495, 4
        %v1498 = vshll.u32 %v1366, 16
        %v1500 = vrot.slane %v1498, 5
        %v1501 = vsel %vm330, %v1496, %v1500
        %v1503 = vshrl.u32 %v1367, 16
        %v1505 = vrot.slane %v1503, 4
        %v1506 = vshll.u32 %v1367, 16
        %v1508 = vrot.slane %v1506, 5
        %v1509 = vor.u32 %v1505, %v1508
        %v1510 = vrot.slane %v1509, 4
        %v1512 = vshll.u32 %v1368, 16
        %v1514 = vrot.slane %v1512, 5
        %v1515 = vsel %vm330, %v1510, %v1514
        %v1516 = vshrl.u32 %v1368, 16
        %v1518 = vrot.slane %v1516, 4
        %v1519 = vor.u32 %v1518, %v1514
        %v1520 = vrot.slane %v1519, 4
        %v1522 = vshll.u32 %v1369, 16
        %v1524 = vrot.slane %v1522, 5
        %v1525 = vsel %vm330, %v1520, %v1524
        %v1527 = vshrl.u32 %v1370, 16
        %v1529 = vrot.slane %v1527, 4
        %v1530 = vshll.u32 %v1370, 16
        %v1532 = vrot.slane %v1530, 5
        %v1533 = vor.u32 %v1529, %v1532
        %v1534 = vrot.slane %v1533, 4
        %v1536 = vshll.u32 %v1371, 16
        %v1538 = vrot.slane %v1536, 5
        %v1539 = vsel %vm330, %v1534, %v1538
        %v1540 = vshrl.u32 %v1371, 16
        %v1542 = vrot.slane %v1540, 4
        %v1543 = vor.u32 %v1542, %v1538
        %v1544 = vrot.slane %v1543, 4
        %v1546 = vshll.u32 %v1372, 16
        %v1548 = vrot.slane %v1546, 5
        %v1549 = vsel %vm330, %v1544, %v1548
        %v1551 = vshrl.u32 %v1373, 16
        %v1553 = vrot.slane %v1551, 4
        %v1554 = vshll.u32 %v1373, 16
        %v1556 = vrot.slane %v1554, 5
        %v1557 = vor.u32 %v1553, %v1556
        %v1558 = vrot.slane %v1557, 4
        %v1560 = vshll.u32 %v1374, 16
        %v1562 = vrot.slane %v1560, 5
        %v1563 = vsel %vm330, %v1558, %v1562
        %v1564 = vshrl.u32 %v1374, 16
        %v1566 = vrot.slane %v1564, 4
        %v1567 = vor.u32 %v1566, %v1562
        %v1568 = vrot.slane %v1567, 4
        %v1570 = vshll.u32 %v1375, 16
        %v1572 = vrot.slane %v1570, 5
        %v1573 = vsel %vm330, %v1568, %v1572
        %v1575 = vshrl.u32 %v1376, 16
        %v1577 = vrot.slane %v1575, 4
        %v1578 = vshll.u32 %v1376, 16
        %v1580 = vrot.slane %v1578, 5
        %v1581 = vor.u32 %v1577, %v1580
        %v1582 = vrot.slane %v1581, 4
        %v1584 = vshll.u32 %v1377, 16
        %v1586 = vrot.slane %v1584, 5
        %v1587 = vsel %vm330, %v1582, %v1586
        %v1588 = vshrl.u32 %v1377, 16
        %v1590 = vrot.slane %v1588, 4
        %v1591 = vor.u32 %v1590, %v1586
        %v1592 = vrot.slane %v1591, 4
        %v1594 = vshll.u32 %v1378, 16
        %v1596 = vrot.slane %v1594, 5
        %v1597 = vsel %vm330, %v1592, %v1596
        %v1599 = vshrl.u32 %v1379, 16
        %v1601 = vrot.slane %v1599, 4
        %v1602 = vshll.u32 %v1379, 16
        %v1604 = vrot.slane %v1602, 5
        %v1605 = vor.u32 %v1601, %v1604
        %v1606 = vrot.slane %v1605, 4
        %v1608 = vshll.u32 %v1380, 16
        %v1610 = vrot.slane %v1608, 5
        %v1611 = vsel %vm330, %v1606, %v1610
        %v1612 = vshrl.u32 %v1380, 16
        %v1614 = vrot.slane %v1612, 4
        %v1615 = vor.u32 %v1614, %v1610
        %v1616 = vrot.slane %v1615, 4
        %v1618 = vshll.u32 %v1381, 16
        %v1620 = vrot.slane %v1618, 5
        %v1621 = vsel %vm330, %v1616, %v1620
        %1642 = vst [vmem:[#allocation2 + $0x1c] sm:$0xf] %v1395
        %1643 = vst [vmem:[#allocation2 + $0x40] sm:$0xf] %v1405
        %1644 = vst [vmem:[#allocation2 + $0x64] sm:$0xf] %v1419
        %1645 = vst [vmem:[#allocation2 + $0x88] sm:$0xf] %v1429
        %1646 = vst [vmem:[#allocation2 + $0xac] sm:$0xf] %v1443
        %1647 = vst [vmem:[#allocation2 + $0xd0] sm:$0xf] %v1453
        %1648 = vst [vmem:[#allocation2 + $0xf4] sm:$0xf] %v1467
        %1649 = vst [vmem:[#allocation2 + $0x118] sm:$0xf] %v1477
        %1650 = vst [vmem:[#allocation2 + $0x13c] sm:$0xf] %v1491
        %1651 = vst [vmem:[#allocation2 + $0x160] sm:$0xf] %v1501
        %1652 = vst [vmem:[#allocation2 + $0x184] sm:$0xf] %v1515
        %1653 = vst [vmem:[#allocation2 + $0x1a8] sm:$0xf] %v1525
        %1654 = vst [vmem:[#allocation2 + $0x1cc] sm:$0xf] %v1539
        %1655 = vst [vmem:[#allocation2 + $0x1f0] sm:$0xf] %v1549
        %1656 = vst [vmem:[#allocation2 + $0x214] sm:$0xf] %v1563
        %1657 = vst [vmem:[#allocation2 + $0x238] sm:$0xf] %v1573
        %1658 = vst [vmem:[#allocation2 + $0x25c] sm:$0xf] %v1587
        %1659 = vst [vmem:[#allocation2 + $0x280] sm:$0xf] %v1597
        %1660 = vst [vmem:[#allocation2 + $0x2a4] sm:$0xf] %v1611
        %1661 = vst [vmem:[#allocation2 + $0x2c8] sm:$0xf] %v1621
        %v1662 = vld [vmem:[%s1311] sm:$0xe]
        %v1663 = vld [vmem:[%s1311 + $0x4] sm:$0xf]
        %v1664 = vld [vmem:[%s1311 + $0x8] sm:$0x1]
        %v1665 = vld [vmem:[%s1311 + $0xc] sm:$0xe]
        %v1666 = vld [vmem:[%s1311 + $0x10] sm:$0xf]
        %v1667 = vld [vmem:[%s1311 + $0x14] sm:$0x1]
        %v1668 = vld [vmem:[%s1311 + $0x18] sm:$0xe]
        %v1669 = vld [vmem:[%s1311 + $0x1c] sm:$0xf]
        %v1670 = vld [vmem:[%s1311 + $0x20] sm:$0x1]
        %v1671 = vld [vmem:[%s1311 + $0x24] sm:$0xe]
        %v1672 = vld [vmem:[%s1311 + $0x28] sm:$0xf]
        %v1673 = vld [vmem:[%s1311 + $0x2c] sm:$0x1]
        %v1674 = vld [vmem:[%s1311 + $0x30] sm:$0xe]
        %v1675 = vld [vmem:[%s1311 + $0x34] sm:$0xf]
        %v1676 = vld [vmem:[%s1311 + $0x38] sm:$0x1]
        %v1677 = vld [vmem:[%s1311 + $0x3c] sm:$0xe]
        %v1678 = vld [vmem:[%s1311 + $0x40] sm:$0xf]
        %v1679 = vld [vmem:[%s1311 + $0x44] sm:$0x1]
        %v1680 = vld [vmem:[%s1311 + $0x48] sm:$0xe]
        %v1681 = vld [vmem:[%s1311 + $0x4c] sm:$0xf]
        %v1682 = vld [vmem:[%s1311 + $0x50] sm:$0x1]
        %v1683 = vld [vmem:[%s1311 + $0x54] sm:$0xe]
        %v1684 = vld [vmem:[%s1311 + $0x58] sm:$0xf]
        %v1685 = vld [vmem:[%s1311 + $0x5c] sm:$0x1]
        %v1686 = vld [vmem:[%s1311 + $0x60] sm:$0xe]
        %v1687 = vld [vmem:[%s1311 + $0x64] sm:$0xf]
        %v1688 = vld [vmem:[%s1311 + $0x68] sm:$0x1]
        %v1689 = vld [vmem:[%s1311 + $0x6c] sm:$0xe]
        %v1690 = vld [vmem:[%s1311 + $0x70] sm:$0xf]
        %v1691 = vld [vmem:[%s1311 + $0x74] sm:$0x1]
        %v1722 = vrot.slane %v1662, 5
        %v1723 = vrot.slane %v1722, 4
        %v1724 = vrot.slane %v1663, 5
        %v1725 = vsel %vm673, %v1723, %v1724
        %v1726 = vrot.slane %v1724, 4
        %v1727 = vrot.slane %v1664, 5
        %v1728 = vsel %vm673, %v1726, %v1727
        %v1729 = vrot.slane %v1665, 5
        %v1730 = vrot.slane %v1729, 4
        %v1731 = vrot.slane %v1666, 5
        %v1732 = vsel %vm673, %v1730, %v1731
        %v1733 = vrot.slane %v1731, 4
        %v1734 = vrot.slane %v1667, 5
        %v1735 = vsel %vm673, %v1733, %v1734
        %v1736 = vrot.slane %v1668, 5
        %v1737 = vrot.slane %v1736, 4
        %v1738 = vrot.slane %v1669, 5
        %v1739 = vsel %vm673, %v1737, %v1738
        %v1740 = vrot.slane %v1738, 4
        %v1741 = vrot.slane %v1670, 5
        %v1742 = vsel %vm673, %v1740, %v1741
        %v1743 = vrot.slane %v1671, 5
        %v1744 = vrot.slane %v1743, 4
        %v1745 = vrot.slane %v1672, 5
        %v1746 = vsel %vm673, %v1744, %v1745
        %v1747 = vrot.slane %v1745, 4
        %v1748 = vrot.slane %v1673, 5
        %v1749 = vsel %vm673, %v1747, %v1748
        %v1750 = vrot.slane %v1674, 5
        %v1751 = vrot.slane %v1750, 4
        %v1752 = vrot.slane %v1675, 5
        %v1753 = vsel %vm673, %v1751, %v1752
        %v1754 = vrot.slane %v1752, 4
        %v1755 = vrot.slane %v1676, 5
        %v1756 = vsel %vm673, %v1754, %v1755
        %v1757 = vrot.slane %v1677, 5
        %v1758 = vrot.slane %v1757, 4
        %v1759 = vrot.slane %v1678, 5
        %v1760 = vsel %vm673, %v1758, %v1759
        %v1761 = vrot.slane %v1759, 4
        %v1762 = vrot.slane %v1679, 5
        %v1763 = vsel %vm673, %v1761, %v1762
        %v1764 = vrot.slane %v1680, 5
        %v1765 = vrot.slane %v1764, 4
        %v1766 = vrot.slane %v1681, 5
        %v1767 = vsel %vm673, %v1765, %v1766
        %v1768 = vrot.slane %v1766, 4
        %v1769 = vrot.slane %v1682, 5
        %v1770 = vsel %vm673, %v1768, %v1769
        %v1771 = vrot.slane %v1683, 5
        %v1772 = vrot.slane %v1771, 4
        %v1773 = vrot.slane %v1684, 5
        %v1774 = vsel %vm673, %v1772, %v1773
        %v1775 = vrot.slane %v1773, 4
        %v1776 = vrot.slane %v1685, 5
        %v1777 = vsel %vm673, %v1775, %v1776
        %v1778 = vrot.slane %v1686, 5
        %v1779 = vrot.slane %v1778, 4
        %v1780 = vrot.slane %v1687, 5
        %v1781 = vsel %vm673, %v1779, %v1780
        %v1782 = vrot.slane %v1780, 4
        %v1783 = vrot.slane %v1688, 5
        %v1784 = vsel %vm673, %v1782, %v1783
        %v1785 = vrot.slane %v1689, 5
        %v1786 = vrot.slane %v1785, 4
        %v1787 = vrot.slane %v1690, 5
        %v1788 = vsel %vm673, %v1786, %v1787
        %v1789 = vrot.slane %v1787, 4
        %v1790 = vrot.slane %v1691, 5
        %v1791 = vsel %vm673, %v1789, %v1790
        %1812 = vst [vmem:[#allocation2 + $0x20] sm:$0xf] %v1725
        %1813 = vst [vmem:[#allocation2 + $0x44] sm:$0xf] %v1728
        %1814 = vst [vmem:[#allocation2 + $0x68] sm:$0xf] %v1732
        %1815 = vst [vmem:[#allocation2 + $0x8c] sm:$0xf] %v1735
        %1816 = vst [vmem:[#allocation2 + $0xb0] sm:$0xf] %v1739
        %1817 = vst [vmem:[#allocation2 + $0xd4] sm:$0xf] %v1742
        %1818 = vst [vmem:[#allocation2 + $0xf8] sm:$0xf] %v1746
        %1819 = vst [vmem:[#allocation2 + $0x11c] sm:$0xf] %v1749
        %1820 = vst [vmem:[#allocation2 + $0x140] sm:$0xf] %v1753
        %1821 = vst [vmem:[#allocation2 + $0x164] sm:$0xf] %v1756
        %1822 = vst [vmem:[#allocation2 + $0x188] sm:$0xf] %v1760
        %1823 = vst [vmem:[#allocation2 + $0x1ac] sm:$0xf] %v1763
        %1824 = vst [vmem:[#allocation2 + $0x1d0] sm:$0xf] %v1767
        %1825 = vst [vmem:[#allocation2 + $0x1f4] sm:$0xf] %v1770
        %1826 = vst [vmem:[#allocation2 + $0x218] sm:$0xf] %v1774
        %1827 = vst [vmem:[#allocation2 + $0x23c] sm:$0xf] %v1777
        %1828 = vst [vmem:[#allocation2 + $0x260] sm:$0xf] %v1781
        %1829 = vst [vmem:[#allocation2 + $0x284] sm:$0xf] %v1784
        %1830 = vst [vmem:[#allocation2 + $0x2a8] sm:$0xf] %v1788
        %1831 = vst [vmem:[#allocation2 + $0x2cc] sm:$0xf] %v1791
        %v1832 = vld [vmem:[#allocation2] sm:$0xff]
        %v1833 = vld [vmem:[#allocation2 + $0x8] sm:$0xff]
        %v1834 = vld [vmem:[#allocation2 + $0x10] sm:$0xff]
        %v1835 = vld [vmem:[#allocation2 + $0x18] sm:$0xff]
        %v1836 = vld [vmem:[#allocation2 + $0x20] sm:$0xf]
        %v1837 = vld [vmem:[#allocation2 + $0x24] sm:$0xff]
        %v1838 = vld [vmem:[#allocation2 + $0x2c] sm:$0xff]
        %v1839 = vld [vmem:[#allocation2 + $0x34] sm:$0xff]
        %v1840 = vld [vmem:[#allocation2 + $0x3c] sm:$0xff]
        %v1841 = vld [vmem:[#allocation2 + $0x44] sm:$0xf]
        %v1842 = vld [vmem:[#allocation2 + $0x48] sm:$0xff]
        %v1843 = vld [vmem:[#allocation2 + $0x50] sm:$0xff]
        %v1844 = vld [vmem:[#allocation2 + $0x58] sm:$0xff]
        %v1845 = vld [vmem:[#allocation2 + $0x60] sm:$0xff]
        %v1846 = vld [vmem:[#allocation2 + $0x68] sm:$0xf]
        %v1847 = vld [vmem:[#allocation2 + $0x6c] sm:$0xff]
        %v1848 = vld [vmem:[#allocation2 + $0x74] sm:$0xff]
        %v1849 = vld [vmem:[#allocation2 + $0x7c] sm:$0xff]
        %v1850 = vld [vmem:[#allocation2 + $0x84] sm:$0xff]
        %v1851 = vld [vmem:[#allocation2 + $0x8c] sm:$0xf]
        %v1852 = vld [vmem:[#allocation2 + $0x90] sm:$0xff]
        %v1853 = vld [vmem:[#allocation2 + $0x98] sm:$0xff]
        %v1854 = vld [vmem:[#allocation2 + $0xa0] sm:$0xff]
        %v1855 = vld [vmem:[#allocation2 + $0xa8] sm:$0xff]
        %v1856 = vld [vmem:[#allocation2 + $0xb0] sm:$0xf]
        %v1857 = vld [vmem:[#allocation2 + $0xb4] sm:$0xff]
        %v1858 = vld [vmem:[#allocation2 + $0xbc] sm:$0xff]
        %v1859 = vld [vmem:[#allocation2 + $0xc4] sm:$0xff]
        %v1860 = vld [vmem:[#allocation2 + $0xcc] sm:$0xff]
        %v1861 = vld [vmem:[#allocation2 + $0xd4] sm:$0xf]
        %v1862 = vld [vmem:[#allocation2 + $0xd8] sm:$0xff]
        %v1863 = vld [vmem:[#allocation2 + $0xe0] sm:$0xff]
        %v1864 = vld [vmem:[#allocation2 + $0xe8] sm:$0xff]
        %v1865 = vld [vmem:[#allocation2 + $0xf0] sm:$0xff]
        %v1866 = vld [vmem:[#allocation2 + $0xf8] sm:$0xf]
        %v1867 = vld [vmem:[#allocation2 + $0xfc] sm:$0xff]
        %v1868 = vld [vmem:[#allocation2 + $0x104] sm:$0xff]
        %v1869 = vld [vmem:[#allocation2 + $0x10c] sm:$0xff]
        %v1870 = vld [vmem:[#allocation2 + $0x114] sm:$0xff]
        %v1871 = vld [vmem:[#allocation2 + $0x11c] sm:$0xf]
        %v1872 = vld [vmem:[#allocation2 + $0x120] sm:$0xff]
        %v1873 = vld [vmem:[#allocation2 + $0x128] sm:$0xff]
        %v1874 = vld [vmem:[#allocation2 + $0x130] sm:$0xff]
        %v1875 = vld [vmem:[#allocation2 + $0x138] sm:$0xff]
        %v1876 = vld [vmem:[#allocation2 + $0x140] sm:$0xf]
        %v1877 = vld [vmem:[#allocation2 + $0x144] sm:$0xff]
        %v1878 = vld [vmem:[#allocation2 + $0x14c] sm:$0xff]
        %v1879 = vld [vmem:[#allocation2 + $0x154] sm:$0xff]
        %v1880 = vld [vmem:[#allocation2 + $0x15c] sm:$0xff]
        %v1881 = vld [vmem:[#allocation2 + $0x164] sm:$0xf]
        %v1882 = vld [vmem:[#allocation2 + $0x168] sm:$0xff]
        %v1883 = vld [vmem:[#allocation2 + $0x170] sm:$0xff]
        %v1884 = vld [vmem:[#allocation2 + $0x178] sm:$0xff]
        %v1885 = vld [vmem:[#allocation2 + $0x180] sm:$0xff]
        %v1886 = vld [vmem:[#allocation2 + $0x188] sm:$0xf]
        %v1887 = vld [vmem:[#allocation2 + $0x18c] sm:$0xff]
        %v1888 = vld [vmem:[#allocation2 + $0x194] sm:$0xff]
        %v1889 = vld [vmem:[#allocation2 + $0x19c] sm:$0xff]
        %v1890 = vld [vmem:[#allocation2 + $0x1a4] sm:$0xff]
        %v1891 = vld [vmem:[#allocation2 + $0x1ac] sm:$0xf]
        %v1892 = vld [vmem:[#allocation2 + $0x1b0] sm:$0xff]
        %v1893 = vld [vmem:[#allocation2 + $0x1b8] sm:$0xff]
        %v1894 = vld [vmem:[#allocation2 + $0x1c0] sm:$0xff]
        %v1895 = vld [vmem:[#allocation2 + $0x1c8] sm:$0xff]
        %v1896 = vld [vmem:[#allocation2 + $0x1d0] sm:$0xf]
        %v1897 = vld [vmem:[#allocation2 + $0x1d4] sm:$0xff]
        %v1898 = vld [vmem:[#allocation2 + $0x1dc] sm:$0xff]
        %v1899 = vld [vmem:[#allocation2 + $0x1e4] sm:$0xff]
        %v1900 = vld [vmem:[#allocation2 + $0x1ec] sm:$0xff]
        %v1901 = vld [vmem:[#allocation2 + $0x1f4] sm:$0xf]
        %v1902 = vld [vmem:[#allocation2 + $0x1f8] sm:$0xff]
        %v1903 = vld [vmem:[#allocation2 + $0x200] sm:$0xff]
        %v1904 = vld [vmem:[#allocation2 + $0x208] sm:$0xff]
        %v1905 = vld [vmem:[#allocation2 + $0x210] sm:$0xff]
        %v1906 = vld [vmem:[#allocation2 + $0x218] sm:$0xf]
        %v1907 = vld [vmem:[#allocation2 + $0x21c] sm:$0xff]
        %v1908 = vld [vmem:[#allocation2 + $0x224] sm:$0xff]
        %v1909 = vld [vmem:[#allocation2 + $0x22c] sm:$0xff]
        %v1910 = vld [vmem:[#allocation2 + $0x234] sm:$0xff]
        %v1911 = vld [vmem:[#allocation2 + $0x23c] sm:$0xf]
        %v1912 = vld [vmem:[#allocation2 + $0x240] sm:$0xff]
        %v1913 = vld [vmem:[#allocation2 + $0x248] sm:$0xff]
        %v1914 = vld [vmem:[#allocation2 + $0x250] sm:$0xff]
        %v1915 = vld [vmem:[#allocation2 + $0x258] sm:$0xff]
        %v1916 = vld [vmem:[#allocation2 + $0x260] sm:$0xf]
        %v1917 = vld [vmem:[#allocation2 + $0x264] sm:$0xff]
        %v1918 = vld [vmem:[#allocation2 + $0x26c] sm:$0xff]
        %v1919 = vld [vmem:[#allocation2 + $0x274] sm:$0xff]
        %v1920 = vld [vmem:[#allocation2 + $0x27c] sm:$0xff]
        %v1921 = vld [vmem:[#allocation2 + $0x284] sm:$0xf]
        %v1922 = vld [vmem:[#allocation2 + $0x288] sm:$0xff]
        %v1923 = vld [vmem:[#allocation2 + $0x290] sm:$0xff]
        %v1924 = vld [vmem:[#allocation2 + $0x298] sm:$0xff]
        %v1925 = vld [vmem:[#allocation2 + $0x2a0] sm:$0xff]
        %v1926 = vld [vmem:[#allocation2 + $0x2a8] sm:$0xf]
        %v1927 = vld [vmem:[#allocation2 + $0x2ac] sm:$0xff]
        %v1928 = vld [vmem:[#allocation2 + $0x2b4] sm:$0xff]
        %v1929 = vld [vmem:[#allocation2 + $0x2bc] sm:$0xff]
        %v1930 = vld [vmem:[#allocation2 + $0x2c4] sm:$0xff]
        %v1931 = vld [vmem:[#allocation2 + $0x2cc] sm:$0xf]
        %v1932 = vld [vmem:[%s1] sm:$0xf]
        %v1933 = vld [vmem:[%s1 + $0x4] sm:$0xf]
        %v1934 = vld [vmem:[%s1 + $0x8] sm:$0xf]
        %v1935 = vld [vmem:[%s1 + $0xc] sm:$0xf]
        %v1936 = vld [vmem:[%s1 + $0x10] sm:$0xf]
        %v1937 = vld [vmem:[%s1 + $0x14] sm:$0xf]
        %v1938 = vld [vmem:[%s1 + $0x18] sm:$0xf]
        %v1939 = vld [vmem:[%s1 + $0x1c] sm:$0xf]
        %v1940 = vld [vmem:[%s1 + $0x20] sm:$0xf]
        %v1941 = vld [vmem:[%s1 + $0x24] sm:$0xf]
        %v1942 = vld [vmem:[%s1 + $0x28] sm:$0xf]
        %v1943 = vld [vmem:[%s1 + $0x2c] sm:$0xf]
        %v1944 = vld [vmem:[%s1 + $0x30] sm:$0xf]
        %v1945 = vld [vmem:[%s1 + $0x34] sm:$0xf]
        %v1946 = vld [vmem:[%s1 + $0x38] sm:$0xf]
        %v1947 = vld [vmem:[%s1 + $0x3c] sm:$0xf]
        %v1948 = vld [vmem:[%s1 + $0x40] sm:$0xf]
        %v1949 = vld [vmem:[%s1 + $0x44] sm:$0xf]
        %v1950 = vld [vmem:[%s1 + $0x48] sm:$0xf]
        %v1951 = vld [vmem:[%s1 + $0x4c] sm:$0xf]
        %v1952 = vld [vmem:[%s1 + $0x50] sm:$0xf]
        %v1953 = vld [vmem:[%s1 + $0x54] sm:$0xf]
        %v1954 = vld [vmem:[%s1 + $0x58] sm:$0xf]
        %v1955 = vld [vmem:[%s1 + $0x5c] sm:$0xf]
        %v1956 = vld [vmem:[%s1 + $0x60] sm:$0xf]
        %v1957 = vld [vmem:[%s1 + $0x64] sm:$0xf]
        %v1958 = vld [vmem:[%s1 + $0x68] sm:$0xf]
        %v1959 = vld [vmem:[%s1 + $0x6c] sm:$0xf]
        %v1960 = vld [vmem:[%s1 + $0x70] sm:$0xf]
        %v1961 = vld [vmem:[%s1 + $0x74] sm:$0xf]
        %v1962 = vld [vmem:[%s1 + $0x78] sm:$0xf]
        %v1963 = vld [vmem:[%s1 + $0x7c] sm:$0xf]
        %v1964 = vld [vmem:[%s1 + $0x80] sm:$0xf]
        %v1965 = vld [vmem:[%s1 + $0x84] sm:$0xf]
        %v1966 = vld [vmem:[%s1 + $0x88] sm:$0xf]
        %v1967 = vld [vmem:[%s1 + $0x8c] sm:$0xf]
        %v1968 = vld [vmem:[%s1 + $0x90] sm:$0xf]
        %v1969 = vld [vmem:[%s1 + $0x94] sm:$0xf]
        %v1970 = vld [vmem:[%s1 + $0x98] sm:$0xf]
        %v1971 = vld [vmem:[%s1 + $0x9c] sm:$0xf]
        %v1972 = vld [vmem:[%s1 + $0xa0] sm:$0xf]
        %v1973 = vld [vmem:[%s1 + $0xa4] sm:$0xf]
        %v1974 = vld [vmem:[%s1 + $0xa8] sm:$0xf]
        %v1975 = vld [vmem:[%s1 + $0xac] sm:$0xf]
        %v1976 = vld [vmem:[%s1 + $0xb0] sm:$0xf]
        %v1977 = vld [vmem:[%s1 + $0xb4] sm:$0xf]
        %v1978 = vld [vmem:[%s1 + $0xb8] sm:$0xf]
        %v1979 = vld [vmem:[%s1 + $0xbc] sm:$0xf]
        %v1980 = vld [vmem:[%s1 + $0xc0] sm:$0xf]
        %v1981 = vld [vmem:[%s1 + $0xc4] sm:$0xf]
        %v1982 = vld [vmem:[%s1 + $0xc8] sm:$0xf]
        %v1983 = vld [vmem:[%s1 + $0xcc] sm:$0xf]
        %v1984 = vld [vmem:[%s1 + $0xd0] sm:$0xf]
        %v1985 = vld [vmem:[%s1 + $0xd4] sm:$0xf]
        %v1986 = vld [vmem:[%s1 + $0xd8] sm:$0xf]
        %v1987 = vld [vmem:[%s1 + $0xdc] sm:$0xf]
        %v1988 = vld [vmem:[%s1 + $0xe0] sm:$0xf]
        %v1989 = vld [vmem:[%s1 + $0xe4] sm:$0xf]
        %v1990 = vld [vmem:[%s1 + $0xe8] sm:$0xf]
        %v1991 = vld [vmem:[%s1 + $0xec] sm:$0xf]
        %v1992 = vld [vmem:[%s1 + $0xf0] sm:$0xf]
        %v1993 = vld [vmem:[%s1 + $0xf4] sm:$0xf]
        %v1994 = vld [vmem:[%s1 + $0xf8] sm:$0xf]
        %v1995 = vld [vmem:[%s1 + $0xfc] sm:$0xf]
        %v1996 = vld [vmem:[%s1 + $0x100] sm:$0xf]
        %v1997 = vld [vmem:[%s1 + $0x104] sm:$0xf]
        %v1998 = vld [vmem:[%s1 + $0x108] sm:$0xf]
        %v1999 = vld [vmem:[%s1 + $0x10c] sm:$0xf]
        %v2000 = vld [vmem:[%s1 + $0x110] sm:$0xf]
        %v2001 = vld [vmem:[%s1 + $0x114] sm:$0xf]
        %v2002 = vld [vmem:[%s1 + $0x118] sm:$0xf]
        %v2003 = vld [vmem:[%s1 + $0x11c] sm:$0xf]
        %v2004 = vld [vmem:[%s1 + $0x120] sm:$0xf]
        %v2005 = vld [vmem:[%s1 + $0x124] sm:$0xf]
        %v2006 = vld [vmem:[%s1 + $0x128] sm:$0xf]
        %v2007 = vld [vmem:[%s1 + $0x12c] sm:$0xf]
        %v2008 = vld [vmem:[%s1 + $0x130] sm:$0xf]
        %v2009 = vld [vmem:[%s1 + $0x134] sm:$0xf]
        %v2010 = vld [vmem:[%s1 + $0x138] sm:$0xf]
        %v2011 = vld [vmem:[%s1 + $0x13c] sm:$0xf]
        %v2012 = vld [vmem:[%s1 + $0x140] sm:$0xf]
        %v2013 = vld [vmem:[%s1 + $0x144] sm:$0xf]
        %v2014 = vld [vmem:[%s1 + $0x148] sm:$0xf]
        %v2015 = vld [vmem:[%s1 + $0x14c] sm:$0xf]
        %v2016 = vld [vmem:[%s1 + $0x150] sm:$0xf]
        %v2017 = vld [vmem:[%s1 + $0x154] sm:$0xf]
        %v2018 = vld [vmem:[%s1 + $0x158] sm:$0xf]
        %v2019 = vld [vmem:[%s1 + $0x15c] sm:$0xf]
        %v2020 = vld [vmem:[%s1 + $0x160] sm:$0xf]
        %v2021 = vld [vmem:[%s1 + $0x164] sm:$0xf]
        %v2022 = vld [vmem:[%s1 + $0x168] sm:$0xf]
        %v2023 = vld [vmem:[%s1 + $0x16c] sm:$0xf]
        %v2024 = vld [vmem:[%s1 + $0x170] sm:$0xf]
        %v2025 = vld [vmem:[%s1 + $0x174] sm:$0xf]
        %v2026 = vld [vmem:[%s1 + $0x178] sm:$0xf]
        %v2027 = vld [vmem:[%s1 + $0x17c] sm:$0xf]
        %v2028 = vld [vmem:[%s1 + $0x180] sm:$0xf]
        %v2029 = vld [vmem:[%s1 + $0x184] sm:$0xf]
        %v2030 = vld [vmem:[%s1 + $0x188] sm:$0xf]
        %v2031 = vld [vmem:[%s1 + $0x18c] sm:$0xf]
        %v2032 = vld [vmem:[%s1 + $0x190] sm:$0xf]
        %v2033 = vld [vmem:[%s1 + $0x194] sm:$0xf]
        %v2034 = vld [vmem:[%s1 + $0x198] sm:$0xf]
        %v2035 = vld [vmem:[%s1 + $0x19c] sm:$0xf]
        %v2036 = vld [vmem:[%s1 + $0x1a0] sm:$0xf]
        %v2037 = vld [vmem:[%s1 + $0x1a4] sm:$0xf]
        %v2038 = vld [vmem:[%s1 + $0x1a8] sm:$0xf]
        %v2039 = vld [vmem:[%s1 + $0x1ac] sm:$0xf]
        %v2040 = vld [vmem:[%s1 + $0x1b0] sm:$0xf]
        %v2041 = vld [vmem:[%s1 + $0x1b4] sm:$0xf]
        %v2042 = vld [vmem:[%s1 + $0x1b8] sm:$0xf]
        %v2043 = vld [vmem:[%s1 + $0x1bc] sm:$0xf]
        %v2044 = vld [vmem:[%s1 + $0x1c0] sm:$0xf]
        %v2045 = vld [vmem:[%s1 + $0x1c4] sm:$0xf]
        %v2046 = vld [vmem:[%s1 + $0x1c8] sm:$0xf]
        %v2047 = vld [vmem:[%s1 + $0x1cc] sm:$0xf]
        %v2048 = vld [vmem:[%s1 + $0x1d0] sm:$0xf]
        %v2049 = vld [vmem:[%s1 + $0x1d4] sm:$0xf]
        %v2050 = vld [vmem:[%s1 + $0x1d8] sm:$0xf]
        %v2051 = vld [vmem:[%s1 + $0x1dc] sm:$0xf]
        %v2052 = vld [vmem:[%s1 + $0x1e0] sm:$0xf]
        %v2053 = vld [vmem:[%s1 + $0x1e4] sm:$0xf]
        %v2054 = vld [vmem:[%s1 + $0x1e8] sm:$0xf]
        %v2055 = vld [vmem:[%s1 + $0x1ec] sm:$0xf]
        %v2056 = vld [vmem:[%s1 + $0x1f0] sm:$0xf]
        %v2057 = vld [vmem:[%s1 + $0x1f4] sm:$0xf]
        %v2058 = vld [vmem:[%s1 + $0x1f8] sm:$0xf]
        %v2059 = vld [vmem:[%s1 + $0x1fc] sm:$0xf]
        %v2060 = vld [vmem:[%s1 + $0x200] sm:$0xf]
        %v2061 = vld [vmem:[%s1 + $0x204] sm:$0xf]
        %v2062 = vld [vmem:[%s1 + $0x208] sm:$0xf]
        %v2063 = vld [vmem:[%s1 + $0x20c] sm:$0xf]
        %v2064 = vld [vmem:[%s1 + $0x210] sm:$0xf]
        %v2065 = vld [vmem:[%s1 + $0x214] sm:$0xf]
        %v2066 = vld [vmem:[%s1 + $0x218] sm:$0xf]
        %v2067 = vld [vmem:[%s1 + $0x21c] sm:$0xf]
        %v2068 = vld [vmem:[%s1 + $0x220] sm:$0xf]
        %v2069 = vld [vmem:[%s1 + $0x224] sm:$0xf]
        %v2070 = vld [vmem:[%s1 + $0x228] sm:$0xf]
        %v2071 = vld [vmem:[%s1 + $0x22c] sm:$0xf]
        %v2072 = vld [vmem:[%s1 + $0x230] sm:$0xf]
        %v2073 = vld [vmem:[%s1 + $0x234] sm:$0xf]
        %v2074 = vld [vmem:[%s1 + $0x238] sm:$0xf]
        %v2075 = vld [vmem:[%s1 + $0x23c] sm:$0xf]
        %v2076 = vld [vmem:[%s2] sm:$0x1]
        %v2078 = vlaneseq
        %v2079 = vshrl.u32 %v2078, 7
        %v2080 = vsub.s32 0, %v2079
        %v2081 = vrot.slane %v2076, %v2080
        %v2183 = vunpack.c.l.b16 %v1832
        %v2184 = vunpack.c.h.b16 %v1832
        %v2185 = vunpack.c.l.b16 %v1833
        %v2186 = vunpack.c.h.b16 %v1833
        %v2187 = vunpack.c.l.b16 %v1834
        %v2188 = vunpack.c.h.b16 %v1834
        %v2189 = vunpack.c.l.b16 %v1835
        %v2190 = vunpack.c.h.b16 %v1835
        %v2191 = vunpack.c.l.b16 %v1836
        %v2192 = vunpack.c.l.b16 %v1837
        %v2193 = vunpack.c.h.b16 %v1837
        %v2194 = vunpack.c.l.b16 %v1838
        %v2195 = vunpack.c.h.b16 %v1838
        %v2196 = vunpack.c.l.b16 %v1839
        %v2197 = vunpack.c.h.b16 %v1839
        %v2198 = vunpack.c.l.b16 %v1840
        %v2199 = vunpack.c.h.b16 %v1840
        %v2200 = vunpack.c.l.b16 %v1841
        %v2201 = vunpack.c.l.b16 %v1842
        %v2202 = vunpack.c.h.b16 %v1842
        %v2203 = vunpack.c.l.b16 %v1843
        %v2204 = vunpack.c.h.b16 %v1843
        %v2205 = vunpack.c.l.b16 %v1844
        %v2206 = vunpack.c.h.b16 %v1844
        %v2207 = vunpack.c.l.b16 %v1845
        %v2208 = vunpack.c.h.b16 %v1845
        %v2209 = vunpack.c.l.b16 %v1846
        %v2210 = vunpack.c.l.b16 %v1847
        %v2211 = vunpack.c.h.b16 %v1847
        %v2212 = vunpack.c.l.b16 %v1848
        %v2213 = vunpack.c.h.b16 %v1848
        %v2214 = vunpack.c.l.b16 %v1849
        %v2215 = vunpack.c.h.b16 %v1849
        %v2216 = vunpack.c.l.b16 %v1850
        %v2217 = vunpack.c.h.b16 %v1850
        %v2218 = vunpack.c.l.b16 %v1851
        %v2219 = vunpack.c.l.b16 %v1852
        %v2220 = vunpack.c.h.b16 %v1852
        %v2221 = vunpack.c.l.b16 %v1853
        %v2222 = vunpack.c.h.b16 %v1853
        %v2223 = vunpack.c.l.b16 %v1854
        %v2224 = vunpack.c.h.b16 %v1854
        %v2225 = vunpack.c.l.b16 %v1855
        %v2226 = vunpack.c.h.b16 %v1855
        %v2227 = vunpack.c.l.b16 %v1856
        %v2228 = vunpack.c.l.b16 %v1857
        %v2229 = vunpack.c.h.b16 %v1857
        %v2230 = vunpack.c.l.b16 %v1858
        %v2231 = vunpack.c.h.b16 %v1858
        %v2232 = vunpack.c.l.b16 %v1859
        %v2233 = vunpack.c.h.b16 %v1859
        %v2234 = vunpack.c.l.b16 %v1860
        %v2235 = vunpack.c.h.b16 %v1860
        %v2236 = vunpack.c.l.b16 %v1861
        %v2237 = vunpack.c.l.b16 %v1862
        %v2238 = vunpack.c.h.b16 %v1862
        %v2239 = vunpack.c.l.b16 %v1863
        %v2240 = vunpack.c.h.b16 %v1863
        %v2241 = vunpack.c.l.b16 %v1864
        %v2242 = vunpack.c.h.b16 %v1864
        %v2243 = vunpack.c.l.b16 %v1865
        %v2244 = vunpack.c.h.b16 %v1865
        %v2245 = vunpack.c.l.b16 %v1866
        %v2246 = vunpack.c.l.b16 %v1867
        %v2247 = vunpack.c.h.b16 %v1867
        %v2248 = vunpack.c.l.b16 %v1868
        %v2249 = vunpack.c.h.b16 %v1868
        %v2250 = vunpack.c.l.b16 %v1869
        %v2251 = vunpack.c.h.b16 %v1869
        %v2252 = vunpack.c.l.b16 %v1870
        %v2253 = vunpack.c.h.b16 %v1870
        %v2254 = vunpack.c.l.b16 %v1871
        %v2255 = vunpack.c.l.b16 %v1872
        %v2256 = vunpack.c.h.b16 %v1872
        %v2257 = vunpack.c.l.b16 %v1873
        %v2258 = vunpack.c.h.b16 %v1873
        %v2259 = vunpack.c.l.b16 %v1874
        %v2260 = vunpack.c.h.b16 %v1874
        %v2261 = vunpack.c.l.b16 %v1875
        %v2262 = vunpack.c.h.b16 %v1875
        %v2263 = vunpack.c.l.b16 %v1876
        %v2264 = vunpack.c.l.b16 %v1877
        %v2265 = vunpack.c.h.b16 %v1877
        %v2266 = vunpack.c.l.b16 %v1878
        %v2267 = vunpack.c.h.b16 %v1878
        %v2268 = vunpack.c.l.b16 %v1879
        %v2269 = vunpack.c.h.b16 %v1879
        %v2270 = vunpack.c.l.b16 %v1880
        %v2271 = vunpack.c.h.b16 %v1880
        %v2272 = vunpack.c.l.b16 %v1881
        %v2273 = vunpack.c.l.b16 %v1882
        %v2274 = vunpack.c.h.b16 %v1882
        %v2275 = vunpack.c.l.b16 %v1883
        %v2276 = vunpack.c.h.b16 %v1883
        %v2277 = vunpack.c.l.b16 %v1884
        %v2278 = vunpack.c.h.b16 %v1884
        %v2279 = vunpack.c.l.b16 %v1885
        %v2280 = vunpack.c.h.b16 %v1885
        %v2281 = vunpack.c.l.b16 %v1886
        %v2282 = vunpack.c.l.b16 %v1887
        %v2283 = vunpack.c.h.b16 %v1887
        %v2284 = vunpack.c.l.b16 %v1888
        %v2285 = vunpack.c.h.b16 %v1888
        %v2286 = vunpack.c.l.b16 %v1889
        %v2287 = vunpack.c.h.b16 %v1889
        %v2288 = vunpack.c.l.b16 %v1890
        %v2289 = vunpack.c.h.b16 %v1890
        %v2290 = vunpack.c.l.b16 %v1891
        %v2291 = vunpack.c.l.b16 %v1892
        %v2292 = vunpack.c.h.b16 %v1892
        %v2293 = vunpack.c.l.b16 %v1893
        %v2294 = vunpack.c.h.b16 %v1893
        %v2295 = vunpack.c.l.b16 %v1894
        %v2296 = vunpack.c.h.b16 %v1894
        %v2297 = vunpack.c.l.b16 %v1895
        %v2298 = vunpack.c.h.b16 %v1895
        %v2299 = vunpack.c.l.b16 %v1896
        %v2300 = vunpack.c.l.b16 %v1897
        %v2301 = vunpack.c.h.b16 %v1897
        %v2302 = vunpack.c.l.b16 %v1898
        %v2303 = vunpack.c.h.b16 %v1898
        %v2304 = vunpack.c.l.b16 %v1899
        %v2305 = vunpack.c.h.b16 %v1899
        %v2306 = vunpack.c.l.b16 %v1900
        %v2307 = vunpack.c.h.b16 %v1900
        %v2308 = vunpack.c.l.b16 %v1901
        %v2309 = vunpack.c.l.b16 %v1902
        %v2310 = vunpack.c.h.b16 %v1902
        %v2311 = vunpack.c.l.b16 %v1903
        %v2312 = vunpack.c.h.b16 %v1903
        %v2313 = vunpack.c.l.b16 %v1904
        %v2314 = vunpack.c.h.b16 %v1904
        %v2315 = vunpack.c.l.b16 %v1905
        %v2316 = vunpack.c.h.b16 %v1905
        %v2317 = vunpack.c.l.b16 %v1906
        %v2318 = vunpack.c.l.b16 %v1907
        %v2319 = vunpack.c.h.b16 %v1907
        %v2320 = vunpack.c.l.b16 %v1908
        %v2321 = vunpack.c.h.b16 %v1908
        %v2322 = vunpack.c.l.b16 %v1909
        %v2323 = vunpack.c.h.b16 %v1909
        %v2324 = vunpack.c.l.b16 %v1910
        %v2325 = vunpack.c.h.b16 %v1910
        %v2326 = vunpack.c.l.b16 %v1911
        %v2327 = vunpack.c.l.b16 %v1912
        %v2328 = vunpack.c.h.b16 %v1912
        %v2329 = vunpack.c.l.b16 %v1913
        %v2330 = vunpack.c.h.b16 %v1913
        %v2331 = vunpack.c.l.b16 %v1914
        %v2332 = vunpack.c.h.b16 %v1914
        %v2333 = vunpack.c.l.b16 %v1915
        %v2334 = vunpack.c.h.b16 %v1915
        %v2335 = vunpack.c.l.b16 %v1916
        %v2336 = vunpack.c.l.b16 %v1917
        %v2337 = vunpack.c.h.b16 %v1917
        %v2338 = vunpack.c.l.b16 %v1918
        %v2339 = vunpack.c.h.b16 %v1918
        %v2340 = vunpack.c.l.b16 %v1919
        %v2341 = vunpack.c.h.b16 %v1919
        %v2342 = vunpack.c.l.b16 %v1920
        %v2343 = vunpack.c.h.b16 %v1920
        %v2344 = vunpack.c.l.b16 %v1921
        %v2345 = vunpack.c.l.b16 %v1922
        %v2346 = vunpack.c.h.b16 %v1922
        %v2347 = vunpack.c.l.b16 %v1923
        %v2348 = vunpack.c.h.b16 %v1923
        %v2349 = vunpack.c.l.b16 %v1924
        %v2350 = vunpack.c.h.b16 %v1924
        %v2351 = vunpack.c.l.b16 %v1925
        %v2352 = vunpack.c.h.b16 %v1925
        %v2353 = vunpack.c.l.b16 %v1926
        %v2354 = vunpack.c.l.b16 %v1927
        %v2355 = vunpack.c.h.b16 %v1927
        %v2356 = vunpack.c.l.b16 %v1928
        %v2357 = vunpack.c.h.b16 %v1928
        %v2358 = vunpack.c.l.b16 %v1929
        %v2359 = vunpack.c.h.b16 %v1929
        %v2360 = vunpack.c.l.b16 %v1930
        %v2361 = vunpack.c.h.b16 %v1930
        %v2362 = vunpack.c.l.b16 %v1931
        %v2363 = vpack.c.b16 %v2192, %v2183
        %v2364 = vpack.c.b16 %v2193, %v2184
        %v2365 = vpack.c.b16 %v2194, %v2185
        %v2366 = vpack.c.b16 %v2195, %v2186
        %v2367 = vpack.c.b16 %v2196, %v2187
        %v2368 = vpack.c.b16 %v2197, %v2188
        %v2369 = vpack.c.b16 %v2198, %v2189
        %v2370 = vpack.c.b16 %v2199, %v2190
        %v2371 = vpack.c.b16 %v2200, %v2191
        %v2372 = vpack.c.b16 %v2210, %v2201
        %v2373 = vpack.c.b16 %v2211, %v2202
        %v2374 = vpack.c.b16 %v2212, %v2203
        %v2375 = vpack.c.b16 %v2213, %v2204
        %v2376 = vpack.c.b16 %v2214, %v2205
        %v2377 = vpack.c.b16 %v2215, %v2206
        %v2378 = vpack.c.b16 %v2216, %v2207
        %v2379 = vpack.c.b16 %v2217, %v2208
        %v2380 = vpack.c.b16 %v2218, %v2209
        %v2381 = vpack.c.b16 %v2228, %v2219
        %v2382 = vpack.c.b16 %v2229, %v2220
        %v2383 = vpack.c.b16 %v2230, %v2221
        %v2384 = vpack.c.b16 %v2231, %v2222
        %v2385 = vpack.c.b16 %v2232, %v2223
        %v2386 = vpack.c.b16 %v2233, %v2224
        %v2387 = vpack.c.b16 %v2234, %v2225
        %v2388 = vpack.c.b16 %v2235, %v2226
        %v2389 = vpack.c.b16 %v2236, %v2227
        %v2390 = vpack.c.b16 %v2246, %v2237
        %v2391 = vpack.c.b16 %v2247, %v2238
        %v2392 = vpack.c.b16 %v2248, %v2239
        %v2393 = vpack.c.b16 %v2249, %v2240
        %v2394 = vpack.c.b16 %v2250, %v2241
        %v2395 = vpack.c.b16 %v2251, %v2242
        %v2396 = vpack.c.b16 %v2252, %v2243
        %v2397 = vpack.c.b16 %v2253, %v2244
        %v2398 = vpack.c.b16 %v2254, %v2245
        %v2399 = vpack.c.b16 %v2264, %v2255
        %v2400 = vpack.c.b16 %v2265, %v2256
        %v2401 = vpack.c.b16 %v2266, %v2257
        %v2402 = vpack.c.b16 %v2267, %v2258
        %v2403 = vpack.c.b16 %v2268, %v2259
        %v2404 = vpack.c.b16 %v2269, %v2260
        %v2405 = vpack.c.b16 %v2270, %v2261
        %v2406 = vpack.c.b16 %v2271, %v2262
        %v2407 = vpack.c.b16 %v2272, %v2263
        %v2408 = vpack.c.b16 %v2282, %v2273
        %v2409 = vpack.c.b16 %v2283, %v2274
        %v2410 = vpack.c.b16 %v2284, %v2275
        %v2411 = vpack.c.b16 %v2285, %v2276
        %v2412 = vpack.c.b16 %v2286, %v2277
        %v2413 = vpack.c.b16 %v2287, %v2278
        %v2414 = vpack.c.b16 %v2288, %v2279
        %v2415 = vpack.c.b16 %v2289, %v2280
        %v2416 = vpack.c.b16 %v2290, %v2281
        %v2417 = vpack.c.b16 %v2300, %v2291
        %v2418 = vpack.c.b16 %v2301, %v2292
        %v2419 = vpack.c.b16 %v2302, %v2293
        %v2420 = vpack.c.b16 %v2303, %v2294
        %v2421 = vpack.c.b16 %v2304, %v2295
        %v2422 = vpack.c.b16 %v2305, %v2296
        %v2423 = vpack.c.b16 %v2306, %v2297
        %v2424 = vpack.c.b16 %v2307, %v2298
        %v2425 = vpack.c.b16 %v2308, %v2299
        %v2426 = vpack.c.b16 %v2318, %v2309
        %v2427 = vpack.c.b16 %v2319, %v2310
        %v2428 = vpack.c.b16 %v2320, %v2311
        %v2429 = vpack.c.b16 %v2321, %v2312
        %v2430 = vpack.c.b16 %v2322, %v2313
        %v2431 = vpack.c.b16 %v2323, %v2314
        %v2432 = vpack.c.b16 %v2324, %v2315
        %v2433 = vpack.c.b16 %v2325, %v2316
        %v2434 = vpack.c.b16 %v2326, %v2317
        %v2435 = vpack.c.b16 %v2336, %v2327
        %v2436 = vpack.c.b16 %v2337, %v2328
        %v2437 = vpack.c.b16 %v2338, %v2329
        %v2438 = vpack.c.b16 %v2339, %v2330
        %v2439 = vpack.c.b16 %v2340, %v2331
        %v2440 = vpack.c.b16 %v2341, %v2332
        %v2441 = vpack.c.b16 %v2342, %v2333
        %v2442 = vpack.c.b16 %v2343, %v2334
        %v2443 = vpack.c.b16 %v2344, %v2335
        %v2444 = vpack.c.b16 %v2354, %v2345
        %v2445 = vpack.c.b16 %v2355, %v2346
        %v2446 = vpack.c.b16 %v2356, %v2347
        %v2447 = vpack.c.b16 %v2357, %v2348
        %v2448 = vpack.c.b16 %v2358, %v2349
        %v2449 = vpack.c.b16 %v2359, %v2350
        %v2450 = vpack.c.b16 %v2360, %v2351
        %v2451 = vpack.c.b16 %v2361, %v2352
        %v2452 = vpack.c.b16 %v2362, %v2353
        %v2687 = vunpack.c.l.b16 %v1932
        %v2688 = vunpack.c.l.b16 %v1933
        %v2689 = vunpack.c.l.b16 %v1934
        %v2690 = vunpack.c.l.b16 %v1935
        %v2691 = vunpack.c.l.b16 %v1936
        %v2692 = vunpack.c.l.b16 %v1937
        %v2693 = vunpack.c.l.b16 %v1938
        %v2694 = vunpack.c.l.b16 %v1939
        %v2695 = vunpack.c.l.b16 %v1940
        %v2696 = vunpack.c.l.b16 %v1941
        %v2697 = vunpack.c.l.b16 %v1942
        %v2698 = vunpack.c.l.b16 %v1943
        %v2699 = vunpack.c.l.b16 %v1944
        %v2700 = vunpack.c.l.b16 %v1945
        %v2701 = vunpack.c.l.b16 %v1946
        %v2702 = vunpack.c.l.b16 %v1947
        %v2703 = vunpack.c.l.b16 %v1948
        %v2704 = vunpack.c.l.b16 %v1949
        %v2705 = vunpack.c.l.b16 %v1950
        %v2706 = vunpack.c.l.b16 %v1951
        %v2707 = vunpack.c.l.b16 %v1952
        %v2708 = vunpack.c.l.b16 %v1953
        %v2709 = vunpack.c.l.b16 %v1954
        %v2710 = vunpack.c.l.b16 %v1955
        %v2711 = vunpack.c.l.b16 %v1956
        %v2712 = vunpack.c.l.b16 %v1957
        %v2713 = vunpack.c.l.b16 %v1958
        %v2714 = vunpack.c.l.b16 %v1959
        %v2715 = vunpack.c.l.b16 %v1960
        %v2716 = vunpack.c.l.b16 %v1961
        %v2717 = vunpack.c.l.b16 %v1962
        %v2718 = vunpack.c.l.b16 %v1963
        %v2719 = vunpack.c.l.b16 %v1964
        %v2720 = vunpack.c.l.b16 %v1965
        %v2721 = vunpack.c.l.b16 %v1966
        %v2722 = vunpack.c.l.b16 %v1967
        %v2723 = vunpack.c.l.b16 %v1968
        %v2724 = vunpack.c.l.b16 %v1969
        %v2725 = vunpack.c.l.b16 %v1970
        %v2726 = vunpack.c.l.b16 %v1971
        %v2727 = vunpack.c.l.b16 %v1972
        %v2728 = vunpack.c.l.b16 %v1973
        %v2729 = vunpack.c.l.b16 %v1974
        %v2730 = vunpack.c.l.b16 %v1975
        %v2731 = vunpack.c.l.b16 %v1976
        %v2732 = vunpack.c.l.b16 %v1977
        %v2733 = vunpack.c.l.b16 %v1978
        %v2734 = vunpack.c.l.b16 %v1979
        %v2735 = vunpack.c.l.b16 %v1980
        %v2736 = vunpack.c.l.b16 %v1981
        %v2737 = vunpack.c.l.b16 %v1982
        %v2738 = vunpack.c.l.b16 %v1983
        %v2739 = vunpack.c.l.b16 %v1984
        %v2740 = vunpack.c.l.b16 %v1985
        %v2741 = vunpack.c.l.b16 %v1986
        %v2742 = vunpack.c.l.b16 %v1987
        %v2743 = vunpack.c.l.b16 %v1988
        %v2744 = vunpack.c.l.b16 %v1989
        %v2745 = vunpack.c.l.b16 %v1990
        %v2746 = vunpack.c.l.b16 %v1991
        %v2747 = vunpack.c.l.b16 %v1992
        %v2748 = vunpack.c.l.b16 %v1993
        %v2749 = vunpack.c.l.b16 %v1994
        %v2750 = vunpack.c.l.b16 %v1995
        %v2751 = vunpack.c.l.b16 %v1996
        %v2752 = vunpack.c.l.b16 %v1997
        %v2753 = vunpack.c.l.b16 %v1998
        %v2754 = vunpack.c.l.b16 %v1999
        %v2755 = vunpack.c.l.b16 %v2000
        %v2756 = vunpack.c.l.b16 %v2001
        %v2757 = vunpack.c.l.b16 %v2002
        %v2758 = vunpack.c.l.b16 %v2003
        %v2759 = vunpack.c.l.b16 %v2004
        %v2760 = vunpack.c.l.b16 %v2005
        %v2761 = vunpack.c.l.b16 %v2006
        %v2762 = vunpack.c.l.b16 %v2007
        %v2763 = vunpack.c.l.b16 %v2008
        %v2764 = vunpack.c.l.b16 %v2009
        %v2765 = vunpack.c.l.b16 %v2010
        %v2766 = vunpack.c.l.b16 %v2011
        %v2767 = vunpack.c.l.b16 %v2012
        %v2768 = vunpack.c.l.b16 %v2013
        %v2769 = vunpack.c.l.b16 %v2014
        %v2770 = vunpack.c.l.b16 %v2015
        %v2771 = vunpack.c.l.b16 %v2016
        %v2772 = vunpack.c.l.b16 %v2017
        %v2773 = vunpack.c.l.b16 %v2018
        %v2774 = vunpack.c.l.b16 %v2019
        %v2775 = vunpack.c.l.b16 %v2020
        %v2776 = vunpack.c.l.b16 %v2021
        %v2777 = vunpack.c.l.b16 %v2022
        %v2778 = vunpack.c.l.b16 %v2023
        %v2779 = vunpack.c.l.b16 %v2024
        %v2780 = vunpack.c.l.b16 %v2025
        %v2781 = vunpack.c.l.b16 %v2026
        %v2782 = vunpack.c.l.b16 %v2027
        %v2783 = vunpack.c.l.b16 %v2028
        %v2784 = vunpack.c.l.b16 %v2029
        %v2785 = vunpack.c.l.b16 %v2030
        %v2786 = vunpack.c.l.b16 %v2031
        %v2787 = vunpack.c.l.b16 %v2032
        %v2788 = vunpack.c.l.b16 %v2033
        %v2789 = vunpack.c.l.b16 %v2034
        %v2790 = vunpack.c.l.b16 %v2035
        %v2791 = vunpack.c.l.b16 %v2036
        %v2792 = vunpack.c.l.b16 %v2037
        %v2793 = vunpack.c.l.b16 %v2038
        %v2794 = vunpack.c.l.b16 %v2039
        %v2795 = vunpack.c.l.b16 %v2040
        %v2796 = vunpack.c.l.b16 %v2041
        %v2797 = vunpack.c.l.b16 %v2042
        %v2798 = vunpack.c.l.b16 %v2043
        %v2799 = vunpack.c.l.b16 %v2044
        %v2800 = vunpack.c.l.b16 %v2045
        %v2801 = vunpack.c.l.b16 %v2046
        %v2802 = vunpack.c.l.b16 %v2047
        %v2803 = vunpack.c.l.b16 %v2048
        %v2804 = vunpack.c.l.b16 %v2049
        %v2805 = vunpack.c.l.b16 %v2050
        %v2806 = vunpack.c.l.b16 %v2051
        %v2807 = vunpack.c.l.b16 %v2052
        %v2808 = vunpack.c.l.b16 %v2053
        %v2809 = vunpack.c.l.b16 %v2054
        %v2810 = vunpack.c.l.b16 %v2055
        %v2811 = vunpack.c.l.b16 %v2056
        %v2812 = vunpack.c.l.b16 %v2057
        %v2813 = vunpack.c.l.b16 %v2058
        %v2814 = vunpack.c.l.b16 %v2059
        %v2815 = vunpack.c.l.b16 %v2060
        %v2816 = vunpack.c.l.b16 %v2061
        %v2817 = vunpack.c.l.b16 %v2062
        %v2818 = vunpack.c.l.b16 %v2063
        %v2819 = vunpack.c.l.b16 %v2064
        %v2820 = vunpack.c.l.b16 %v2065
        %v2821 = vunpack.c.l.b16 %v2066
        %v2822 = vunpack.c.l.b16 %v2067
        %v2823 = vunpack.c.l.b16 %v2068
        %v2824 = vunpack.c.l.b16 %v2069
        %v2825 = vunpack.c.l.b16 %v2070
        %v2826 = vunpack.c.l.b16 %v2071
        %v2827 = vunpack.c.l.b16 %v2072
        %v2828 = vunpack.c.l.b16 %v2073
        %v2829 = vunpack.c.l.b16 %v2074
        %v2830 = vunpack.c.l.b16 %v2075
        %v2831 = vpack.c.b16 %v2688, %v2687
        %v2832 = vpack.c.b16 %v2690, %v2689
        %v2833 = vpack.c.b16 %v2692, %v2691
        %v2834 = vpack.c.b16 %v2694, %v2693
        %v2835 = vpack.c.b16 %v2696, %v2695
        %v2836 = vpack.c.b16 %v2698, %v2697
        %v2837 = vpack.c.b16 %v2700, %v2699
        %v2838 = vpack.c.b16 %v2702, %v2701
        %v2839 = vpack.c.b16 %v2704, %v2703
        %v2840 = vpack.c.b16 %v2706, %v2705
        %v2841 = vpack.c.b16 %v2708, %v2707
        %v2842 = vpack.c.b16 %v2710, %v2709
        %v2843 = vpack.c.b16 %v2712, %v2711
        %v2844 = vpack.c.b16 %v2714, %v2713
        %v2845 = vpack.c.b16 %v2716, %v2715
        %v2846 = vpack.c.b16 %v2718, %v2717
        %v2847 = vpack.c.b16 %v2720, %v2719
        %v2848 = vpack.c.b16 %v2722, %v2721
        %v2849 = vpack.c.b16 %v2724, %v2723
        %v2850 = vpack.c.b16 %v2726, %v2725
        %v2851 = vpack.c.b16 %v2728, %v2727
        %v2852 = vpack.c.b16 %v2730, %v2729
        %v2853 = vpack.c.b16 %v2732, %v2731
        %v2854 = vpack.c.b16 %v2734, %v2733
        %v2855 = vpack.c.b16 %v2736, %v2735
        %v2856 = vpack.c.b16 %v2738, %v2737
        %v2857 = vpack.c.b16 %v2740, %v2739
        %v2858 = vpack.c.b16 %v2742, %v2741
        %v2859 = vpack.c.b16 %v2744, %v2743
        %v2860 = vpack.c.b16 %v2746, %v2745
        %v2861 = vpack.c.b16 %v2748, %v2747
        %v2862 = vpack.c.b16 %v2750, %v2749
        %v2863 = vpack.c.b16 %v2752, %v2751
        %v2864 = vpack.c.b16 %v2754, %v2753
        %v2865 = vpack.c.b16 %v2756, %v2755
        %v2866 = vpack.c.b16 %v2758, %v2757
        %v2867 = vpack.c.b16 %v2760, %v2759
        %v2868 = vpack.c.b16 %v2762, %v2761
        %v2869 = vpack.c.b16 %v2764, %v2763
        %v2870 = vpack.c.b16 %v2766, %v2765
        %v2871 = vpack.c.b16 %v2768, %v2767
        %v2872 = vpack.c.b16 %v2770, %v2769
        %v2873 = vpack.c.b16 %v2772, %v2771
        %v2874 = vpack.c.b16 %v2774, %v2773
        %v2875 = vpack.c.b16 %v2776, %v2775
        %v2876 = vpack.c.b16 %v2778, %v2777
        %v2877 = vpack.c.b16 %v2780, %v2779
        %v2878 = vpack.c.b16 %v2782, %v2781
        %v2879 = vpack.c.b16 %v2784, %v2783
        %v2880 = vpack.c.b16 %v2786, %v2785
        %v2881 = vpack.c.b16 %v2788, %v2787
        %v2882 = vpack.c.b16 %v2790, %v2789
        %v2883 = vpack.c.b16 %v2792, %v2791
        %v2884 = vpack.c.b16 %v2794, %v2793
        %v2885 = vpack.c.b16 %v2796, %v2795
        %v2886 = vpack.c.b16 %v2798, %v2797
        %v2887 = vpack.c.b16 %v2800, %v2799
        %v2888 = vpack.c.b16 %v2802, %v2801
        %v2889 = vpack.c.b16 %v2804, %v2803
        %v2890 = vpack.c.b16 %v2806, %v2805
        %v2891 = vpack.c.b16 %v2808, %v2807
        %v2892 = vpack.c.b16 %v2810, %v2809
        %v2893 = vpack.c.b16 %v2812, %v2811
        %v2894 = vpack.c.b16 %v2814, %v2813
        %v2895 = vpack.c.b16 %v2816, %v2815
        %v2896 = vpack.c.b16 %v2818, %v2817
        %v2897 = vpack.c.b16 %v2820, %v2819
        %v2898 = vpack.c.b16 %v2822, %v2821
        %v2899 = vpack.c.b16 %v2824, %v2823
        %v2900 = vpack.c.b16 %v2826, %v2825
        %v2901 = vpack.c.b16 %v2828, %v2827
        %v2902 = vpack.c.b16 %v2830, %v2829
        %2975 = vmatprep.subr.bf16.mxu0 0
        %2976 = vmatpush1.bf16.msra.mxu0 %v2838
        %2977 = vmatprep.subr.bf16.mxu0 0
        %2978 = vmatpush1.bf16.msra.mxu0 %v2837
        %2979 = vmatprep.subr.bf16.mxu0 0
        %2980 = vmatpush1.bf16.msra.mxu0 %v2836
        %2981 = vmatprep.subr.bf16.mxu0 0
        %2982 = vmatpush1.bf16.msra.mxu0 %v2835
        %2983 = vmatprep.subr.bf16.mxu0 0
        %2984 = vmatpush1.bf16.msra.mxu0 %v2834
        %2985 = vmatprep.subr.bf16.mxu0 0
        %2986 = vmatpush1.bf16.msra.mxu0 %v2833
        %2987 = vmatprep.subr.bf16.mxu0 0
        %2988 = vmatpush1.bf16.msra.mxu0 %v2832
        %2989 = vmatprep.subr.bf16.mxu0 0
        %2990 = vmatpush1.bf16.msra.mxu0 %v2831
        %2991 = vmatprep.subr.bf16.mxu0 0
        %2992 = vmatpush2.bf16.msra.mxu0 %v2846
        %2993 = vmatprep.subr.bf16.mxu0 0
        %2994 = vmatpush2.bf16.msra.mxu0 %v2845
        %2995 = vmatprep.subr.bf16.mxu0 0
        %2996 = vmatpush2.bf16.msra.mxu0 %v2844
        %2997 = vmatprep.subr.bf16.mxu0 0
        %2998 = vmatpush2.bf16.msra.mxu0 %v2843
        %2999 = vmatprep.subr.bf16.mxu0 0
        %3000 = vmatpush2.bf16.msra.mxu0 %v2842
        %3001 = vmatprep.subr.bf16.mxu0 0
        %3002 = vmatpush2.bf16.msra.mxu0 %v2841
        %3003 = vmatprep.subr.bf16.mxu0 0
        %3004 = vmatpush2.bf16.msra.mxu0 %v2840
        %3005 = vmatprep.subr.bf16.mxu0 0
        %3006 = vmatpush2.bf16.msra.mxu0 %v2839
        %3007 = vmatprep.mubr.bf16.mxu0 %v2364
        %3008 = vmatmul.mubr.bf16.gmra.mxu0 %v2363
        %v3009 = vpop.f32.mrf.mxu0
        %v3010 = vadd.f32 %v2081, %v3009
        %v3011 = vpop.f32.mrf.mxu0
        %v3012 = vpop.f32.mrf.mxu0
        %v3013 = vadd.f32 %v2081, %v3012
        %v3014 = vpop.f32.mrf.mxu0
        %3015 = vmatprep.mubr.bf16.mxu0 %v2373
        %3016 = vmatmul.mubr.bf16.gmra.mxu0 %v2372
        %v3017 = vpop.f32.mrf.mxu0
        %v3018 = vadd.f32 %v2081, %v3017
        %v3019 = vpop.f32.mrf.mxu0
        %v3020 = vpop.f32.mrf.mxu0
        %v3021 = vadd.f32 %v2081, %v3020
        %v3022 = vpop.f32.mrf.mxu0
        %3023 = vmatprep.mubr.bf16.mxu0 %v2382
        %3024 = vmatmul.mubr.bf16.gmra.mxu0 %v2381
        %v3025 = vpop.f32.mrf.mxu0
        %v3026 = vadd.f32 %v2081, %v3025
        %v3027 = vpop.f32.mrf.mxu0
        %v3028 = vpop.f32.mrf.mxu0
        %v3029 = vadd.f32 %v2081, %v3028
        %v3030 = vpop.f32.mrf.mxu0
        %3031 = vmatprep.mubr.bf16.mxu0 %v2391
        %3032 = vmatmul.mubr.bf16.gmra.mxu0 %v2390
        %v3033 = vpop.f32.mrf.mxu0
        %v3034 = vadd.f32 %v2081, %v3033
        %v3035 = vpop.f32.mrf.mxu0
        %v3036 = vpop.f32.mrf.mxu0
        %v3037 = vadd.f32 %v2081, %v3036
        %v3038 = vpop.f32.mrf.mxu0
        %3039 = vmatprep.mubr.bf16.mxu0 %v2400
        %3040 = vmatmul.mubr.bf16.gmra.mxu0 %v2399
        %v3041 = vpop.f32.mrf.mxu0
        %v3042 = vadd.f32 %v2081, %v3041
        %v3043 = vpop.f32.mrf.mxu0
        %v3044 = vpop.f32.mrf.mxu0
        %v3045 = vadd.f32 %v2081, %v3044
        %v3046 = vpop.f32.mrf.mxu0
        %3047 = vmatprep.mubr.bf16.mxu0 %v2409
        %3048 = vmatmul.mubr.bf16.gmra.mxu0 %v2408
        %v3049 = vpop.f32.mrf.mxu0
        %v3050 = vadd.f32 %v2081, %v3049
        %v3051 = vpop.f32.mrf.mxu0
        %v3052 = vpop.f32.mrf.mxu0
        %v3053 = vadd.f32 %v2081, %v3052
        %v3054 = vpop.f32.mrf.mxu0
        %3055 = vmatprep.mubr.bf16.mxu0 %v2418
        %3056 = vmatmul.mubr.bf16.gmra.mxu0 %v2417
        %v3057 = vpop.f32.mrf.mxu0
        %v3058 = vadd.f32 %v2081, %v3057
        %v3059 = vpop.f32.mrf.mxu0
        %v3060 = vpop.f32.mrf.mxu0
        %v3061 = vadd.f32 %v2081, %v3060
        %v3062 = vpop.f32.mrf.mxu0
        %3063 = vmatprep.mubr.bf16.mxu0 %v2427
        %3064 = vmatmul.mubr.bf16.gmra.mxu0 %v2426
        %v3065 = vpop.f32.mrf.mxu0
        %v3066 = vadd.f32 %v2081, %v3065
        %v3067 = vpop.f32.mrf.mxu0
        %v3068 = vpop.f32.mrf.mxu0
        %v3069 = vadd.f32 %v2081, %v3068
        %v3070 = vpop.f32.mrf.mxu0
        %3071 = vmatprep.mubr.bf16.mxu0 %v2436
        %3072 = vmatmul.mubr.bf16.gmra.mxu0 %v2435
        %v3073 = vpop.f32.mrf.mxu0
        %v3074 = vadd.f32 %v2081, %v3073
        %v3075 = vpop.f32.mrf.mxu0
        %v3076 = vpop.f32.mrf.mxu0
        %v3077 = vadd.f32 %v2081, %v3076
        %v3078 = vpop.f32.mrf.mxu0
        %3079 = vmatprep.mubr.bf16.mxu0 %v2445
        %3080 = vmatmul.mubr.bf16.gmra.mxu0 %v2444
        %v3081 = vpop.f32.mrf.mxu0
        %v3082 = vadd.f32 %v2081, %v3081
        %v3083 = vpop.f32.mrf.mxu0
        %v3084 = vpop.f32.mrf.mxu0
        %v3085 = vadd.f32 %v2081, %v3084
        %v3086 = vpop.f32.mrf.mxu0
        %3087 = vdwg.mxu0
        %3088 = vmatprep.subr.bf16.mxu0 0
        %3089 = vmatpush1.bf16.msra.mxu0 %v2854
        %3090 = vmatprep.subr.bf16.mxu0 0
        %3091 = vmatpush1.bf16.msra.mxu0 %v2853
        %3092 = vmatprep.subr.bf16.mxu0 0
        %3093 = vmatpush1.bf16.msra.mxu0 %v2852
        %3094 = vmatprep.subr.bf16.mxu0 0
        %3095 = vmatpush1.bf16.msra.mxu0 %v2851
        %3096 = vmatprep.subr.bf16.mxu0 0
        %3097 = vmatpush1.bf16.msra.mxu0 %v2850
        %3098 = vmatprep.subr.bf16.mxu0 0
        %3099 = vmatpush1.bf16.msra.mxu0 %v2849
        %3100 = vmatprep.subr.bf16.mxu0 0
        %3101 = vmatpush1.bf16.msra.mxu0 %v2848
        %3102 = vmatprep.subr.bf16.mxu0 0
        %3103 = vmatpush1.bf16.msra.mxu0 %v2847
        %3104 = vmatprep.subr.bf16.mxu0 0
        %3105 = vmatpush2.bf16.msra.mxu0 %v2862
        %3106 = vmatprep.subr.bf16.mxu0 0
        %3107 = vmatpush2.bf16.msra.mxu0 %v2861
        %3108 = vmatprep.subr.bf16.mxu0 0
        %3109 = vmatpush2.bf16.msra.mxu0 %v2860
        %3110 = vmatprep.subr.bf16.mxu0 0
        %3111 = vmatpush2.bf16.msra.mxu0 %v2859
        %3112 = vmatprep.subr.bf16.mxu0 0
        %3113 = vmatpush2.bf16.msra.mxu0 %v2858
        %3114 = vmatprep.subr.bf16.mxu0 0
        %3115 = vmatpush2.bf16.msra.mxu0 %v2857
        %3116 = vmatprep.subr.bf16.mxu0 0
        %3117 = vmatpush2.bf16.msra.mxu0 %v2856
        %3118 = vmatprep.subr.bf16.mxu0 0
        %3119 = vmatpush2.bf16.msra.mxu0 %v2855
        %3120 = vmatprep.mubr.bf16.mxu0 %v2366
        %3121 = vmatmul.mubr.bf16.gmra.mxu0 %v2365
        %v3122 = vpop.f32.mrf.mxu0
        %v3123 = vadd.f32 %v3010, %v3122
        %v3124 = vpop.f32.mrf.mxu0
        %v3125 = vpop.f32.mrf.mxu0
        %v3126 = vadd.f32 %v3013, %v3125
        %v3127 = vpop.f32.mrf.mxu0
        %3128 = vmatprep.mubr.bf16.mxu0 %v2375
        %3129 = vmatmul.mubr.bf16.gmra.mxu0 %v2374
        %v3130 = vpop.f32.mrf.mxu0
        %v3131 = vadd.f32 %v3018, %v3130
        %v3132 = vpop.f32.mrf.mxu0
        %v3133 = vpop.f32.mrf.mxu0
        %v3134 = vadd.f32 %v3021, %v3133
        %v3135 = vpop.f32.mrf.mxu0
        %3136 = vmatprep.mubr.bf16.mxu0 %v2384
        %3137 = vmatmul.mubr.bf16.gmra.mxu0 %v2383
        %v3138 = vpop.f32.mrf.mxu0
        %v3139 = vadd.f32 %v3026, %v3138
        %v3140 = vpop.f32.mrf.mxu0
        %v3141 = vpop.f32.mrf.mxu0
        %v3142 = vadd.f32 %v3029, %v3141
        %v3143 = vpop.f32.mrf.mxu0
        %3144 = vmatprep.mubr.bf16.mxu0 %v2393
        %3145 = vmatmul.mubr.bf16.gmra.mxu0 %v2392
        %v3146 = vpop.f32.mrf.mxu0
        %v3147 = vadd.f32 %v3034, %v3146
        %v3148 = vpop.f32.mrf.mxu0
        %v3149 = vpop.f32.mrf.mxu0
        %v3150 = vadd.f32 %v3037, %v3149
        %v3151 = vpop.f32.mrf.mxu0
        %3152 = vmatprep.mubr.bf16.mxu0 %v2402
        %3153 = vmatmul.mubr.bf16.gmra.mxu0 %v2401
        %v3154 = vpop.f32.mrf.mxu0
        %v3155 = vadd.f32 %v3042, %v3154
        %v3156 = vpop.f32.mrf.mxu0
        %v3157 = vpop.f32.mrf.mxu0
        %v3158 = vadd.f32 %v3045, %v3157
        %v3159 = vpop.f32.mrf.mxu0
        %3160 = vmatprep.mubr.bf16.mxu0 %v2411
        %3161 = vmatmul.mubr.bf16.gmra.mxu0 %v2410
        %v3162 = vpop.f32.mrf.mxu0
        %v3163 = vadd.f32 %v3050, %v3162
        %v3164 = vpop.f32.mrf.mxu0
        %v3165 = vpop.f32.mrf.mxu0
        %v3166 = vadd.f32 %v3053, %v3165
        %v3167 = vpop.f32.mrf.mxu0
        %3168 = vmatprep.mubr.bf16.mxu0 %v2420
        %3169 = vmatmul.mubr.bf16.gmra.mxu0 %v2419
        %v3170 = vpop.f32.mrf.mxu0
        %v3171 = vadd.f32 %v3058, %v3170
        %v3172 = vpop.f32.mrf.mxu0
        %v3173 = vpop.f32.mrf.mxu0
        %v3174 = vadd.f32 %v3061, %v3173
        %v3175 = vpop.f32.mrf.mxu0
        %3176 = vmatprep.mubr.bf16.mxu0 %v2429
        %3177 = vmatmul.mubr.bf16.gmra.mxu0 %v2428
        %v3178 = vpop.f32.mrf.mxu0
        %v3179 = vadd.f32 %v3066, %v3178
        %v3180 = vpop.f32.mrf.mxu0
        %v3181 = vpop.f32.mrf.mxu0
        %v3182 = vadd.f32 %v3069, %v3181
        %v3183 = vpop.f32.mrf.mxu0
        %3184 = vmatprep.mubr.bf16.mxu0 %v2438
        %3185 = vmatmul.mubr.bf16.gmra.mxu0 %v2437
        %v3186 = vpop.f32.mrf.mxu0
        %v3187 = vadd.f32 %v3074, %v3186
        %v3188 = vpop.f32.mrf.mxu0
        %v3189 = vpop.f32.mrf.mxu0
        %v3190 = vadd.f32 %v3077, %v3189
        %v3191 = vpop.f32.mrf.mxu0
        %3192 = vmatprep.mubr.bf16.mxu0 %v2447
        %3193 = vmatmul.mubr.bf16.gmra.mxu0 %v2446
        %v3194 = vpop.f32.mrf.mxu0
        %v3195 = vadd.f32 %v3082, %v3194
        %v3196 = vpop.f32.mrf.mxu0
        %v3197 = vpop.f32.mrf.mxu0
        %v3198 = vadd.f32 %v3085, %v3197
        %v3199 = vpop.f32.mrf.mxu0
        %3200 = vdwg.mxu0
        %3201 = vmatprep.subr.bf16.mxu0 0
        %3202 = vmatpush1.bf16.msra.mxu0 %v2870
        %3203 = vmatprep.subr.bf16.mxu0 0
        %3204 = vmatpush1.bf16.msra.mxu0 %v2869
        %3205 = vmatprep.subr.bf16.mxu0 0
        %3206 = vmatpush1.bf16.msra.mxu0 %v2868
        %3207 = vmatprep.subr.bf16.mxu0 0
        %3208 = vmatpush1.bf16.msra.mxu0 %v2867
        %3209 = vmatprep.subr.bf16.mxu0 0
        %3210 = vmatpush1.bf16.msra.mxu0 %v2866
        %3211 = vmatprep.subr.bf16.mxu0 0
        %3212 = vmatpush1.bf16.msra.mxu0 %v2865
        %3213 = vmatprep.subr.bf16.mxu0 0
        %3214 = vmatpush1.bf16.msra.mxu0 %v2864
        %3215 = vmatprep.subr.bf16.mxu0 0
        %3216 = vmatpush1.bf16.msra.mxu0 %v2863
        %3217 = vmatprep.subr.bf16.mxu0 0
        %3218 = vmatpush2.bf16.msra.mxu0 %v2878
        %3219 = vmatprep.subr.bf16.mxu0 0
        %3220 = vmatpush2.bf16.msra.mxu0 %v2877
        %3221 = vmatprep.subr.bf16.mxu0 0
        %3222 = vmatpush2.bf16.msra.mxu0 %v2876
        %3223 = vmatprep.subr.bf16.mxu0 0
        %3224 = vmatpush2.bf16.msra.mxu0 %v2875
        %3225 = vmatprep.subr.bf16.mxu0 0
        %3226 = vmatpush2.bf16.msra.mxu0 %v2874
        %3227 = vmatprep.subr.bf16.mxu0 0
        %3228 = vmatpush2.bf16.msra.mxu0 %v2873
        %3229 = vmatprep.subr.bf16.mxu0 0
        %3230 = vmatpush2.bf16.msra.mxu0 %v2872
        %3231 = vmatprep.subr.bf16.mxu0 0
        %3232 = vmatpush2.bf16.msra.mxu0 %v2871
        %3233 = vmatprep.mubr.bf16.mxu0 %v2368
        %3234 = vmatmul.mubr.bf16.gmra.mxu0 %v2367
        %v3235 = vpop.f32.mrf.mxu0
        %v3236 = vadd.f32 %v3123, %v3235
        %v3237 = vpop.f32.mrf.mxu0
        %v3238 = vpop.f32.mrf.mxu0
        %v3239 = vadd.f32 %v3126, %v3238
        %v3240 = vpop.f32.mrf.mxu0
        %3241 = vmatprep.mubr.bf16.mxu0 %v2377
        %3242 = vmatmul.mubr.bf16.gmra.mxu0 %v2376
        %v3243 = vpop.f32.mrf.mxu0
        %v3244 = vadd.f32 %v3131, %v3243
        %v3245 = vpop.f32.mrf.mxu0
        %v3246 = vpop.f32.mrf.mxu0
        %v3247 = vadd.f32 %v3134, %v3246
        %v3248 = vpop.f32.mrf.mxu0
        %3249 = vmatprep.mubr.bf16.mxu0 %v2386
        %3250 = vmatmul.mubr.bf16.gmra.mxu0 %v2385
        %v3251 = vpop.f32.mrf.mxu0
        %v3252 = vadd.f32 %v3139, %v3251
        %v3253 = vpop.f32.mrf.mxu0
        %v3254 = vpop.f32.mrf.mxu0
        %v3255 = vadd.f32 %v3142, %v3254
        %v3256 = vpop.f32.mrf.mxu0
        %3257 = vmatprep.mubr.bf16.mxu0 %v2395
        %3258 = vmatmul.mubr.bf16.gmra.mxu0 %v2394
        %v3259 = vpop.f32.mrf.mxu0
        %v3260 = vadd.f32 %v3147, %v3259
        %v3261 = vpop.f32.mrf.mxu0
        %v3262 = vpop.f32.mrf.mxu0
        %v3263 = vadd.f32 %v3150, %v3262
        %v3264 = vpop.f32.mrf.mxu0
        %3265 = vmatprep.mubr.bf16.mxu0 %v2404
        %3266 = vmatmul.mubr.bf16.gmra.mxu0 %v2403
        %v3267 = vpop.f32.mrf.mxu0
        %v3268 = vadd.f32 %v3155, %v3267
        %v3269 = vpop.f32.mrf.mxu0
        %v3270 = vpop.f32.mrf.mxu0
        %v3271 = vadd.f32 %v3158, %v3270
        %v3272 = vpop.f32.mrf.mxu0
        %3273 = vmatprep.mubr.bf16.mxu0 %v2413
        %3274 = vmatmul.mubr.bf16.gmra.mxu0 %v2412
        %v3275 = vpop.f32.mrf.mxu0
        %v3276 = vadd.f32 %v3163, %v3275
        %v3277 = vpop.f32.mrf.mxu0
        %v3278 = vpop.f32.mrf.mxu0
        %v3279 = vadd.f32 %v3166, %v3278
        %v3280 = vpop.f32.mrf.mxu0
        %3281 = vmatprep.mubr.bf16.mxu0 %v2422
        %3282 = vmatmul.mubr.bf16.gmra.mxu0 %v2421
        %v3283 = vpop.f32.mrf.mxu0
        %v3284 = vadd.f32 %v3171, %v3283
        %v3285 = vpop.f32.mrf.mxu0
        %v3286 = vpop.f32.mrf.mxu0
        %v3287 = vadd.f32 %v3174, %v3286
        %v3288 = vpop.f32.mrf.mxu0
        %3289 = vmatprep.mubr.bf16.mxu0 %v2431
        %3290 = vmatmul.mubr.bf16.gmra.mxu0 %v2430
        %v3291 = vpop.f32.mrf.mxu0
        %v3292 = vadd.f32 %v3179, %v3291
        %v3293 = vpop.f32.mrf.mxu0
        %v3294 = vpop.f32.mrf.mxu0
        %v3295 = vadd.f32 %v3182, %v3294
        %v3296 = vpop.f32.mrf.mxu0
        %3297 = vmatprep.mubr.bf16.mxu0 %v2440
        %3298 = vmatmul.mubr.bf16.gmra.mxu0 %v2439
        %v3299 = vpop.f32.mrf.mxu0
        %v3300 = vadd.f32 %v3187, %v3299
        %v3301 = vpop.f32.mrf.mxu0
        %v3302 = vpop.f32.mrf.mxu0
        %v3303 = vadd.f32 %v3190, %v3302
        %v3304 = vpop.f32.mrf.mxu0
        %3305 = vmatprep.mubr.bf16.mxu0 %v2449
        %3306 = vmatmul.mubr.bf16.gmra.mxu0 %v2448
        %v3307 = vpop.f32.mrf.mxu0
        %v3308 = vadd.f32 %v3195, %v3307
        %v3309 = vpop.f32.mrf.mxu0
        %v3310 = vpop.f32.mrf.mxu0
        %v3311 = vadd.f32 %v3198, %v3310
        %v3312 = vpop.f32.mrf.mxu0
        %3313 = vdwg.mxu0
        %3314 = vmatprep.subr.bf16.mxu0 0
        %3315 = vmatpush1.bf16.msra.mxu0 %v2886
        %3316 = vmatprep.subr.bf16.mxu0 0
        %3317 = vmatpush1.bf16.msra.mxu0 %v2885
        %3318 = vmatprep.subr.bf16.mxu0 0
        %3319 = vmatpush1.bf16.msra.mxu0 %v2884
        %3320 = vmatprep.subr.bf16.mxu0 0
        %3321 = vmatpush1.bf16.msra.mxu0 %v2883
        %3322 = vmatprep.subr.bf16.mxu0 0
        %3323 = vmatpush1.bf16.msra.mxu0 %v2882
        %3324 = vmatprep.subr.bf16.mxu0 0
        %3325 = vmatpush1.bf16.msra.mxu0 %v2881
        %3326 = vmatprep.subr.bf16.mxu0 0
        %3327 = vmatpush1.bf16.msra.mxu0 %v2880
        %3328 = vmatprep.subr.bf16.mxu0 0
        %3329 = vmatpush1.bf16.msra.mxu0 %v2879
        %3330 = vmatprep.subr.bf16.mxu0 0
        %3331 = vmatpush2.bf16.msra.mxu0 %v2894
        %3332 = vmatprep.subr.bf16.mxu0 0
        %3333 = vmatpush2.bf16.msra.mxu0 %v2893
        %3334 = vmatprep.subr.bf16.mxu0 0
        %3335 = vmatpush2.bf16.msra.mxu0 %v2892
        %3336 = vmatprep.subr.bf16.mxu0 0
        %3337 = vmatpush2.bf16.msra.mxu0 %v2891
        %3338 = vmatprep.subr.bf16.mxu0 0
        %3339 = vmatpush2.bf16.msra.mxu0 %v2890
        %3340 = vmatprep.subr.bf16.mxu0 0
        %3341 = vmatpush2.bf16.msra.mxu0 %v2889
        %3342 = vmatprep.subr.bf16.mxu0 0
        %3343 = vmatpush2.bf16.msra.mxu0 %v2888
        %3344 = vmatprep.subr.bf16.mxu0 0
        %3345 = vmatpush2.bf16.msra.mxu0 %v2887
        %3346 = vmatprep.mubr.bf16.mxu0 %v2370
        %3347 = vmatmul.mubr.bf16.gmra.mxu0 %v2369
        %v3348 = vpop.f32.mrf.mxu0
        %v3349 = vadd.f32 %v3236, %v3348
        %v3350 = vpop.f32.mrf.mxu0
        %v3351 = vpop.f32.mrf.mxu0
        %v3352 = vadd.f32 %v3239, %v3351
        %v3353 = vpop.f32.mrf.mxu0
        %3354 = vmatprep.mubr.bf16.mxu0 %v2379
        %3355 = vmatmul.mubr.bf16.gmra.mxu0 %v2378
        %v3356 = vpop.f32.mrf.mxu0
        %v3357 = vadd.f32 %v3244, %v3356
        %v3358 = vpop.f32.mrf.mxu0
        %v3359 = vpop.f32.mrf.mxu0
        %v3360 = vadd.f32 %v3247, %v3359
        %v3361 = vpop.f32.mrf.mxu0
        %3362 = vmatprep.mubr.bf16.mxu0 %v2388
        %3363 = vmatmul.mubr.bf16.gmra.mxu0 %v2387
        %v3364 = vpop.f32.mrf.mxu0
        %v3365 = vadd.f32 %v3252, %v3364
        %v3366 = vpop.f32.mrf.mxu0
        %v3367 = vpop.f32.mrf.mxu0
        %v3368 = vadd.f32 %v3255, %v3367
        %v3369 = vpop.f32.mrf.mxu0
        %3370 = vmatprep.mubr.bf16.mxu0 %v2397
        %3371 = vmatmul.mubr.bf16.gmra.mxu0 %v2396
        %v3372 = vpop.f32.mrf.mxu0
        %v3373 = vadd.f32 %v3260, %v3372
        %v3374 = vpop.f32.mrf.mxu0
        %v3375 = vpop.f32.mrf.mxu0
        %v3376 = vadd.f32 %v3263, %v3375
        %v3377 = vpop.f32.mrf.mxu0
        %3378 = vmatprep.mubr.bf16.mxu0 %v2406
        %3379 = vmatmul.mubr.bf16.gmra.mxu0 %v2405
        %v3380 = vpop.f32.mrf.mxu0
        %v3381 = vadd.f32 %v3268, %v3380
        %v3382 = vpop.f32.mrf.mxu0
        %v3383 = vpop.f32.mrf.mxu0
        %v3384 = vadd.f32 %v3271, %v3383
        %v3385 = vpop.f32.mrf.mxu0
        %3386 = vmatprep.mubr.bf16.mxu0 %v2415
        %3387 = vmatmul.mubr.bf16.gmra.mxu0 %v2414
        %v3388 = vpop.f32.mrf.mxu0
        %v3389 = vadd.f32 %v3276, %v3388
        %v3390 = vpop.f32.mrf.mxu0
        %v3391 = vpop.f32.mrf.mxu0
        %v3392 = vadd.f32 %v3279, %v3391
        %v3393 = vpop.f32.mrf.mxu0
        %3394 = vmatprep.mubr.bf16.mxu0 %v2424
        %3395 = vmatmul.mubr.bf16.gmra.mxu0 %v2423
        %v3396 = vpop.f32.mrf.mxu0
        %v3397 = vadd.f32 %v3284, %v3396
        %v3398 = vpop.f32.mrf.mxu0
        %v3399 = vpop.f32.mrf.mxu0
        %v3400 = vadd.f32 %v3287, %v3399
        %v3401 = vpop.f32.mrf.mxu0
        %3402 = vmatprep.mubr.bf16.mxu0 %v2433
        %3403 = vmatmul.mubr.bf16.gmra.mxu0 %v2432
        %v3404 = vpop.f32.mrf.mxu0
        %v3405 = vadd.f32 %v3292, %v3404
        %v3406 = vpop.f32.mrf.mxu0
        %v3407 = vpop.f32.mrf.mxu0
        %v3408 = vadd.f32 %v3295, %v3407
        %v3409 = vpop.f32.mrf.mxu0
        %3410 = vmatprep.mubr.bf16.mxu0 %v2442
        %3411 = vmatmul.mubr.bf16.gmra.mxu0 %v2441
        %v3412 = vpop.f32.mrf.mxu0
        %v3413 = vadd.f32 %v3300, %v3412
        %v3414 = vpop.f32.mrf.mxu0
        %v3415 = vpop.f32.mrf.mxu0
        %v3416 = vadd.f32 %v3303, %v3415
        %v3417 = vpop.f32.mrf.mxu0
        %3418 = vmatprep.mubr.bf16.mxu0 %v2451
        %3419 = vmatmul.mubr.bf16.gmra.mxu0 %v2450
        %v3420 = vpop.f32.mrf.mxu0
        %v3421 = vadd.f32 %v3308, %v3420
        %v3422 = vpop.f32.mrf.mxu0
        %v3423 = vpop.f32.mrf.mxu0
        %v3424 = vadd.f32 %v3311, %v3423
        %v3425 = vpop.f32.mrf.mxu0
        %3426 = vdwg.mxu0
        %3427 = vmatprep.subr.bf16.mxu0 0
        %3428 = vmatpush1.bf16.msra.mxu0 %v2902
        %3429 = vmatprep.subr.bf16.mxu0 0
        %3430 = vmatpush1.bf16.msra.mxu0 %v2901
        %3431 = vmatprep.subr.bf16.mxu0 0
        %3432 = vmatpush1.bf16.msra.mxu0 %v2900
        %3433 = vmatprep.subr.bf16.mxu0 0
        %3434 = vmatpush1.bf16.msra.mxu0 %v2899
        %3435 = vmatprep.subr.bf16.mxu0 0
        %3436 = vmatpush1.bf16.msra.mxu0 %v2898
        %3437 = vmatprep.subr.bf16.mxu0 0
        %3438 = vmatpush1.bf16.msra.mxu0 %v2897
        %3439 = vmatprep.subr.bf16.mxu0 0
        %3440 = vmatpush1.bf16.msra.mxu0 %v2896
        %3441 = vmatprep.subr.bf16.mxu0 0
        %3442 = vmatpush1.bf16.msra.mxu0 %v2895
        %3443 = vmatprep.subr.bf16.mxu0 0
        %3444 = vmatpush2.bf16.msra.mxu0 0
        %3445 = vmatprep.subr.bf16.mxu0 0
        %3446 = vmatpush2.bf16.msra.mxu0 0
        %3447 = vmatprep.subr.bf16.mxu0 0
        %3448 = vmatpush2.bf16.msra.mxu0 0
        %3449 = vmatprep.subr.bf16.mxu0 0
        %3450 = vmatpush2.bf16.msra.mxu0 0
        %3451 = vmatprep.subr.bf16.mxu0 0
        %3452 = vmatpush2.bf16.msra.mxu0 0
        %3453 = vmatprep.subr.bf16.mxu0 0
        %3454 = vmatpush2.bf16.msra.mxu0 0
        %3455 = vmatprep.subr.bf16.mxu0 0
        %3456 = vmatpush2.bf16.msra.mxu0 0
        %3457 = vmatprep.subr.bf16.mxu0 0
        %3458 = vmatpush2.bf16.msra.mxu0 0
        %3459 = vmatprep.mubr.bf16.mxu0 0
        %3460 = vmatmul.mubr.bf16.gmra.mxu0 %v2371
        %v3461 = vpop.f32.mrf.mxu0
        %v3462 = vadd.f32 %v3349, %v3461
        %v3463 = vpop.f32.mrf.mxu0
        %v3464 = vpop.f32.mrf.mxu0
        %v3465 = vadd.f32 %v3352, %v3464
        %v3466 = vpop.f32.mrf.mxu0
        %3467 = vmatprep.mubr.bf16.mxu0 0
        %3468 = vmatmul.mubr.bf16.gmra.mxu0 %v2380
        %v3469 = vpop.f32.mrf.mxu0
        %v3470 = vadd.f32 %v3357, %v3469
        %v3471 = vpop.f32.mrf.mxu0
        %v3472 = vpop.f32.mrf.mxu0
        %v3473 = vadd.f32 %v3360, %v3472
        %v3474 = vpop.f32.mrf.mxu0
        %3475 = vmatprep.mubr.bf16.mxu0 0
        %3476 = vmatmul.mubr.bf16.gmra.mxu0 %v2389
        %v3477 = vpop.f32.mrf.mxu0
        %v3478 = vadd.f32 %v3365, %v3477
        %v3479 = vpop.f32.mrf.mxu0
        %v3480 = vpop.f32.mrf.mxu0
        %v3481 = vadd.f32 %v3368, %v3480
        %v3482 = vpop.f32.mrf.mxu0
        %3483 = vmatprep.mubr.bf16.mxu0 0
        %3484 = vmatmul.mubr.bf16.gmra.mxu0 %v2398
        %v3485 = vpop.f32.mrf.mxu0
        %v3486 = vadd.f32 %v3373, %v3485
        %v3487 = vpop.f32.mrf.mxu0
        %v3488 = vpop.f32.mrf.mxu0
        %v3489 = vadd.f32 %v3376, %v3488
        %v3490 = vpop.f32.mrf.mxu0
        %3491 = vmatprep.mubr.bf16.mxu0 0
        %3492 = vmatmul.mubr.bf16.gmra.mxu0 %v2407
        %v3493 = vpop.f32.mrf.mxu0
        %v3494 = vadd.f32 %v3381, %v3493
        %v3495 = vpop.f32.mrf.mxu0
        %v3496 = vpop.f32.mrf.mxu0
        %v3497 = vadd.f32 %v3384, %v3496
        %v3498 = vpop.f32.mrf.mxu0
        %3499 = vmatprep.mubr.bf16.mxu0 0
        %3500 = vmatmul.mubr.bf16.gmra.mxu0 %v2416
        %v3501 = vpop.f32.mrf.mxu0
        %v3502 = vadd.f32 %v3389, %v3501
        %v3503 = vpop.f32.mrf.mxu0
        %v3504 = vpop.f32.mrf.mxu0
        %v3505 = vadd.f32 %v3392, %v3504
        %v3506 = vpop.f32.mrf.mxu0
        %3507 = vmatprep.mubr.bf16.mxu0 0
        %3508 = vmatmul.mubr.bf16.gmra.mxu0 %v2425
        %v3509 = vpop.f32.mrf.mxu0
        %v3510 = vadd.f32 %v3397, %v3509
        %v3511 = vpop.f32.mrf.mxu0
        %v3512 = vpop.f32.mrf.mxu0
        %v3513 = vadd.f32 %v3400, %v3512
        %v3514 = vpop.f32.mrf.mxu0
        %3515 = vmatprep.mubr.bf16.mxu0 0
        %3516 = vmatmul.mubr.bf16.gmra.mxu0 %v2434
        %v3517 = vpop.f32.mrf.mxu0
        %v3518 = vadd.f32 %v3405, %v3517
        %v3519 = vpop.f32.mrf.mxu0
        %v3520 = vpop.f32.mrf.mxu0
        %v3521 = vadd.f32 %v3408, %v3520
        %v3522 = vpop.f32.mrf.mxu0
        %3523 = vmatprep.mubr.bf16.mxu0 0
        %3524 = vmatmul.mubr.bf16.gmra.mxu0 %v2443
        %v3525 = vpop.f32.mrf.mxu0
        %v3526 = vadd.f32 %v3413, %v3525
        %v3527 = vpop.f32.mrf.mxu0
        %v3528 = vpop.f32.mrf.mxu0
        %v3529 = vadd.f32 %v3416, %v3528
        %v3530 = vpop.f32.mrf.mxu0
        %3531 = vmatprep.mubr.bf16.mxu0 0
        %3532 = vmatmul.mubr.bf16.gmra.mxu0 %v2452
        %v3533 = vpop.f32.mrf.mxu0
        %v3534 = vadd.f32 %v3421, %v3533
        %v3535 = vpop.f32.mrf.mxu0
        %v3536 = vpop.f32.mrf.mxu0
        %v3537 = vadd.f32 %v3424, %v3536
        %v3538 = vpop.f32.mrf.mxu0
        %3539 = vdwg.mxu0
        %v3540 = vmax.f32 %v3462, 0.0
        %v3541 = vmax.f32 %v3465, 0.0
        %v3542 = vmax.f32 %v3470, 0.0
        %v3543 = vmax.f32 %v3473, 0.0
        %v3544 = vmax.f32 %v3478, 0.0
        %v3545 = vmax.f32 %v3481, 0.0
        %v3546 = vmax.f32 %v3486, 0.0
        %v3547 = vmax.f32 %v3489, 0.0
        %v3548 = vmax.f32 %v3494, 0.0
        %v3549 = vmax.f32 %v3497, 0.0
        %v3550 = vmax.f32 %v3502, 0.0
        %v3551 = vmax.f32 %v3505, 0.0
        %v3552 = vmax.f32 %v3510, 0.0
        %v3553 = vmax.f32 %v3513, 0.0
        %v3554 = vmax.f32 %v3518, 0.0
        %v3555 = vmax.f32 %v3521, 0.0
        %v3556 = vmax.f32 %v3526, 0.0
        %v3557 = vmax.f32 %v3529, 0.0
        %v3558 = vmax.f32 %v3534, 0.0
        %v3559 = vmax.f32 %v3537, 0.0
        %v3560 = vpack.c.bf16 %v3541, %v3540
        %v3561 = vpack.c.bf16 %v3543, %v3542
        %v3562 = vpack.c.bf16 %v3545, %v3544
        %v3563 = vpack.c.bf16 %v3547, %v3546
        %v3564 = vpack.c.bf16 %v3549, %v3548
        %v3565 = vpack.c.bf16 %v3551, %v3550
        %v3566 = vpack.c.bf16 %v3553, %v3552
        %v3567 = vpack.c.bf16 %v3555, %v3554
        %v3568 = vpack.c.bf16 %v3557, %v3556
        %v3569 = vpack.c.bf16 %v3559, %v3558
        %v3580 = vunpack.c.l.b16 %v3560
        %v3581 = vunpack.c.h.b16 %v3560
        %v3582 = vunpack.c.l.b16 %v3561
        %v3583 = vunpack.c.h.b16 %v3561
        %v3584 = vunpack.c.l.b16 %v3562
        %v3585 = vunpack.c.h.b16 %v3562
        %v3586 = vunpack.c.l.b16 %v3563
        %v3587 = vunpack.c.h.b16 %v3563
        %v3588 = vunpack.c.l.b16 %v3564
        %v3589 = vunpack.c.h.b16 %v3564
        %v3590 = vunpack.c.l.b16 %v3565
        %v3591 = vunpack.c.h.b16 %v3565
        %v3592 = vunpack.c.l.b16 %v3566
        %v3593 = vunpack.c.h.b16 %v3566
        %v3594 = vunpack.c.l.b16 %v3567
        %v3595 = vunpack.c.h.b16 %v3567
        %v3596 = vunpack.c.l.b16 %v3568
        %v3597 = vunpack.c.h.b16 %v3568
        %v3598 = vunpack.c.l.b16 %v3569
        %v3599 = vunpack.c.h.b16 %v3569
        %v3600 = vpack.c.b16 %v3580, %v3580
        %v3601 = vpack.c.b16 %v3581, %v3581
        %v3602 = vpack.c.b16 %v3582, %v3582
        %v3603 = vpack.c.b16 %v3583, %v3583
        %v3604 = vpack.c.b16 %v3584, %v3584
        %v3605 = vpack.c.b16 %v3585, %v3585
        %v3606 = vpack.c.b16 %v3586, %v3586
        %v3607 = vpack.c.b16 %v3587, %v3587
        %v3608 = vpack.c.b16 %v3588, %v3588
        %v3609 = vpack.c.b16 %v3589, %v3589
        %v3610 = vpack.c.b16 %v3590, %v3590
        %v3611 = vpack.c.b16 %v3591, %v3591
        %v3612 = vpack.c.b16 %v3592, %v3592
        %v3613 = vpack.c.b16 %v3593, %v3593
        %v3614 = vpack.c.b16 %v3594, %v3594
        %v3615 = vpack.c.b16 %v3595, %v3595
        %v3616 = vpack.c.b16 %v3596, %v3596
        %v3617 = vpack.c.b16 %v3597, %v3597
        %v3618 = vpack.c.b16 %v3598, %v3598
        %v3619 = vpack.c.b16 %v3599, %v3599
        %vm3620 = vsmask.f32 256
        %vm3621 = vsmask.f32 4368
        %vm3622 = vmor %vm3620, %vm3621
        %v3624 = vshrl.u32 %v3600, 16
        %v3626 = vrot.slane %v3624, 7
        %v3627 = vshll.u32 %v3600, 16
        %v3629 = vor.u32 %v3626, %v3627
        %v3630 = vrot.slane %v3626, 4
        %v3632 = vshrl.u32 %v3601, 16
        %v3634 = vrot.slane %v3632, 7
        %v3635 = vshll.u32 %v3601, 16
        %v3637 = vor.u32 %v3634, %v3635
        %v3638 = vsel %vm3622, %v3630, %v3637
        %v3639 = vrot.slane %v3634, 4
        %v3641 = vshrl.u32 %v3602, 16
        %v3643 = vrot.slane %v3641, 7
        %v3644 = vshll.u32 %v3602, 16
        %v3646 = vor.u32 %v3643, %v3644
        %v3647 = vrot.slane %v3643, 4
        %v3649 = vshrl.u32 %v3603, 16
        %v3651 = vrot.slane %v3649, 7
        %v3652 = vshll.u32 %v3603, 16
        %v3654 = vor.u32 %v3651, %v3652
        %v3655 = vsel %vm3622, %v3647, %v3654
        %v3656 = vrot.slane %v3651, 4
        %v3658 = vshrl.u32 %v3604, 16
        %v3660 = vrot.slane %v3658, 7
        %v3661 = vshll.u32 %v3604, 16
        %v3663 = vor.u32 %v3660, %v3661
        %v3664 = vrot.slane %v3660, 4
        %v3666 = vshrl.u32 %v3605, 16
        %v3668 = vrot.slane %v3666, 7
        %v3669 = vshll.u32 %v3605, 16
        %v3671 = vor.u32 %v3668, %v3669
        %v3672 = vsel %vm3622, %v3664, %v3671
        %v3673 = vrot.slane %v3668, 4
        %v3675 = vshrl.u32 %v3606, 16
        %v3677 = vrot.slane %v3675, 7
        %v3678 = vshll.u32 %v3606, 16
        %v3680 = vor.u32 %v3677, %v3678
        %v3681 = vrot.slane %v3677, 4
        %v3683 = vshrl.u32 %v3607, 16
        %v3685 = vrot.slane %v3683, 7
        %v3686 = vshll.u32 %v3607, 16
        %v3688 = vor.u32 %v3685, %v3686
        %v3689 = vsel %vm3622, %v3681, %v3688
        %v3690 = vrot.slane %v3685, 4
        %v3692 = vshrl.u32 %v3608, 16
        %v3694 = vrot.slane %v3692, 7
        %v3695 = vshll.u32 %v3608, 16
        %v3697 = vor.u32 %v3694, %v3695
        %v3698 = vrot.slane %v3694, 4
        %v3700 = vshrl.u32 %v3609, 16
        %v3702 = vrot.slane %v3700, 7
        %v3703 = vshll.u32 %v3609, 16
        %v3705 = vor.u32 %v3702, %v3703
        %v3706 = vsel %vm3622, %v3698, %v3705
        %v3707 = vrot.slane %v3702, 4
        %v3709 = vshrl.u32 %v3610, 16
        %v3711 = vrot.slane %v3709, 7
        %v3712 = vshll.u32 %v3610, 16
        %v3714 = vor.u32 %v3711, %v3712
        %v3715 = vrot.slane %v3711, 4
        %v3717 = vshrl.u32 %v3611, 16
        %v3719 = vrot.slane %v3717, 7
        %v3720 = vshll.u32 %v3611, 16
        %v3722 = vor.u32 %v3719, %v3720
        %v3723 = vsel %vm3622, %v3715, %v3722
        %v3724 = vrot.slane %v3719, 4
        %v3726 = vshrl.u32 %v3612, 16
        %v3728 = vrot.slane %v3726, 7
        %v3729 = vshll.u32 %v3612, 16
        %v3731 = vor.u32 %v3728, %v3729
        %v3732 = vrot.slane %v3728, 4
        %v3734 = vshrl.u32 %v3613, 16
        %v3736 = vrot.slane %v3734, 7
        %v3737 = vshll.u32 %v3613, 16
        %v3739 = vor.u32 %v3736, %v3737
        %v3740 = vsel %vm3622, %v3732, %v3739
        %v3741 = vrot.slane %v3736, 4
        %v3743 = vshrl.u32 %v3614, 16
        %v3745 = vrot.slane %v3743, 7
        %v3746 = vshll.u32 %v3614, 16
        %v3748 = vor.u32 %v3745, %v3746
        %v3749 = vrot.slane %v3745, 4
        %v3751 = vshrl.u32 %v3615, 16
        %v3753 = vrot.slane %v3751, 7
        %v3754 = vshll.u32 %v3615, 16
        %v3756 = vor.u32 %v3753, %v3754
        %v3757 = vsel %vm3622, %v3749, %v3756
        %v3758 = vrot.slane %v3753, 4
        %v3760 = vshrl.u32 %v3616, 16
        %v3762 = vrot.slane %v3760, 7
        %v3763 = vshll.u32 %v3616, 16
        %v3765 = vor.u32 %v3762, %v3763
        %v3766 = vrot.slane %v3762, 4
        %v3768 = vshrl.u32 %v3617, 16
        %v3770 = vrot.slane %v3768, 7
        %v3771 = vshll.u32 %v3617, 16
        %v3773 = vor.u32 %v3770, %v3771
        %v3774 = vsel %vm3622, %v3766, %v3773
        %v3775 = vrot.slane %v3770, 4
        %v3777 = vshrl.u32 %v3618, 16
        %v3779 = vrot.slane %v3777, 7
        %v3780 = vshll.u32 %v3618, 16
        %v3782 = vor.u32 %v3779, %v3780
        %v3783 = vrot.slane %v3779, 4
        %v3785 = vshrl.u32 %v3619, 16
        %v3787 = vrot.slane %v3785, 7
        %v3788 = vshll.u32 %v3619, 16
        %v3790 = vor.u32 %v3787, %v3788
        %v3791 = vsel %vm3622, %v3783, %v3790
        %v3792 = vrot.slane %v3787, 4
        %vm3823 = vcmask 1043456
        %vm3824 = vsmask.f32 7938
        %vm3825 = vmand %vm3823, %vm3824
        %v3826 = vld [vmem:[#allocation3] sm:$0xf]
        %v3827 = vsel %vm3825, %v3629, %v3826
        %3828 = vst [vmem:[#allocation3] sm:$0xf] %v3827
        %3829 = vst [vmem:[#allocation3 + $0x4] sm:$0xf] %v3638
        %vm3830 = vcmask 1040384
        %vm3831 = vmand %vm3830, %vm3620
        %v3832 = vld [vmem:[#allocation3 + $0x8] sm:$0x1]
        %v3833 = vsel %vm3831, %v3639, %v3832
        %3834 = vst [vmem:[#allocation3 + $0x8] sm:$0x1] %v3833
        %v3835 = vld [vmem:[#allocation3 + $0xc] sm:$0xf]
        %v3836 = vsel %vm3825, %v3646, %v3835
        %3837 = vst [vmem:[#allocation3 + $0xc] sm:$0xf] %v3836
        %3838 = vst [vmem:[#allocation3 + $0x10] sm:$0xf] %v3655
        %v3839 = vld [vmem:[#allocation3 + $0x14] sm:$0x1]
        %v3840 = vsel %vm3831, %v3656, %v3839
        %3841 = vst [vmem:[#allocation3 + $0x14] sm:$0x1] %v3840
        %v3842 = vld [vmem:[#allocation3 + $0x18] sm:$0xf]
        %v3843 = vsel %vm3825, %v3663, %v3842
        %3844 = vst [vmem:[#allocation3 + $0x18] sm:$0xf] %v3843
        %3845 = vst [vmem:[#allocation3 + $0x1c] sm:$0xf] %v3672
        %v3846 = vld [vmem:[#allocation3 + $0x20] sm:$0x1]
        %v3847 = vsel %vm3831, %v3673, %v3846
        %3848 = vst [vmem:[#allocation3 + $0x20] sm:$0x1] %v3847
        %v3849 = vld [vmem:[#allocation3 + $0x24] sm:$0xf]
        %v3850 = vsel %vm3825, %v3680, %v3849
        %3851 = vst [vmem:[#allocation3 + $0x24] sm:$0xf] %v3850
        %3852 = vst [vmem:[#allocation3 + $0x28] sm:$0xf] %v3689
        %v3853 = vld [vmem:[#allocation3 + $0x2c] sm:$0x1]
        %v3854 = vsel %vm3831, %v3690, %v3853
        %3855 = vst [vmem:[#allocation3 + $0x2c] sm:$0x1] %v3854
        %v3856 = vld [vmem:[#allocation3 + $0x30] sm:$0xf]
        %v3857 = vsel %vm3825, %v3697, %v3856
        %3858 = vst [vmem:[#allocation3 + $0x30] sm:$0xf] %v3857
        %3859 = vst [vmem:[#allocation3 + $0x34] sm:$0xf] %v3706
        %v3860 = vld [vmem:[#allocation3 + $0x38] sm:$0x1]
        %v3861 = vsel %vm3831, %v3707, %v3860
        %3862 = vst [vmem:[#allocation3 + $0x38] sm:$0x1] %v3861
        %v3863 = vld [vmem:[#allocation3 + $0x3c] sm:$0xf]
        %v3864 = vsel %vm3825, %v3714, %v3863
        %3865 = vst [vmem:[#allocation3 + $0x3c] sm:$0xf] %v3864
        %3866 = vst [vmem:[#allocation3 + $0x40] sm:$0xf] %v3723
        %v3867 = vld [vmem:[#allocation3 + $0x44] sm:$0x1]
        %v3868 = vsel %vm3831, %v3724, %v3867
        %3869 = vst [vmem:[#allocation3 + $0x44] sm:$0x1] %v3868
        %v3870 = vld [vmem:[#allocation3 + $0x48] sm:$0xf]
        %v3871 = vsel %vm3825, %v3731, %v3870
        %3872 = vst [vmem:[#allocation3 + $0x48] sm:$0xf] %v3871
        %3873 = vst [vmem:[#allocation3 + $0x4c] sm:$0xf] %v3740
        %v3874 = vld [vmem:[#allocation3 + $0x50] sm:$0x1]
        %v3875 = vsel %vm3831, %v3741, %v3874
        %3876 = vst [vmem:[#allocation3 + $0x50] sm:$0x1] %v3875
        %v3877 = vld [vmem:[#allocation3 + $0x54] sm:$0xf]
        %v3878 = vsel %vm3825, %v3748, %v3877
        %3879 = vst [vmem:[#allocation3 + $0x54] sm:$0xf] %v3878
        %3880 = vst [vmem:[#allocation3 + $0x58] sm:$0xf] %v3757
        %v3881 = vld [vmem:[#allocation3 + $0x5c] sm:$0x1]
        %v3882 = vsel %vm3831, %v3758, %v3881
        %3883 = vst [vmem:[#allocation3 + $0x5c] sm:$0x1] %v3882
        %v3884 = vld [vmem:[#allocation3 + $0x60] sm:$0xf]
        %v3885 = vsel %vm3825, %v3765, %v3884
        %3886 = vst [vmem:[#allocation3 + $0x60] sm:$0xf] %v3885
        %3887 = vst [vmem:[#allocation3 + $0x64] sm:$0xf] %v3774
        %v3888 = vld [vmem:[#allocation3 + $0x68] sm:$0x1]
        %v3889 = vsel %vm3831, %v3775, %v3888
        %3890 = vst [vmem:[#allocation3 + $0x68] sm:$0x1] %v3889
        %v3891 = vld [vmem:[#allocation3 + $0x6c] sm:$0xf]
        %v3892 = vsel %vm3825, %v3782, %v3891
        %3893 = vst [vmem:[#allocation3 + $0x6c] sm:$0xf] %v3892
        %3894 = vst [vmem:[#allocation3 + $0x70] sm:$0xf] %v3791
        %v3895 = vld [vmem:[#allocation3 + $0x74] sm:$0x1]
        %v3896 = vsel %vm3831, %v3792, %v3895
        %3897 = vst [vmem:[#allocation3 + $0x74] sm:$0x1] %v3896
        %v3898 = vld [vmem:[#allocation3] sm:$0x1]
        %v3899 = vsel %vm3831, 0, %v3898
        %3900 = vst [vmem:[#allocation3] sm:$0x1] %v3899
        %v3901 = vld [vmem:[#allocation3 + $0xc] sm:$0x1]
        %v3902 = vsel %vm3831, 0, %v3901
        %3903 = vst [vmem:[#allocation3 + $0xc] sm:$0x1] %v3902
        %v3904 = vld [vmem:[#allocation3 + $0x18] sm:$0x1]
        %v3905 = vsel %vm3831, 0, %v3904
        %3906 = vst [vmem:[#allocation3 + $0x18] sm:$0x1] %v3905
        %v3907 = vld [vmem:[#allocation3 + $0x24] sm:$0x1]
        %v3908 = vsel %vm3831, 0, %v3907
        %3909 = vst [vmem:[#allocation3 + $0x24] sm:$0x1] %v3908
        %v3910 = vld [vmem:[#allocation3 + $0x30] sm:$0x1]
        %v3911 = vsel %vm3831, 0, %v3910
        %3912 = vst [vmem:[#allocation3 + $0x30] sm:$0x1] %v3911
        %v3913 = vld [vmem:[#allocation3 + $0x3c] sm:$0x1]
        %v3914 = vsel %vm3831, 0, %v3913
        %3915 = vst [vmem:[#allocation3 + $0x3c] sm:$0x1] %v3914
        %v3916 = vld [vmem:[#allocation3 + $0x48] sm:$0x1]
        %v3917 = vsel %vm3831, 0, %v3916
        %3918 = vst [vmem:[#allocation3 + $0x48] sm:$0x1] %v3917
        %v3919 = vld [vmem:[#allocation3 + $0x54] sm:$0x1]
        %v3920 = vsel %vm3831, 0, %v3919
        %3921 = vst [vmem:[#allocation3 + $0x54] sm:$0x1] %v3920
        %v3922 = vld [vmem:[#allocation3 + $0x60] sm:$0x1]
        %v3923 = vsel %vm3831, 0, %v3922
        %3924 = vst [vmem:[#allocation3 + $0x60] sm:$0x1] %v3923
        %v3925 = vld [vmem:[#allocation3 + $0x6c] sm:$0x1]
        %v3926 = vsel %vm3831, 0, %v3925
        %3927 = vst [vmem:[#allocation3 + $0x6c] sm:$0x1] %v3926
        %vm3928 = vmand %vm3830, %vm3824
        %v3929 = vld [vmem:[#allocation3 + $0x8] sm:$0x1]
        %v3930 = vsel %vm3928, 0, %v3929
        %3931 = vst [vmem:[#allocation3 + $0x8] sm:$0x1] %v3930
        %v3932 = vld [vmem:[#allocation3 + $0x14] sm:$0x1]
        %v3933 = vsel %vm3928, 0, %v3932
        %3934 = vst [vmem:[#allocation3 + $0x14] sm:$0x1] %v3933
        %v3935 = vld [vmem:[#allocation3 + $0x20] sm:$0x1]
        %v3936 = vsel %vm3928, 0, %v3935
        %3937 = vst [vmem:[#allocation3 + $0x20] sm:$0x1] %v3936
        %v3938 = vld [vmem:[#allocation3 + $0x2c] sm:$0x1]
        %v3939 = vsel %vm3928, 0, %v3938
        %3940 = vst [vmem:[#allocation3 + $0x2c] sm:$0x1] %v3939
        %v3941 = vld [vmem:[#allocation3 + $0x38] sm:$0x1]
        %v3942 = vsel %vm3928, 0, %v3941
        %3943 = vst [vmem:[#allocation3 + $0x38] sm:$0x1] %v3942
        %v3944 = vld [vmem:[#allocation3 + $0x44] sm:$0x1]
        %v3945 = vsel %vm3928, 0, %v3944
        %3946 = vst [vmem:[#allocation3 + $0x44] sm:$0x1] %v3945
        %v3947 = vld [vmem:[#allocation3 + $0x50] sm:$0x1]
        %v3948 = vsel %vm3928, 0, %v3947
        %3949 = vst [vmem:[#allocation3 + $0x50] sm:$0x1] %v3948
        %v3950 = vld [vmem:[#allocation3 + $0x5c] sm:$0x1]
        %v3951 = vsel %vm3928, 0, %v3950
        %3952 = vst [vmem:[#allocation3 + $0x5c] sm:$0x1] %v3951
        %v3953 = vld [vmem:[#allocation3 + $0x68] sm:$0x1]
        %v3954 = vsel %vm3928, 0, %v3953
        %3955 = vst [vmem:[#allocation3 + $0x68] sm:$0x1] %v3954
        %v3956 = vld [vmem:[#allocation3 + $0x74] sm:$0x1]
        %v3957 = vsel %vm3928, 0, %v3956
        %3958 = vst [vmem:[#allocation3 + $0x74] sm:$0x1] %v3957
        %p3959 = scmp.eq.s32.totalorder %s25, 0
        // Predicated region
        $region45: #{tpu_custom_call.1} parent=39 // pred_check
          %p3960 = pneg %p3959
        $region46: #{tpu_custom_call.1} parent=39 // pred_check_branch
          %3962 = sbr.rel (%p3960) target = $region48
        $region47: #{tpu_custom_call.1} parent=39 // pred_region
          %3963 = vst [vmem:[#allocation3] sm:$0xf] 0
          %3964 = vst [vmem:[#allocation3 + $0x4] sm:$0xf] 0
          %3965 = vst [vmem:[#allocation3 + $0x8] sm:$0x1] 0
        $region48: #{tpu_custom_call.1} parent=39 // pred_fallthru
          _
        %p3966 = scmp.eq.s32.totalorder %s25, 1
        // Predicated region
        $region49: #{tpu_custom_call.1} parent=39 // pred_check
          %p3967 = pneg %p3966
        $region50: #{tpu_custom_call.1} parent=39 // pred_check_branch
          %3969 = sbr.rel (%p3967) target = $region52
        $region51: #{tpu_custom_call.1} parent=39 // pred_region
          %s3970 = scalar_lea.vmem [#allocation3], 108
          %3971 = vst [vmem:[%s3970] sm:$0xf] 0
          %3972 = vst [vmem:[%s3970 + $0x4] sm:$0xf] 0
          %3973 = vst [vmem:[%s3970 + $0x8] sm:$0x1] 0
        $region52: #{tpu_custom_call.1} parent=39 // pred_fallthru
          _
        %v3974 = vld [vmem:[#allocation3] sm:$0xf]
        %v3975 = vld [vmem:[#allocation3 + $0x4] sm:$0xf]
        %v3976 = vld [vmem:[#allocation3 + $0xc] sm:$0xf]
        %v3977 = vld [vmem:[#allocation3 + $0x10] sm:$0xf]
        %v3978 = vld [vmem:[#allocation3 + $0x18] sm:$0xf]
        %v3979 = vld [vmem:[#allocation3 + $0x1c] sm:$0xf]
        %v3980 = vld [vmem:[#allocation3 + $0x24] sm:$0xf]
        %v3981 = vld [vmem:[#allocation3 + $0x28] sm:$0xf]
        %v3982 = vld [vmem:[#allocation3 + $0x30] sm:$0xf]
        %v3983 = vld [vmem:[#allocation3 + $0x34] sm:$0xf]
        %v3984 = vld [vmem:[#allocation3 + $0x3c] sm:$0xf]
        %v3985 = vld [vmem:[#allocation3 + $0x40] sm:$0xf]
        %v3986 = vld [vmem:[#allocation3 + $0x48] sm:$0xf]
        %v3987 = vld [vmem:[#allocation3 + $0x4c] sm:$0xf]
        %v3988 = vld [vmem:[#allocation3 + $0x54] sm:$0xf]
        %v3989 = vld [vmem:[#allocation3 + $0x58] sm:$0xf]
        %3990 = vst [vmem:[#allocation4] sm:$0xf] %v3974
        %3991 = vst [vmem:[#allocation4 + $0x24] sm:$0xf] %v3975
        %3992 = vst [vmem:[#allocation4 + $0x48] sm:$0xf] %v3976
        %3993 = vst [vmem:[#allocation4 + $0x6c] sm:$0xf] %v3977
        %3994 = vst [vmem:[#allocation4 + $0x90] sm:$0xf] %v3978
        %3995 = vst [vmem:[#allocation4 + $0xb4] sm:$0xf] %v3979
        %3996 = vst [vmem:[#allocation4 + $0xd8] sm:$0xf] %v3980
        %3997 = vst [vmem:[#allocation4 + $0xfc] sm:$0xf] %v3981
        %3998 = vst [vmem:[#allocation4 + $0x120] sm:$0xf] %v3982
        %3999 = vst [vmem:[#allocation4 + $0x144] sm:$0xf] %v3983
        %4000 = vst [vmem:[#allocation4 + $0x168] sm:$0xf] %v3984
        %4001 = vst [vmem:[#allocation4 + $0x18c] sm:$0xf] %v3985
        %4002 = vst [vmem:[#allocation4 + $0x1b0] sm:$0xf] %v3986
        %4003 = vst [vmem:[#allocation4 + $0x1d4] sm:$0xf] %v3987
        %4004 = vst [vmem:[#allocation4 + $0x1f8] sm:$0xf] %v3988
        %4005 = vst [vmem:[#allocation4 + $0x21c] sm:$0xf] %v3989
        %v4006 = vld [vmem:[#allocation3] sm:$0xf]
        %v4007 = vld [vmem:[#allocation3 + $0x4] sm:$0xf]
        %v4008 = vld [vmem:[#allocation3 + $0x8] sm:$0x1]
        %v4009 = vld [vmem:[#allocation3 + $0xc] sm:$0xf]
        %v4010 = vld [vmem:[#allocation3 + $0x10] sm:$0xf]
        %v4011 = vld [vmem:[#allocation3 + $0x14] sm:$0x1]
        %v4012 = vld [vmem:[#allocation3 + $0x18] sm:$0xf]
        %v4013 = vld [vmem:[#allocation3 + $0x1c] sm:$0xf]
        %v4014 = vld [vmem:[#allocation3 + $0x20] sm:$0x1]
        %v4015 = vld [vmem:[#allocation3 + $0x24] sm:$0xf]
        %v4016 = vld [vmem:[#allocation3 + $0x28] sm:$0xf]
        %v4017 = vld [vmem:[#allocation3 + $0x2c] sm:$0x1]
        %v4018 = vld [vmem:[#allocation3 + $0x30] sm:$0xf]
        %v4019 = vld [vmem:[#allocation3 + $0x34] sm:$0xf]
        %v4020 = vld [vmem:[#allocation3 + $0x38] sm:$0x1]
        %v4021 = vld [vmem:[#allocation3 + $0x3c] sm:$0xf]
        %v4022 = vld [vmem:[#allocation3 + $0x40] sm:$0xf]
        %v4023 = vld [vmem:[#allocation3 + $0x44] sm:$0x1]
        %v4024 = vld [vmem:[#allocation3 + $0x48] sm:$0xf]
        %v4025 = vld [vmem:[#allocation3 + $0x4c] sm:$0xf]
        %v4026 = vld [vmem:[#allocation3 + $0x50] sm:$0x1]
        %v4027 = vld [vmem:[#allocation3 + $0x54] sm:$0xf]
        %v4028 = vld [vmem:[#allocation3 + $0x58] sm:$0xf]
        %v4029 = vld [vmem:[#allocation3 + $0x5c] sm:$0x1]
        %v4031 = vshrl.u32 %v4006, 16
        %v4033 = vrot.slane %v4031, 4
        %v4034 = vshll.u32 %v4006, 16
        %v4036 = vrot.slane %v4034, 5
        %v4037 = vor.u32 %v4033, %v4036
        %v4038 = vrot.slane %v4037, 4
        %v4040 = vshll.u32 %v4007, 16
        %v4042 = vrot.slane %v4040, 5
        %v4043 = vsel %vm330, %v4038, %v4042
        %v4044 = vshrl.u32 %v4007, 16
        %v4046 = vrot.slane %v4044, 4
        %v4047 = vor.u32 %v4046, %v4042
        %v4048 = vrot.slane %v4047, 4
        %v4050 = vshll.u32 %v4008, 16
        %v4052 = vrot.slane %v4050, 5
        %v4053 = vsel %vm330, %v4048, %v4052
        %v4055 = vshrl.u32 %v4009, 16
        %v4057 = vrot.slane %v4055, 4
        %v4058 = vshll.u32 %v4009, 16
        %v4060 = vrot.slane %v4058, 5
        %v4061 = vor.u32 %v4057, %v4060
        %v4062 = vrot.slane %v4061, 4
        %v4064 = vshll.u32 %v4010, 16
        %v4066 = vrot.slane %v4064, 5
        %v4067 = vsel %vm330, %v4062, %v4066
        %v4068 = vshrl.u32 %v4010, 16
        %v4070 = vrot.slane %v4068, 4
        %v4071 = vor.u32 %v4070, %v4066
        %v4072 = vrot.slane %v4071, 4
        %v4074 = vshll.u32 %v4011, 16
        %v4076 = vrot.slane %v4074, 5
        %v4077 = vsel %vm330, %v4072, %v4076
        %v4079 = vshrl.u32 %v4012, 16
        %v4081 = vrot.slane %v4079, 4
        %v4082 = vshll.u32 %v4012, 16
        %v4084 = vrot.slane %v4082, 5
        %v4085 = vor.u32 %v4081, %v4084
        %v4086 = vrot.slane %v4085, 4
        %v4088 = vshll.u32 %v4013, 16
        %v4090 = vrot.slane %v4088, 5
        %v4091 = vsel %vm330, %v4086, %v4090
        %v4092 = vshrl.u32 %v4013, 16
        %v4094 = vrot.slane %v4092, 4
        %v4095 = vor.u32 %v4094, %v4090
        %v4096 = vrot.slane %v4095, 4
        %v4098 = vshll.u32 %v4014, 16
        %v4100 = vrot.slane %v4098, 5
        %v4101 = vsel %vm330, %v4096, %v4100
        %v4103 = vshrl.u32 %v4015, 16
        %v4105 = vrot.slane %v4103, 4
        %v4106 = vshll.u32 %v4015, 16
        %v4108 = vrot.slane %v4106, 5
        %v4109 = vor.u32 %v4105, %v4108
        %v4110 = vrot.slane %v4109, 4
        %v4112 = vshll.u32 %v4016, 16
        %v4114 = vrot.slane %v4112, 5
        %v4115 = vsel %vm330, %v4110, %v4114
        %v4116 = vshrl.u32 %v4016, 16
        %v4118 = vrot.slane %v4116, 4
        %v4119 = vor.u32 %v4118, %v4114
        %v4120 = vrot.slane %v4119, 4
        %v4122 = vshll.u32 %v4017, 16
        %v4124 = vrot.slane %v4122, 5
        %v4125 = vsel %vm330, %v4120, %v4124
        %v4127 = vshrl.u32 %v4018, 16
        %v4129 = vrot.slane %v4127, 4
        %v4130 = vshll.u32 %v4018, 16
        %v4132 = vrot.slane %v4130, 5
        %v4133 = vor.u32 %v4129, %v4132
        %v4134 = vrot.slane %v4133, 4
        %v4136 = vshll.u32 %v4019, 16
        %v4138 = vrot.slane %v4136, 5
        %v4139 = vsel %vm330, %v4134, %v4138
        %v4140 = vshrl.u32 %v4019, 16
        %v4142 = vrot.slane %v4140, 4
        %v4143 = vor.u32 %v4142, %v4138
        %v4144 = vrot.slane %v4143, 4
        %v4146 = vshll.u32 %v4020, 16
        %v4148 = vrot.slane %v4146, 5
        %v4149 = vsel %vm330, %v4144, %v4148
        %v4151 = vshrl.u32 %v4021, 16
        %v4153 = vrot.slane %v4151, 4
        %v4154 = vshll.u32 %v4021, 16
        %v4156 = vrot.slane %v4154, 5
        %v4157 = vor.u32 %v4153, %v4156
        %v4158 = vrot.slane %v4157, 4
        %v4160 = vshll.u32 %v4022, 16
        %v4162 = vrot.slane %v4160, 5
        %v4163 = vsel %vm330, %v4158, %v4162
        %v4164 = vshrl.u32 %v4022, 16
        %v4166 = vrot.slane %v4164, 4
        %v4167 = vor.u32 %v4166, %v4162
        %v4168 = vrot.slane %v4167, 4
        %v4170 = vshll.u32 %v4023, 16
        %v4172 = vrot.slane %v4170, 5
        %v4173 = vsel %vm330, %v4168, %v4172
        %v4175 = vshrl.u32 %v4024, 16
        %v4177 = vrot.slane %v4175, 4
        %v4178 = vshll.u32 %v4024, 16
        %v4180 = vrot.slane %v4178, 5
        %v4181 = vor.u32 %v4177, %v4180
        %v4182 = vrot.slane %v4181, 4
        %v4184 = vshll.u32 %v4025, 16
        %v4186 = vrot.slane %v4184, 5
        %v4187 = vsel %vm330, %v4182, %v4186
        %v4188 = vshrl.u32 %v4025, 16
        %v4190 = vrot.slane %v4188, 4
        %v4191 = vor.u32 %v4190, %v4186
        %v4192 = vrot.slane %v4191, 4
        %v4194 = vshll.u32 %v4026, 16
        %v4196 = vrot.slane %v4194, 5
        %v4197 = vsel %vm330, %v4192, %v4196
        %v4199 = vshrl.u32 %v4027, 16
        %v4201 = vrot.slane %v4199, 4
        %v4202 = vshll.u32 %v4027, 16
        %v4204 = vrot.slane %v4202, 5
        %v4205 = vor.u32 %v4201, %v4204
        %v4206 = vrot.slane %v4205, 4
        %v4208 = vshll.u32 %v4028, 16
        %v4210 = vrot.slane %v4208, 5
        %v4211 = vsel %vm330, %v4206, %v4210
        %v4212 = vshrl.u32 %v4028, 16
        %v4214 = vrot.slane %v4212, 4
        %v4215 = vor.u32 %v4214, %v4210
        %v4216 = vrot.slane %v4215, 4
        %v4218 = vshll.u32 %v4029, 16
        %v4220 = vrot.slane %v4218, 5
        %v4221 = vsel %vm330, %v4216, %v4220
        %4238 = vst [vmem:[#allocation4 + $0x4] sm:$0xf] %v4043
        %4239 = vst [vmem:[#allocation4 + $0x28] sm:$0xf] %v4053
        %4240 = vst [vmem:[#allocation4 + $0x4c] sm:$0xf] %v4067
        %4241 = vst [vmem:[#allocation4 + $0x70] sm:$0xf] %v4077
        %4242 = vst [vmem:[#allocation4 + $0x94] sm:$0xf] %v4091
        %4243 = vst [vmem:[#allocation4 + $0xb8] sm:$0xf] %v4101
        %4244 = vst [vmem:[#allocation4 + $0xdc] sm:$0xf] %v4115
        %4245 = vst [vmem:[#allocation4 + $0x100] sm:$0xf] %v4125
        %4246 = vst [vmem:[#allocation4 + $0x124] sm:$0xf] %v4139
        %4247 = vst [vmem:[#allocation4 + $0x148] sm:$0xf] %v4149
        %4248 = vst [vmem:[#allocation4 + $0x16c] sm:$0xf] %v4163
        %4249 = vst [vmem:[#allocation4 + $0x190] sm:$0xf] %v4173
        %4250 = vst [vmem:[#allocation4 + $0x1b4] sm:$0xf] %v4187
        %4251 = vst [vmem:[#allocation4 + $0x1d8] sm:$0xf] %v4197
        %4252 = vst [vmem:[#allocation4 + $0x1fc] sm:$0xf] %v4211
        %4253 = vst [vmem:[#allocation4 + $0x220] sm:$0xf] %v4221
        %v4254 = vld [vmem:[#allocation3] sm:$0xe]
        %v4255 = vld [vmem:[#allocation3 + $0x4] sm:$0xf]
        %v4256 = vld [vmem:[#allocation3 + $0x8] sm:$0x1]
        %v4257 = vld [vmem:[#allocation3 + $0xc] sm:$0xe]
        %v4258 = vld [vmem:[#allocation3 + $0x10] sm:$0xf]
        %v4259 = vld [vmem:[#allocation3 + $0x14] sm:$0x1]
        %v4260 = vld [vmem:[#allocation3 + $0x18] sm:$0xe]
        %v4261 = vld [vmem:[#allocation3 + $0x1c] sm:$0xf]
        %v4262 = vld [vmem:[#allocation3 + $0x20] sm:$0x1]
        %v4263 = vld [vmem:[#allocation3 + $0x24] sm:$0xe]
        %v4264 = vld [vmem:[#allocation3 + $0x28] sm:$0xf]
        %v4265 = vld [vmem:[#allocation3 + $0x2c] sm:$0x1]
        %v4266 = vld [vmem:[#allocation3 + $0x30] sm:$0xe]
        %v4267 = vld [vmem:[#allocation3 + $0x34] sm:$0xf]
        %v4268 = vld [vmem:[#allocation3 + $0x38] sm:$0x1]
        %v4269 = vld [vmem:[#allocation3 + $0x3c] sm:$0xe]
        %v4270 = vld [vmem:[#allocation3 + $0x40] sm:$0xf]
        %v4271 = vld [vmem:[#allocation3 + $0x44] sm:$0x1]
        %v4272 = vld [vmem:[#allocation3 + $0x48] sm:$0xe]
        %v4273 = vld [vmem:[#allocation3 + $0x4c] sm:$0xf]
        %v4274 = vld [vmem:[#allocation3 + $0x50] sm:$0x1]
        %v4275 = vld [vmem:[#allocation3 + $0x54] sm:$0xe]
        %v4276 = vld [vmem:[#allocation3 + $0x58] sm:$0xf]
        %v4277 = vld [vmem:[#allocation3 + $0x5c] sm:$0x1]
        %v4302 = vrot.slane %v4254, 5
        %v4303 = vrot.slane %v4302, 4
        %v4304 = vrot.slane %v4255, 5
        %v4305 = vsel %vm673, %v4303, %v4304
        %v4306 = vrot.slane %v4304, 4
        %v4307 = vrot.slane %v4256, 5
        %v4308 = vsel %vm673, %v4306, %v4307
        %v4309 = vrot.slane %v4257, 5
        %v4310 = vrot.slane %v4309, 4
        %v4311 = vrot.slane %v4258, 5
        %v4312 = vsel %vm673, %v4310, %v4311
        %v4313 = vrot.slane %v4311, 4
        %v4314 = vrot.slane %v4259, 5
        %v4315 = vsel %vm673, %v4313, %v4314
        %v4316 = vrot.slane %v4260, 5
        %v4317 = vrot.slane %v4316, 4
        %v4318 = vrot.slane %v4261, 5
        %v4319 = vsel %vm673, %v4317, %v4318
        %v4320 = vrot.slane %v4318, 4
        %v4321 = vrot.slane %v4262, 5
        %v4322 = vsel %vm673, %v4320, %v4321
        %v4323 = vrot.slane %v4263, 5
        %v4324 = vrot.slane %v4323, 4
        %v4325 = vrot.slane %v4264, 5
        %v4326 = vsel %vm673, %v4324, %v4325
        %v4327 = vrot.slane %v4325, 4
        %v4328 = vrot.slane %v4265, 5
        %v4329 = vsel %vm673, %v4327, %v4328
        %v4330 = vrot.slane %v4266, 5
        %v4331 = vrot.slane %v4330, 4
        %v4332 = vrot.slane %v4267, 5
        %v4333 = vsel %vm673, %v4331, %v4332
        %v4334 = vrot.slane %v4332, 4
        %v4335 = vrot.slane %v4268, 5
        %v4336 = vsel %vm673, %v4334, %v4335
        %v4337 = vrot.slane %v4269, 5
        %v4338 = vrot.slane %v4337, 4
        %v4339 = vrot.slane %v4270, 5
        %v4340 = vsel %vm673, %v4338, %v4339
        %v4341 = vrot.slane %v4339, 4
        %v4342 = vrot.slane %v4271, 5
        %v4343 = vsel %vm673, %v4341, %v4342
        %v4344 = vrot.slane %v4272, 5
        %v4345 = vrot.slane %v4344, 4
        %v4346 = vrot.slane %v4273, 5
        %v4347 = vsel %vm673, %v4345, %v4346
        %v4348 = vrot.slane %v4346, 4
        %v4349 = vrot.slane %v4274, 5
        %v4350 = vsel %vm673, %v4348, %v4349
        %v4351 = vrot.slane %v4275, 5
        %v4352 = vrot.slane %v4351, 4
        %v4353 = vrot.slane %v4276, 5
        %v4354 = vsel %vm673, %v4352, %v4353
        %v4355 = vrot.slane %v4353, 4
        %v4356 = vrot.slane %v4277, 5
        %v4357 = vsel %vm673, %v4355, %v4356
        %4374 = vst [vmem:[#allocation4 + $0x8] sm:$0xf] %v4305
        %4375 = vst [vmem:[#allocation4 + $0x2c] sm:$0xf] %v4308
        %4376 = vst [vmem:[#allocation4 + $0x50] sm:$0xf] %v4312
        %4377 = vst [vmem:[#allocation4 + $0x74] sm:$0xf] %v4315
        %4378 = vst [vmem:[#allocation4 + $0x98] sm:$0xf] %v4319
        %4379 = vst [vmem:[#allocation4 + $0xbc] sm:$0xf] %v4322
        %4380 = vst [vmem:[#allocation4 + $0xe0] sm:$0xf] %v4326
        %4381 = vst [vmem:[#allocation4 + $0x104] sm:$0xf] %v4329
        %4382 = vst [vmem:[#allocation4 + $0x128] sm:$0xf] %v4333
        %4383 = vst [vmem:[#allocation4 + $0x14c] sm:$0xf] %v4336
        %4384 = vst [vmem:[#allocation4 + $0x170] sm:$0xf] %v4340
        %4385 = vst [vmem:[#allocation4 + $0x194] sm:$0xf] %v4343
        %4386 = vst [vmem:[#allocation4 + $0x1b8] sm:$0xf] %v4347
        %4387 = vst [vmem:[#allocation4 + $0x1dc] sm:$0xf] %v4350
        %4388 = vst [vmem:[#allocation4 + $0x200] sm:$0xf] %v4354
        %4389 = vst [vmem:[#allocation4 + $0x224] sm:$0xf] %v4357
        %s4390 = scalar_lea.vmem [#allocation3], 12
        %v4391 = vld [vmem:[%s4390] sm:$0xf]
        %v4392 = vld [vmem:[%s4390 + $0x4] sm:$0xf]
        %v4393 = vld [vmem:[%s4390 + $0xc] sm:$0xf]
        %v4394 = vld [vmem:[%s4390 + $0x10] sm:$0xf]
        %v4395 = vld [vmem:[%s4390 + $0x18] sm:$0xf]
        %v4396 = vld [vmem:[%s4390 + $0x1c] sm:$0xf]
        %v4397 = vld [vmem:[%s4390 + $0x24] sm:$0xf]
        %v4398 = vld [vmem:[%s4390 + $0x28] sm:$0xf]
        %v4399 = vld [vmem:[%s4390 + $0x30] sm:$0xf]
        %v4400 = vld [vmem:[%s4390 + $0x34] sm:$0xf]
        %v4401 = vld [vmem:[%s4390 + $0x3c] sm:$0xf]
        %v4402 = vld [vmem:[%s4390 + $0x40] sm:$0xf]
        %v4403 = vld [vmem:[%s4390 + $0x48] sm:$0xf]
        %v4404 = vld [vmem:[%s4390 + $0x4c] sm:$0xf]
        %v4405 = vld [vmem:[%s4390 + $0x54] sm:$0xf]
        %v4406 = vld [vmem:[%s4390 + $0x58] sm:$0xf]
        %4407 = vst [vmem:[#allocation4 + $0xc] sm:$0xf] %v4391
        %4408 = vst [vmem:[#allocation4 + $0x30] sm:$0xf] %v4392
        %4409 = vst [vmem:[#allocation4 + $0x54] sm:$0xf] %v4393
        %4410 = vst [vmem:[#allocation4 + $0x78] sm:$0xf] %v4394
        %4411 = vst [vmem:[#allocation4 + $0x9c] sm:$0xf] %v4395
        %4412 = vst [vmem:[#allocation4 + $0xc0] sm:$0xf] %v4396
        %4413 = vst [vmem:[#allocation4 + $0xe4] sm:$0xf] %v4397
        %4414 = vst [vmem:[#allocation4 + $0x108] sm:$0xf] %v4398
        %4415 = vst [vmem:[#allocation4 + $0x12c] sm:$0xf] %v4399
        %4416 = vst [vmem:[#allocation4 + $0x150] sm:$0xf] %v4400
        %4417 = vst [vmem:[#allocation4 + $0x174] sm:$0xf] %v4401
        %4418 = vst [vmem:[#allocation4 + $0x198] sm:$0xf] %v4402
        %4419 = vst [vmem:[#allocation4 + $0x1bc] sm:$0xf] %v4403
        %4420 = vst [vmem:[#allocation4 + $0x1e0] sm:$0xf] %v4404
        %4421 = vst [vmem:[#allocation4 + $0x204] sm:$0xf] %v4405
        %4422 = vst [vmem:[#allocation4 + $0x228] sm:$0xf] %v4406
        %v4423 = vld [vmem:[%s4390] sm:$0xf]
        %v4424 = vld [vmem:[%s4390 + $0x4] sm:$0xf]
        %v4425 = vld [vmem:[%s4390 + $0x8] sm:$0x1]
        %v4426 = vld [vmem:[%s4390 + $0xc] sm:$0xf]
        %v4427 = vld [vmem:[%s4390 + $0x10] sm:$0xf]
        %v4428 = vld [vmem:[%s4390 + $0x14] sm:$0x1]
        %v4429 = vld [vmem:[%s4390 + $0x18] sm:$0xf]
        %v4430 = vld [vmem:[%s4390 + $0x1c] sm:$0xf]
        %v4431 = vld [vmem:[%s4390 + $0x20] sm:$0x1]
        %v4432 = vld [vmem:[%s4390 + $0x24] sm:$0xf]
        %v4433 = vld [vmem:[%s4390 + $0x28] sm:$0xf]
        %v4434 = vld [vmem:[%s4390 + $0x2c] sm:$0x1]
        %v4435 = vld [vmem:[%s4390 + $0x30] sm:$0xf]
        %v4436 = vld [vmem:[%s4390 + $0x34] sm:$0xf]
        %v4437 = vld [vmem:[%s4390 + $0x38] sm:$0x1]
        %v4438 = vld [vmem:[%s4390 + $0x3c] sm:$0xf]
        %v4439 = vld [vmem:[%s4390 + $0x40] sm:$0xf]
        %v4440 = vld [vmem:[%s4390 + $0x44] sm:$0x1]
        %v4441 = vld [vmem:[%s4390 + $0x48] sm:$0xf]
        %v4442 = vld [vmem:[%s4390 + $0x4c] sm:$0xf]
        %v4443 = vld [vmem:[%s4390 + $0x50] sm:$0x1]
        %v4444 = vld [vmem:[%s4390 + $0x54] sm:$0xf]
        %v4445 = vld [vmem:[%s4390 + $0x58] sm:$0xf]
        %v4446 = vld [vmem:[%s4390 + $0x5c] sm:$0x1]
        %v4448 = vshrl.u32 %v4423, 16
        %v4450 = vrot.slane %v4448, 4
        %v4451 = vshll.u32 %v4423, 16
        %v4453 = vrot.slane %v4451, 5
        %v4454 = vor.u32 %v4450, %v4453
        %v4455 = vrot.slane %v4454, 4
        %v4457 = vshll.u32 %v4424, 16
        %v4459 = vrot.slane %v4457, 5
        %v4460 = vsel %vm330, %v4455, %v4459
        %v4461 = vshrl.u32 %v4424, 16
        %v4463 = vrot.slane %v4461, 4
        %v4464 = vor.u32 %v4463, %v4459
        %v4465 = vrot.slane %v4464, 4
        %v4467 = vshll.u32 %v4425, 16
        %v4469 = vrot.slane %v4467, 5
        %v4470 = vsel %vm330, %v4465, %v4469
        %v4472 = vshrl.u32 %v4426, 16
        %v4474 = vrot.slane %v4472, 4
        %v4475 = vshll.u32 %v4426, 16
        %v4477 = vrot.slane %v4475, 5
        %v4478 = vor.u32 %v4474, %v4477
        %v4479 = vrot.slane %v4478, 4
        %v4481 = vshll.u32 %v4427, 16
        %v4483 = vrot.slane %v4481, 5
        %v4484 = vsel %vm330, %v4479, %v4483
        %v4485 = vshrl.u32 %v4427, 16
        %v4487 = vrot.slane %v4485, 4
        %v4488 = vor.u32 %v4487, %v4483
        %v4489 = vrot.slane %v4488, 4
        %v4491 = vshll.u32 %v4428, 16
        %v4493 = vrot.slane %v4491, 5
        %v4494 = vsel %vm330, %v4489, %v4493
        %v4496 = vshrl.u32 %v4429, 16
        %v4498 = vrot.slane %v4496, 4
        %v4499 = vshll.u32 %v4429, 16
        %v4501 = vrot.slane %v4499, 5
        %v4502 = vor.u32 %v4498, %v4501
        %v4503 = vrot.slane %v4502, 4
        %v4505 = vshll.u32 %v4430, 16
        %v4507 = vrot.slane %v4505, 5
        %v4508 = vsel %vm330, %v4503, %v4507
        %v4509 = vshrl.u32 %v4430, 16
        %v4511 = vrot.slane %v4509, 4
        %v4512 = vor.u32 %v4511, %v4507
        %v4513 = vrot.slane %v4512, 4
        %v4515 = vshll.u32 %v4431, 16
        %v4517 = vrot.slane %v4515, 5
        %v4518 = vsel %vm330, %v4513, %v4517
        %v4520 = vshrl.u32 %v4432, 16
        %v4522 = vrot.slane %v4520, 4
        %v4523 = vshll.u32 %v4432, 16
        %v4525 = vrot.slane %v4523, 5
        %v4526 = vor.u32 %v4522, %v4525
        %v4527 = vrot.slane %v4526, 4
        %v4529 = vshll.u32 %v4433, 16
        %v4531 = vrot.slane %v4529, 5
        %v4532 = vsel %vm330, %v4527, %v4531
        %v4533 = vshrl.u32 %v4433, 16
        %v4535 = vrot.slane %v4533, 4
        %v4536 = vor.u32 %v4535, %v4531
        %v4537 = vrot.slane %v4536, 4
        %v4539 = vshll.u32 %v4434, 16
        %v4541 = vrot.slane %v4539, 5
        %v4542 = vsel %vm330, %v4537, %v4541
        %v4544 = vshrl.u32 %v4435, 16
        %v4546 = vrot.slane %v4544, 4
        %v4547 = vshll.u32 %v4435, 16
        %v4549 = vrot.slane %v4547, 5
        %v4550 = vor.u32 %v4546, %v4549
        %v4551 = vrot.slane %v4550, 4
        %v4553 = vshll.u32 %v4436, 16
        %v4555 = vrot.slane %v4553, 5
        %v4556 = vsel %vm330, %v4551, %v4555
        %v4557 = vshrl.u32 %v4436, 16
        %v4559 = vrot.slane %v4557, 4
        %v4560 = vor.u32 %v4559, %v4555
        %v4561 = vrot.slane %v4560, 4
        %v4563 = vshll.u32 %v4437, 16
        %v4565 = vrot.slane %v4563, 5
        %v4566 = vsel %vm330, %v4561, %v4565
        %v4568 = vshrl.u32 %v4438, 16
        %v4570 = vrot.slane %v4568, 4
        %v4571 = vshll.u32 %v4438, 16
        %v4573 = vrot.slane %v4571, 5
        %v4574 = vor.u32 %v4570, %v4573
        %v4575 = vrot.slane %v4574, 4
        %v4577 = vshll.u32 %v4439, 16
        %v4579 = vrot.slane %v4577, 5
        %v4580 = vsel %vm330, %v4575, %v4579
        %v4581 = vshrl.u32 %v4439, 16
        %v4583 = vrot.slane %v4581, 4
        %v4584 = vor.u32 %v4583, %v4579
        %v4585 = vrot.slane %v4584, 4
        %v4587 = vshll.u32 %v4440, 16
        %v4589 = vrot.slane %v4587, 5
        %v4590 = vsel %vm330, %v4585, %v4589
        %v4592 = vshrl.u32 %v4441, 16
        %v4594 = vrot.slane %v4592, 4
        %v4595 = vshll.u32 %v4441, 16
        %v4597 = vrot.slane %v4595, 5
        %v4598 = vor.u32 %v4594, %v4597
        %v4599 = vrot.slane %v4598, 4
        %v4601 = vshll.u32 %v4442, 16
        %v4603 = vrot.slane %v4601, 5
        %v4604 = vsel %vm330, %v4599, %v4603
        %v4605 = vshrl.u32 %v4442, 16
        %v4607 = vrot.slane %v4605, 4
        %v4608 = vor.u32 %v4607, %v4603
        %v4609 = vrot.slane %v4608, 4
        %v4611 = vshll.u32 %v4443, 16
        %v4613 = vrot.slane %v4611, 5
        %v4614 = vsel %vm330, %v4609, %v4613
        %v4616 = vshrl.u32 %v4444, 16
        %v4618 = vrot.slane %v4616, 4
        %v4619 = vshll.u32 %v4444, 16
        %v4621 = vrot.slane %v4619, 5
        %v4622 = vor.u32 %v4618, %v4621
        %v4623 = vrot.slane %v4622, 4
        %v4625 = vshll.u32 %v4445, 16
        %v4627 = vrot.slane %v4625, 5
        %v4628 = vsel %vm330, %v4623, %v4627
        %v4629 = vshrl.u32 %v4445, 16
        %v4631 = vrot.slane %v4629, 4
        %v4632 = vor.u32 %v4631, %v4627
        %v4633 = vrot.slane %v4632, 4
        %v4635 = vshll.u32 %v4446, 16
        %v4637 = vrot.slane %v4635, 5
        %v4638 = vsel %vm330, %v4633, %v4637
        %4655 = vst [vmem:[#allocation4 + $0x10] sm:$0xf] %v4460
        %4656 = vst [vmem:[#allocation4 + $0x34] sm:$0xf] %v4470
        %4657 = vst [vmem:[#allocation4 + $0x58] sm:$0xf] %v4484
        %4658 = vst [vmem:[#allocation4 + $0x7c] sm:$0xf] %v4494
        %4659 = vst [vmem:[#allocation4 + $0xa0] sm:$0xf] %v4508
        %4660 = vst [vmem:[#allocation4 + $0xc4] sm:$0xf] %v4518
        %4661 = vst [vmem:[#allocation4 + $0xe8] sm:$0xf] %v4532
        %4662 = vst [vmem:[#allocation4 + $0x10c] sm:$0xf] %v4542
        %4663 = vst [vmem:[#allocation4 + $0x130] sm:$0xf] %v4556
        %4664 = vst [vmem:[#allocation4 + $0x154] sm:$0xf] %v4566
        %4665 = vst [vmem:[#allocation4 + $0x178] sm:$0xf] %v4580
        %4666 = vst [vmem:[#allocation4 + $0x19c] sm:$0xf] %v4590
        %4667 = vst [vmem:[#allocation4 + $0x1c0] sm:$0xf] %v4604
        %4668 = vst [vmem:[#allocation4 + $0x1e4] sm:$0xf] %v4614
        %4669 = vst [vmem:[#allocation4 + $0x208] sm:$0xf] %v4628
        %4670 = vst [vmem:[#allocation4 + $0x22c] sm:$0xf] %v4638
        %v4671 = vld [vmem:[%s4390] sm:$0xe]
        %v4672 = vld [vmem:[%s4390 + $0x4] sm:$0xf]
        %v4673 = vld [vmem:[%s4390 + $0x8] sm:$0x1]
        %v4674 = vld [vmem:[%s4390 + $0xc] sm:$0xe]
        %v4675 = vld [vmem:[%s4390 + $0x10] sm:$0xf]
        %v4676 = vld [vmem:[%s4390 + $0x14] sm:$0x1]
        %v4677 = vld [vmem:[%s4390 + $0x18] sm:$0xe]
        %v4678 = vld [vmem:[%s4390 + $0x1c] sm:$0xf]
        %v4679 = vld [vmem:[%s4390 + $0x20] sm:$0x1]
        %v4680 = vld [vmem:[%s4390 + $0x24] sm:$0xe]
        %v4681 = vld [vmem:[%s4390 + $0x28] sm:$0xf]
        %v4682 = vld [vmem:[%s4390 + $0x2c] sm:$0x1]
        %v4683 = vld [vmem:[%s4390 + $0x30] sm:$0xe]
        %v4684 = vld [vmem:[%s4390 + $0x34] sm:$0xf]
        %v4685 = vld [vmem:[%s4390 + $0x38] sm:$0x1]
        %v4686 = vld [vmem:[%s4390 + $0x3c] sm:$0xe]
        %v4687 = vld [vmem:[%s4390 + $0x40] sm:$0xf]
        %v4688 = vld [vmem:[%s4390 + $0x44] sm:$0x1]
        %v4689 = vld [vmem:[%s4390 + $0x48] sm:$0xe]
        %v4690 = vld [vmem:[%s4390 + $0x4c] sm:$0xf]
        %v4691 = vld [vmem:[%s4390 + $0x50] sm:$0x1]
        %v4692 = vld [vmem:[%s4390 + $0x54] sm:$0xe]
        %v4693 = vld [vmem:[%s4390 + $0x58] sm:$0xf]
        %v4694 = vld [vmem:[%s4390 + $0x5c] sm:$0x1]
        %v4719 = vrot.slane %v4671, 5
        %v4720 = vrot.slane %v4719, 4
        %v4721 = vrot.slane %v4672, 5
        %v4722 = vsel %vm673, %v4720, %v4721
        %v4723 = vrot.slane %v4721, 4
        %v4724 = vrot.slane %v4673, 5
        %v4725 = vsel %vm673, %v4723, %v4724
        %v4726 = vrot.slane %v4674, 5
        %v4727 = vrot.slane %v4726, 4
        %v4728 = vrot.slane %v4675, 5
        %v4729 = vsel %vm673, %v4727, %v4728
        %v4730 = vrot.slane %v4728, 4
        %v4731 = vrot.slane %v4676, 5
        %v4732 = vsel %vm673, %v4730, %v4731
        %v4733 = vrot.slane %v4677, 5
        %v4734 = vrot.slane %v4733, 4
        %v4735 = vrot.slane %v4678, 5
        %v4736 = vsel %vm673, %v4734, %v4735
        %v4737 = vrot.slane %v4735, 4
        %v4738 = vrot.slane %v4679, 5
        %v4739 = vsel %vm673, %v4737, %v4738
        %v4740 = vrot.slane %v4680, 5
        %v4741 = vrot.slane %v4740, 4
        %v4742 = vrot.slane %v4681, 5
        %v4743 = vsel %vm673, %v4741, %v4742
        %v4744 = vrot.slane %v4742, 4
        %v4745 = vrot.slane %v4682, 5
        %v4746 = vsel %vm673, %v4744, %v4745
        %v4747 = vrot.slane %v4683, 5
        %v4748 = vrot.slane %v4747, 4
        %v4749 = vrot.slane %v4684, 5
        %v4750 = vsel %vm673, %v4748, %v4749
        %v4751 = vrot.slane %v4749, 4
        %v4752 = vrot.slane %v4685, 5
        %v4753 = vsel %vm673, %v4751, %v4752
        %v4754 = vrot.slane %v4686, 5
        %v4755 = vrot.slane %v4754, 4
        %v4756 = vrot.slane %v4687, 5
        %v4757 = vsel %vm673, %v4755, %v4756
        %v4758 = vrot.slane %v4756, 4
        %v4759 = vrot.slane %v4688, 5
        %v4760 = vsel %vm673, %v4758, %v4759
        %v4761 = vrot.slane %v4689, 5
        %v4762 = vrot.slane %v4761, 4
        %v4763 = vrot.slane %v4690, 5
        %v4764 = vsel %vm673, %v4762, %v4763
        %v4765 = vrot.slane %v4763, 4
        %v4766 = vrot.slane %v4691, 5
        %v4767 = vsel %vm673, %v4765, %v4766
        %v4768 = vrot.slane %v4692, 5
        %v4769 = vrot.slane %v4768, 4
        %v4770 = vrot.slane %v4693, 5
        %v4771 = vsel %vm673, %v4769, %v4770
        %v4772 = vrot.slane %v4770, 4
        %v4773 = vrot.slane %v4694, 5
        %v4774 = vsel %vm673, %v4772, %v4773
        %4791 = vst [vmem:[#allocation4 + $0x14] sm:$0xf] %v4722
        %4792 = vst [vmem:[#allocation4 + $0x38] sm:$0xf] %v4725
        %4793 = vst [vmem:[#allocation4 + $0x5c] sm:$0xf] %v4729
        %4794 = vst [vmem:[#allocation4 + $0x80] sm:$0xf] %v4732
        %4795 = vst [vmem:[#allocation4 + $0xa4] sm:$0xf] %v4736
        %4796 = vst [vmem:[#allocation4 + $0xc8] sm:$0xf] %v4739
        %4797 = vst [vmem:[#allocation4 + $0xec] sm:$0xf] %v4743
        %4798 = vst [vmem:[#allocation4 + $0x110] sm:$0xf] %v4746
        %4799 = vst [vmem:[#allocation4 + $0x134] sm:$0xf] %v4750
        %4800 = vst [vmem:[#allocation4 + $0x158] sm:$0xf] %v4753
        %4801 = vst [vmem:[#allocation4 + $0x17c] sm:$0xf] %v4757
        %4802 = vst [vmem:[#allocation4 + $0x1a0] sm:$0xf] %v4760
        %4803 = vst [vmem:[#allocation4 + $0x1c4] sm:$0xf] %v4764
        %4804 = vst [vmem:[#allocation4 + $0x1e8] sm:$0xf] %v4767
        %4805 = vst [vmem:[#allocation4 + $0x20c] sm:$0xf] %v4771
        %4806 = vst [vmem:[#allocation4 + $0x230] sm:$0xf] %v4774
        %s4807 = scalar_lea.vmem [#allocation3], 24
        %v4808 = vld [vmem:[%s4807] sm:$0xf]
        %v4809 = vld [vmem:[%s4807 + $0x4] sm:$0xf]
        %v4810 = vld [vmem:[%s4807 + $0xc] sm:$0xf]
        %v4811 = vld [vmem:[%s4807 + $0x10] sm:$0xf]
        %v4812 = vld [vmem:[%s4807 + $0x18] sm:$0xf]
        %v4813 = vld [vmem:[%s4807 + $0x1c] sm:$0xf]
        %v4814 = vld [vmem:[%s4807 + $0x24] sm:$0xf]
        %v4815 = vld [vmem:[%s4807 + $0x28] sm:$0xf]
        %v4816 = vld [vmem:[%s4807 + $0x30] sm:$0xf]
        %v4817 = vld [vmem:[%s4807 + $0x34] sm:$0xf]
        %v4818 = vld [vmem:[%s4807 + $0x3c] sm:$0xf]
        %v4819 = vld [vmem:[%s4807 + $0x40] sm:$0xf]
        %v4820 = vld [vmem:[%s4807 + $0x48] sm:$0xf]
        %v4821 = vld [vmem:[%s4807 + $0x4c] sm:$0xf]
        %v4822 = vld [vmem:[%s4807 + $0x54] sm:$0xf]
        %v4823 = vld [vmem:[%s4807 + $0x58] sm:$0xf]
        %4824 = vst [vmem:[#allocation4 + $0x18] sm:$0xf] %v4808
        %4825 = vst [vmem:[#allocation4 + $0x3c] sm:$0xf] %v4809
        %4826 = vst [vmem:[#allocation4 + $0x60] sm:$0xf] %v4810
        %4827 = vst [vmem:[#allocation4 + $0x84] sm:$0xf] %v4811
        %4828 = vst [vmem:[#allocation4 + $0xa8] sm:$0xf] %v4812
        %4829 = vst [vmem:[#allocation4 + $0xcc] sm:$0xf] %v4813
        %4830 = vst [vmem:[#allocation4 + $0xf0] sm:$0xf] %v4814
        %4831 = vst [vmem:[#allocation4 + $0x114] sm:$0xf] %v4815
        %4832 = vst [vmem:[#allocation4 + $0x138] sm:$0xf] %v4816
        %4833 = vst [vmem:[#allocation4 + $0x15c] sm:$0xf] %v4817
        %4834 = vst [vmem:[#allocation4 + $0x180] sm:$0xf] %v4818
        %4835 = vst [vmem:[#allocation4 + $0x1a4] sm:$0xf] %v4819
        %4836 = vst [vmem:[#allocation4 + $0x1c8] sm:$0xf] %v4820
        %4837 = vst [vmem:[#allocation4 + $0x1ec] sm:$0xf] %v4821
        %4838 = vst [vmem:[#allocation4 + $0x210] sm:$0xf] %v4822
        %4839 = vst [vmem:[#allocation4 + $0x234] sm:$0xf] %v4823
        %v4840 = vld [vmem:[%s4807] sm:$0xf]
        %v4841 = vld [vmem:[%s4807 + $0x4] sm:$0xf]
        %v4842 = vld [vmem:[%s4807 + $0x8] sm:$0x1]
        %v4843 = vld [vmem:[%s4807 + $0xc] sm:$0xf]
        %v4844 = vld [vmem:[%s4807 + $0x10] sm:$0xf]
        %v4845 = vld [vmem:[%s4807 + $0x14] sm:$0x1]
        %v4846 = vld [vmem:[%s4807 + $0x18] sm:$0xf]
        %v4847 = vld [vmem:[%s4807 + $0x1c] sm:$0xf]
        %v4848 = vld [vmem:[%s4807 + $0x20] sm:$0x1]
        %v4849 = vld [vmem:[%s4807 + $0x24] sm:$0xf]
        %v4850 = vld [vmem:[%s4807 + $0x28] sm:$0xf]
        %v4851 = vld [vmem:[%s4807 + $0x2c] sm:$0x1]
        %v4852 = vld [vmem:[%s4807 + $0x30] sm:$0xf]
        %v4853 = vld [vmem:[%s4807 + $0x34] sm:$0xf]
        %v4854 = vld [vmem:[%s4807 + $0x38] sm:$0x1]
        %v4855 = vld [vmem:[%s4807 + $0x3c] sm:$0xf]
        %v4856 = vld [vmem:[%s4807 + $0x40] sm:$0xf]
        %v4857 = vld [vmem:[%s4807 + $0x44] sm:$0x1]
        %v4858 = vld [vmem:[%s4807 + $0x48] sm:$0xf]
        %v4859 = vld [vmem:[%s4807 + $0x4c] sm:$0xf]
        %v4860 = vld [vmem:[%s4807 + $0x50] sm:$0x1]
        %v4861 = vld [vmem:[%s4807 + $0x54] sm:$0xf]
        %v4862 = vld [vmem:[%s4807 + $0x58] sm:$0xf]
        %v4863 = vld [vmem:[%s4807 + $0x5c] sm:$0x1]
        %v4865 = vshrl.u32 %v4840, 16
        %v4867 = vrot.slane %v4865, 4
        %v4868 = vshll.u32 %v4840, 16
        %v4870 = vrot.slane %v4868, 5
        %v4871 = vor.u32 %v4867, %v4870
        %v4872 = vrot.slane %v4871, 4
        %v4874 = vshll.u32 %v4841, 16
        %v4876 = vrot.slane %v4874, 5
        %v4877 = vsel %vm330, %v4872, %v4876
        %v4878 = vshrl.u32 %v4841, 16
        %v4880 = vrot.slane %v4878, 4
        %v4881 = vor.u32 %v4880, %v4876
        %v4882 = vrot.slane %v4881, 4
        %v4884 = vshll.u32 %v4842, 16
        %v4886 = vrot.slane %v4884, 5
        %v4887 = vsel %vm330, %v4882, %v4886
        %v4889 = vshrl.u32 %v4843, 16
        %v4891 = vrot.slane %v4889, 4
        %v4892 = vshll.u32 %v4843, 16
        %v4894 = vrot.slane %v4892, 5
        %v4895 = vor.u32 %v4891, %v4894
        %v4896 = vrot.slane %v4895, 4
        %v4898 = vshll.u32 %v4844, 16
        %v4900 = vrot.slane %v4898, 5
        %v4901 = vsel %vm330, %v4896, %v4900
        %v4902 = vshrl.u32 %v4844, 16
        %v4904 = vrot.slane %v4902, 4
        %v4905 = vor.u32 %v4904, %v4900
        %v4906 = vrot.slane %v4905, 4
        %v4908 = vshll.u32 %v4845, 16
        %v4910 = vrot.slane %v4908, 5
        %v4911 = vsel %vm330, %v4906, %v4910
        %v4913 = vshrl.u32 %v4846, 16
        %v4915 = vrot.slane %v4913, 4
        %v4916 = vshll.u32 %v4846, 16
        %v4918 = vrot.slane %v4916, 5
        %v4919 = vor.u32 %v4915, %v4918
        %v4920 = vrot.slane %v4919, 4
        %v4922 = vshll.u32 %v4847, 16
        %v4924 = vrot.slane %v4922, 5
        %v4925 = vsel %vm330, %v4920, %v4924
        %v4926 = vshrl.u32 %v4847, 16
        %v4928 = vrot.slane %v4926, 4
        %v4929 = vor.u32 %v4928, %v4924
        %v4930 = vrot.slane %v4929, 4
        %v4932 = vshll.u32 %v4848, 16
        %v4934 = vrot.slane %v4932, 5
        %v4935 = vsel %vm330, %v4930, %v4934
        %v4937 = vshrl.u32 %v4849, 16
        %v4939 = vrot.slane %v4937, 4
        %v4940 = vshll.u32 %v4849, 16
        %v4942 = vrot.slane %v4940, 5
        %v4943 = vor.u32 %v4939, %v4942
        %v4944 = vrot.slane %v4943, 4
        %v4946 = vshll.u32 %v4850, 16
        %v4948 = vrot.slane %v4946, 5
        %v4949 = vsel %vm330, %v4944, %v4948
        %v4950 = vshrl.u32 %v4850, 16
        %v4952 = vrot.slane %v4950, 4
        %v4953 = vor.u32 %v4952, %v4948
        %v4954 = vrot.slane %v4953, 4
        %v4956 = vshll.u32 %v4851, 16
        %v4958 = vrot.slane %v4956, 5
        %v4959 = vsel %vm330, %v4954, %v4958
        %v4961 = vshrl.u32 %v4852, 16
        %v4963 = vrot.slane %v4961, 4
        %v4964 = vshll.u32 %v4852, 16
        %v4966 = vrot.slane %v4964, 5
        %v4967 = vor.u32 %v4963, %v4966
        %v4968 = vrot.slane %v4967, 4
        %v4970 = vshll.u32 %v4853, 16
        %v4972 = vrot.slane %v4970, 5
        %v4973 = vsel %vm330, %v4968, %v4972
        %v4974 = vshrl.u32 %v4853, 16
        %v4976 = vrot.slane %v4974, 4
        %v4977 = vor.u32 %v4976, %v4972
        %v4978 = vrot.slane %v4977, 4
        %v4980 = vshll.u32 %v4854, 16
        %v4982 = vrot.slane %v4980, 5
        %v4983 = vsel %vm330, %v4978, %v4982
        %v4985 = vshrl.u32 %v4855, 16
        %v4987 = vrot.slane %v4985, 4
        %v4988 = vshll.u32 %v4855, 16
        %v4990 = vrot.slane %v4988, 5
        %v4991 = vor.u32 %v4987, %v4990
        %v4992 = vrot.slane %v4991, 4
        %v4994 = vshll.u32 %v4856, 16
        %v4996 = vrot.slane %v4994, 5
        %v4997 = vsel %vm330, %v4992, %v4996
        %v4998 = vshrl.u32 %v4856, 16
        %v5000 = vrot.slane %v4998, 4
        %v5001 = vor.u32 %v5000, %v4996
        %v5002 = vrot.slane %v5001, 4
        %v5004 = vshll.u32 %v4857, 16
        %v5006 = vrot.slane %v5004, 5
        %v5007 = vsel %vm330, %v5002, %v5006
        %v5009 = vshrl.u32 %v4858, 16
        %v5011 = vrot.slane %v5009, 4
        %v5012 = vshll.u32 %v4858, 16
        %v5014 = vrot.slane %v5012, 5
        %v5015 = vor.u32 %v5011, %v5014
        %v5016 = vrot.slane %v5015, 4
        %v5018 = vshll.u32 %v4859, 16
        %v5020 = vrot.slane %v5018, 5
        %v5021 = vsel %vm330, %v5016, %v5020
        %v5022 = vshrl.u32 %v4859, 16
        %v5024 = vrot.slane %v5022, 4
        %v5025 = vor.u32 %v5024, %v5020
        %v5026 = vrot.slane %v5025, 4
        %v5028 = vshll.u32 %v4860, 16
        %v5030 = vrot.slane %v5028, 5
        %v5031 = vsel %vm330, %v5026, %v5030
        %v5033 = vshrl.u32 %v4861, 16
        %v5035 = vrot.slane %v5033, 4
        %v5036 = vshll.u32 %v4861, 16
        %v5038 = vrot.slane %v5036, 5
        %v5039 = vor.u32 %v5035, %v5038
        %v5040 = vrot.slane %v5039, 4
        %v5042 = vshll.u32 %v4862, 16
        %v5044 = vrot.slane %v5042, 5
        %v5045 = vsel %vm330, %v5040, %v5044
        %v5046 = vshrl.u32 %v4862, 16
        %v5048 = vrot.slane %v5046, 4
        %v5049 = vor.u32 %v5048, %v5044
        %v5050 = vrot.slane %v5049, 4
        %v5052 = vshll.u32 %v4863, 16
        %v5054 = vrot.slane %v5052, 5
        %v5055 = vsel %vm330, %v5050, %v5054
        %5072 = vst [vmem:[#allocation4 + $0x1c] sm:$0xf] %v4877
        %5073 = vst [vmem:[#allocation4 + $0x40] sm:$0xf] %v4887
        %5074 = vst [vmem:[#allocation4 + $0x64] sm:$0xf] %v4901
        %5075 = vst [vmem:[#allocation4 + $0x88] sm:$0xf] %v4911
        %5076 = vst [vmem:[#allocation4 + $0xac] sm:$0xf] %v4925
        %5077 = vst [vmem:[#allocation4 + $0xd0] sm:$0xf] %v4935
        %5078 = vst [vmem:[#allocation4 + $0xf4] sm:$0xf] %v4949
        %5079 = vst [vmem:[#allocation4 + $0x118] sm:$0xf] %v4959
        %5080 = vst [vmem:[#allocation4 + $0x13c] sm:$0xf] %v4973
        %5081 = vst [vmem:[#allocation4 + $0x160] sm:$0xf] %v4983
        %5082 = vst [vmem:[#allocation4 + $0x184] sm:$0xf] %v4997
        %5083 = vst [vmem:[#allocation4 + $0x1a8] sm:$0xf] %v5007
        %5084 = vst [vmem:[#allocation4 + $0x1cc] sm:$0xf] %v5021
        %5085 = vst [vmem:[#allocation4 + $0x1f0] sm:$0xf] %v5031
        %5086 = vst [vmem:[#allocation4 + $0x214] sm:$0xf] %v5045
        %5087 = vst [vmem:[#allocation4 + $0x238] sm:$0xf] %v5055
        %v5088 = vld [vmem:[%s4807] sm:$0xe]
        %v5089 = vld [vmem:[%s4807 + $0x4] sm:$0xf]
        %v5090 = vld [vmem:[%s4807 + $0x8] sm:$0x1]
        %v5091 = vld [vmem:[%s4807 + $0xc] sm:$0xe]
        %v5092 = vld [vmem:[%s4807 + $0x10] sm:$0xf]
        %v5093 = vld [vmem:[%s4807 + $0x14] sm:$0x1]
        %v5094 = vld [vmem:[%s4807 + $0x18] sm:$0xe]
        %v5095 = vld [vmem:[%s4807 + $0x1c] sm:$0xf]
        %v5096 = vld [vmem:[%s4807 + $0x20] sm:$0x1]
        %v5097 = vld [vmem:[%s4807 + $0x24] sm:$0xe]
        %v5098 = vld [vmem:[%s4807 + $0x28] sm:$0xf]
        %v5099 = vld [vmem:[%s4807 + $0x2c] sm:$0x1]
        %v5100 = vld [vmem:[%s4807 + $0x30] sm:$0xe]
        %v5101 = vld [vmem:[%s4807 + $0x34] sm:$0xf]
        %v5102 = vld [vmem:[%s4807 + $0x38] sm:$0x1]
        %v5103 = vld [vmem:[%s4807 + $0x3c] sm:$0xe]
        %v5104 = vld [vmem:[%s4807 + $0x40] sm:$0xf]
        %v5105 = vld [vmem:[%s4807 + $0x44] sm:$0x1]
        %v5106 = vld [vmem:[%s4807 + $0x48] sm:$0xe]
        %v5107 = vld [vmem:[%s4807 + $0x4c] sm:$0xf]
        %v5108 = vld [vmem:[%s4807 + $0x50] sm:$0x1]
        %v5109 = vld [vmem:[%s4807 + $0x54] sm:$0xe]
        %v5110 = vld [vmem:[%s4807 + $0x58] sm:$0xf]
        %v5111 = vld [vmem:[%s4807 + $0x5c] sm:$0x1]
        %v5136 = vrot.slane %v5088, 5
        %v5137 = vrot.slane %v5136, 4
        %v5138 = vrot.slane %v5089, 5
        %v5139 = vsel %vm673, %v5137, %v5138
        %v5140 = vrot.slane %v5138, 4
        %v5141 = vrot.slane %v5090, 5
        %v5142 = vsel %vm673, %v5140, %v5141
        %v5143 = vrot.slane %v5091, 5
        %v5144 = vrot.slane %v5143, 4
        %v5145 = vrot.slane %v5092, 5
        %v5146 = vsel %vm673, %v5144, %v5145
        %v5147 = vrot.slane %v5145, 4
        %v5148 = vrot.slane %v5093, 5
        %v5149 = vsel %vm673, %v5147, %v5148
        %v5150 = vrot.slane %v5094, 5
        %v5151 = vrot.slane %v5150, 4
        %v5152 = vrot.slane %v5095, 5
        %v5153 = vsel %vm673, %v5151, %v5152
        %v5154 = vrot.slane %v5152, 4
        %v5155 = vrot.slane %v5096, 5
        %v5156 = vsel %vm673, %v5154, %v5155
        %v5157 = vrot.slane %v5097, 5
        %v5158 = vrot.slane %v5157, 4
        %v5159 = vrot.slane %v5098, 5
        %v5160 = vsel %vm673, %v5158, %v5159
        %v5161 = vrot.slane %v5159, 4
        %v5162 = vrot.slane %v5099, 5
        %v5163 = vsel %vm673, %v5161, %v5162
        %v5164 = vrot.slane %v5100, 5
        %v5165 = vrot.slane %v5164, 4
        %v5166 = vrot.slane %v5101, 5
        %v5167 = vsel %vm673, %v5165, %v5166
        %v5168 = vrot.slane %v5166, 4
        %v5169 = vrot.slane %v5102, 5
        %v5170 = vsel %vm673, %v5168, %v5169
        %v5171 = vrot.slane %v5103, 5
        %v5172 = vrot.slane %v5171, 4
        %v5173 = vrot.slane %v5104, 5
        %v5174 = vsel %vm673, %v5172, %v5173
        %v5175 = vrot.slane %v5173, 4
        %v5176 = vrot.slane %v5105, 5
        %v5177 = vsel %vm673, %v5175, %v5176
        %v5178 = vrot.slane %v5106, 5
        %v5179 = vrot.slane %v5178, 4
        %v5180 = vrot.slane %v5107, 5
        %v5181 = vsel %vm673, %v5179, %v5180
        %v5182 = vrot.slane %v5180, 4
        %v5183 = vrot.slane %v5108, 5
        %v5184 = vsel %vm673, %v5182, %v5183
        %v5185 = vrot.slane %v5109, 5
        %v5186 = vrot.slane %v5185, 4
        %v5187 = vrot.slane %v5110, 5
        %v5188 = vsel %vm673, %v5186, %v5187
        %v5189 = vrot.slane %v5187, 4
        %v5190 = vrot.slane %v5111, 5
        %v5191 = vsel %vm673, %v5189, %v5190
        %5208 = vst [vmem:[#allocation4 + $0x20] sm:$0xf] %v5139
        %5209 = vst [vmem:[#allocation4 + $0x44] sm:$0xf] %v5142
        %5210 = vst [vmem:[#allocation4 + $0x68] sm:$0xf] %v5146
        %5211 = vst [vmem:[#allocation4 + $0x8c] sm:$0xf] %v5149
        %5212 = vst [vmem:[#allocation4 + $0xb0] sm:$0xf] %v5153
        %5213 = vst [vmem:[#allocation4 + $0xd4] sm:$0xf] %v5156
        %5214 = vst [vmem:[#allocation4 + $0xf8] sm:$0xf] %v5160
        %5215 = vst [vmem:[#allocation4 + $0x11c] sm:$0xf] %v5163
        %5216 = vst [vmem:[#allocation4 + $0x140] sm:$0xf] %v5167
        %5217 = vst [vmem:[#allocation4 + $0x164] sm:$0xf] %v5170
        %5218 = vst [vmem:[#allocation4 + $0x188] sm:$0xf] %v5174
        %5219 = vst [vmem:[#allocation4 + $0x1ac] sm:$0xf] %v5177
        %5220 = vst [vmem:[#allocation4 + $0x1d0] sm:$0xf] %v5181
        %5221 = vst [vmem:[#allocation4 + $0x1f4] sm:$0xf] %v5184
        %5222 = vst [vmem:[#allocation4 + $0x218] sm:$0xf] %v5188
        %5223 = vst [vmem:[#allocation4 + $0x23c] sm:$0xf] %v5191
        %v5224 = vld [vmem:[#allocation4] sm:$0xff]
        %v5225 = vld [vmem:[#allocation4 + $0x8] sm:$0xff]
        %v5226 = vld [vmem:[#allocation4 + $0x10] sm:$0xff]
        %v5227 = vld [vmem:[#allocation4 + $0x18] sm:$0xff]
        %v5228 = vld [vmem:[#allocation4 + $0x20] sm:$0xf]
        %v5229 = vld [vmem:[#allocation4 + $0x24] sm:$0xff]
        %v5230 = vld [vmem:[#allocation4 + $0x2c] sm:$0xff]
        %v5231 = vld [vmem:[#allocation4 + $0x34] sm:$0xff]
        %v5232 = vld [vmem:[#allocation4 + $0x3c] sm:$0xff]
        %v5233 = vld [vmem:[#allocation4 + $0x44] sm:$0xf]
        %v5234 = vld [vmem:[#allocation4 + $0x48] sm:$0xff]
        %v5235 = vld [vmem:[#allocation4 + $0x50] sm:$0xff]
        %v5236 = vld [vmem:[#allocation4 + $0x58] sm:$0xff]
        %v5237 = vld [vmem:[#allocation4 + $0x60] sm:$0xff]
        %v5238 = vld [vmem:[#allocation4 + $0x68] sm:$0xf]
        %v5239 = vld [vmem:[#allocation4 + $0x6c] sm:$0xff]
        %v5240 = vld [vmem:[#allocation4 + $0x74] sm:$0xff]
        %v5241 = vld [vmem:[#allocation4 + $0x7c] sm:$0xff]
        %v5242 = vld [vmem:[#allocation4 + $0x84] sm:$0xff]
        %v5243 = vld [vmem:[#allocation4 + $0x8c] sm:$0xf]
        %v5244 = vld [vmem:[#allocation4 + $0x90] sm:$0xff]
        %v5245 = vld [vmem:[#allocation4 + $0x98] sm:$0xff]
        %v5246 = vld [vmem:[#allocation4 + $0xa0] sm:$0xff]
        %v5247 = vld [vmem:[#allocation4 + $0xa8] sm:$0xff]
        %v5248 = vld [vmem:[#allocation4 + $0xb0] sm:$0xf]
        %v5249 = vld [vmem:[#allocation4 + $0xb4] sm:$0xff]
        %v5250 = vld [vmem:[#allocation4 + $0xbc] sm:$0xff]
        %v5251 = vld [vmem:[#allocation4 + $0xc4] sm:$0xff]
        %v5252 = vld [vmem:[#allocation4 + $0xcc] sm:$0xff]
        %v5253 = vld [vmem:[#allocation4 + $0xd4] sm:$0xf]
        %v5254 = vld [vmem:[#allocation4 + $0xd8] sm:$0xff]
        %v5255 = vld [vmem:[#allocation4 + $0xe0] sm:$0xff]
        %v5256 = vld [vmem:[#allocation4 + $0xe8] sm:$0xff]
        %v5257 = vld [vmem:[#allocation4 + $0xf0] sm:$0xff]
        %v5258 = vld [vmem:[#allocation4 + $0xf8] sm:$0xf]
        %v5259 = vld [vmem:[#allocation4 + $0xfc] sm:$0xff]
        %v5260 = vld [vmem:[#allocation4 + $0x104] sm:$0xff]
        %v5261 = vld [vmem:[#allocation4 + $0x10c] sm:$0xff]
        %v5262 = vld [vmem:[#allocation4 + $0x114] sm:$0xff]
        %v5263 = vld [vmem:[#allocation4 + $0x11c] sm:$0xf]
        %v5264 = vld [vmem:[#allocation4 + $0x120] sm:$0xff]
        %v5265 = vld [vmem:[#allocation4 + $0x128] sm:$0xff]
        %v5266 = vld [vmem:[#allocation4 + $0x130] sm:$0xff]
        %v5267 = vld [vmem:[#allocation4 + $0x138] sm:$0xff]
        %v5268 = vld [vmem:[#allocation4 + $0x140] sm:$0xf]
        %v5269 = vld [vmem:[#allocation4 + $0x144] sm:$0xff]
        %v5270 = vld [vmem:[#allocation4 + $0x14c] sm:$0xff]
        %v5271 = vld [vmem:[#allocation4 + $0x154] sm:$0xff]
        %v5272 = vld [vmem:[#allocation4 + $0x15c] sm:$0xff]
        %v5273 = vld [vmem:[#allocation4 + $0x164] sm:$0xf]
        %v5274 = vld [vmem:[#allocation4 + $0x168] sm:$0xff]
        %v5275 = vld [vmem:[#allocation4 + $0x170] sm:$0xff]
        %v5276 = vld [vmem:[#allocation4 + $0x178] sm:$0xff]
        %v5277 = vld [vmem:[#allocation4 + $0x180] sm:$0xff]
        %v5278 = vld [vmem:[#allocation4 + $0x188] sm:$0xf]
        %v5279 = vld [vmem:[#allocation4 + $0x18c] sm:$0xff]
        %v5280 = vld [vmem:[#allocation4 + $0x194] sm:$0xff]
        %v5281 = vld [vmem:[#allocation4 + $0x19c] sm:$0xff]
        %v5282 = vld [vmem:[#allocation4 + $0x1a4] sm:$0xff]
        %v5283 = vld [vmem:[#allocation4 + $0x1ac] sm:$0xf]
        %v5284 = vld [vmem:[#allocation4 + $0x1b0] sm:$0xff]
        %v5285 = vld [vmem:[#allocation4 + $0x1b8] sm:$0xff]
        %v5286 = vld [vmem:[#allocation4 + $0x1c0] sm:$0xff]
        %v5287 = vld [vmem:[#allocation4 + $0x1c8] sm:$0xff]
        %v5288 = vld [vmem:[#allocation4 + $0x1d0] sm:$0xf]
        %v5289 = vld [vmem:[#allocation4 + $0x1d4] sm:$0xff]
        %v5290 = vld [vmem:[#allocation4 + $0x1dc] sm:$0xff]
        %v5291 = vld [vmem:[#allocation4 + $0x1e4] sm:$0xff]
        %v5292 = vld [vmem:[#allocation4 + $0x1ec] sm:$0xff]
        %v5293 = vld [vmem:[#allocation4 + $0x1f4] sm:$0xf]
        %v5294 = vld [vmem:[#allocation4 + $0x1f8] sm:$0xff]
        %v5295 = vld [vmem:[#allocation4 + $0x200] sm:$0xff]
        %v5296 = vld [vmem:[#allocation4 + $0x208] sm:$0xff]
        %v5297 = vld [vmem:[#allocation4 + $0x210] sm:$0xff]
        %v5298 = vld [vmem:[#allocation4 + $0x218] sm:$0xf]
        %v5299 = vld [vmem:[#allocation4 + $0x21c] sm:$0xff]
        %v5300 = vld [vmem:[#allocation4 + $0x224] sm:$0xff]
        %v5301 = vld [vmem:[#allocation4 + $0x22c] sm:$0xff]
        %v5302 = vld [vmem:[#allocation4 + $0x234] sm:$0xff]
        %v5303 = vld [vmem:[#allocation4 + $0x23c] sm:$0xf]
        %v5304 = vld [vmem:[#allocation5] sm:$0xf]
        %v5305 = vld [vmem:[#allocation5 + $0x4] sm:$0xf]
        %v5306 = vld [vmem:[#allocation5 + $0x8] sm:$0xf]
        %v5307 = vld [vmem:[#allocation5 + $0xc] sm:$0xf]
        %v5308 = vld [vmem:[#allocation5 + $0x10] sm:$0xf]
        %v5309 = vld [vmem:[#allocation5 + $0x14] sm:$0xf]
        %v5310 = vld [vmem:[#allocation5 + $0x18] sm:$0xf]
        %v5311 = vld [vmem:[#allocation5 + $0x1c] sm:$0xf]
        %v5312 = vld [vmem:[#allocation5 + $0x20] sm:$0xf]
        %v5313 = vld [vmem:[#allocation5 + $0x24] sm:$0xf]
        %v5314 = vld [vmem:[#allocation5 + $0x28] sm:$0xf]
        %v5315 = vld [vmem:[#allocation5 + $0x2c] sm:$0xf]
        %v5316 = vld [vmem:[#allocation5 + $0x30] sm:$0xf]
        %v5317 = vld [vmem:[#allocation5 + $0x34] sm:$0xf]
        %v5318 = vld [vmem:[#allocation5 + $0x38] sm:$0xf]
        %v5319 = vld [vmem:[#allocation5 + $0x3c] sm:$0xf]
        %v5320 = vld [vmem:[#allocation5 + $0x40] sm:$0xf]
        %v5321 = vld [vmem:[#allocation5 + $0x44] sm:$0xf]
        %v5322 = vld [vmem:[#allocation5 + $0x48] sm:$0xf]
        %v5323 = vld [vmem:[#allocation5 + $0x4c] sm:$0xf]
        %v5324 = vld [vmem:[#allocation5 + $0x50] sm:$0xf]
        %v5325 = vld [vmem:[#allocation5 + $0x54] sm:$0xf]
        %v5326 = vld [vmem:[#allocation5 + $0x58] sm:$0xf]
        %v5327 = vld [vmem:[#allocation5 + $0x5c] sm:$0xf]
        %v5328 = vld [vmem:[#allocation5 + $0x60] sm:$0xf]
        %v5329 = vld [vmem:[#allocation5 + $0x64] sm:$0xf]
        %v5330 = vld [vmem:[#allocation5 + $0x68] sm:$0xf]
        %v5331 = vld [vmem:[#allocation5 + $0x6c] sm:$0xf]
        %v5332 = vld [vmem:[#allocation5 + $0x70] sm:$0xf]
        %v5333 = vld [vmem:[#allocation5 + $0x74] sm:$0xf]
        %v5334 = vld [vmem:[#allocation5 + $0x78] sm:$0xf]
        %v5335 = vld [vmem:[#allocation5 + $0x7c] sm:$0xf]
        %v5336 = vld [vmem:[#allocation5 + $0x80] sm:$0xf]
        %v5337 = vld [vmem:[#allocation5 + $0x84] sm:$0xf]
        %v5338 = vld [vmem:[#allocation5 + $0x88] sm:$0xf]
        %v5339 = vld [vmem:[#allocation5 + $0x8c] sm:$0xf]
        %v5340 = vld [vmem:[#allocation5 + $0x90] sm:$0xf]
        %v5341 = vld [vmem:[#allocation5 + $0x94] sm:$0xf]
        %v5342 = vld [vmem:[#allocation5 + $0x98] sm:$0xf]
        %v5343 = vld [vmem:[#allocation5 + $0x9c] sm:$0xf]
        %v5344 = vld [vmem:[#allocation5 + $0xa0] sm:$0xf]
        %v5345 = vld [vmem:[#allocation5 + $0xa4] sm:$0xf]
        %v5346 = vld [vmem:[#allocation5 + $0xa8] sm:$0xf]
        %v5347 = vld [vmem:[#allocation5 + $0xac] sm:$0xf]
        %v5348 = vld [vmem:[#allocation5 + $0xb0] sm:$0xf]
        %v5349 = vld [vmem:[#allocation5 + $0xb4] sm:$0xf]
        %v5350 = vld [vmem:[#allocation5 + $0xb8] sm:$0xf]
        %v5351 = vld [vmem:[#allocation5 + $0xbc] sm:$0xf]
        %v5352 = vld [vmem:[#allocation5 + $0xc0] sm:$0xf]
        %v5353 = vld [vmem:[#allocation5 + $0xc4] sm:$0xf]
        %v5354 = vld [vmem:[#allocation5 + $0xc8] sm:$0xf]
        %v5355 = vld [vmem:[#allocation5 + $0xcc] sm:$0xf]
        %v5356 = vld [vmem:[#allocation5 + $0xd0] sm:$0xf]
        %v5357 = vld [vmem:[#allocation5 + $0xd4] sm:$0xf]
        %v5358 = vld [vmem:[#allocation5 + $0xd8] sm:$0xf]
        %v5359 = vld [vmem:[#allocation5 + $0xdc] sm:$0xf]
        %v5360 = vld [vmem:[#allocation5 + $0xe0] sm:$0xf]
        %v5361 = vld [vmem:[#allocation5 + $0xe4] sm:$0xf]
        %v5362 = vld [vmem:[#allocation5 + $0xe8] sm:$0xf]
        %v5363 = vld [vmem:[#allocation5 + $0xec] sm:$0xf]
        %v5364 = vld [vmem:[#allocation5 + $0xf0] sm:$0xf]
        %v5365 = vld [vmem:[#allocation5 + $0xf4] sm:$0xf]
        %v5366 = vld [vmem:[#allocation5 + $0xf8] sm:$0xf]
        %v5367 = vld [vmem:[#allocation5 + $0xfc] sm:$0xf]
        %v5368 = vld [vmem:[#allocation5 + $0x100] sm:$0xf]
        %v5369 = vld [vmem:[#allocation5 + $0x104] sm:$0xf]
        %v5370 = vld [vmem:[#allocation5 + $0x108] sm:$0xf]
        %v5371 = vld [vmem:[#allocation5 + $0x10c] sm:$0xf]
        %v5372 = vld [vmem:[#allocation5 + $0x110] sm:$0xf]
        %v5373 = vld [vmem:[#allocation5 + $0x114] sm:$0xf]
        %v5374 = vld [vmem:[#allocation5 + $0x118] sm:$0xf]
        %v5375 = vld [vmem:[#allocation5 + $0x11c] sm:$0xf]
        %v5376 = vld [vmem:[#allocation5 + $0x120] sm:$0xf]
        %v5377 = vld [vmem:[#allocation5 + $0x124] sm:$0xf]
        %v5378 = vld [vmem:[#allocation5 + $0x128] sm:$0xf]
        %v5379 = vld [vmem:[#allocation5 + $0x12c] sm:$0xf]
        %v5380 = vld [vmem:[#allocation5 + $0x130] sm:$0xf]
        %v5381 = vld [vmem:[#allocation5 + $0x134] sm:$0xf]
        %v5382 = vld [vmem:[#allocation5 + $0x138] sm:$0xf]
        %v5383 = vld [vmem:[#allocation5 + $0x13c] sm:$0xf]
        %v5384 = vld [vmem:[#allocation5 + $0x140] sm:$0xf]
        %v5385 = vld [vmem:[#allocation5 + $0x144] sm:$0xf]
        %v5386 = vld [vmem:[#allocation5 + $0x148] sm:$0xf]
        %v5387 = vld [vmem:[#allocation5 + $0x14c] sm:$0xf]
        %v5388 = vld [vmem:[#allocation5 + $0x150] sm:$0xf]
        %v5389 = vld [vmem:[#allocation5 + $0x154] sm:$0xf]
        %v5390 = vld [vmem:[#allocation5 + $0x158] sm:$0xf]
        %v5391 = vld [vmem:[#allocation5 + $0x15c] sm:$0xf]
        %v5392 = vld [vmem:[#allocation5 + $0x160] sm:$0xf]
        %v5393 = vld [vmem:[#allocation5 + $0x164] sm:$0xf]
        %v5394 = vld [vmem:[#allocation5 + $0x168] sm:$0xf]
        %v5395 = vld [vmem:[#allocation5 + $0x16c] sm:$0xf]
        %v5396 = vld [vmem:[#allocation5 + $0x170] sm:$0xf]
        %v5397 = vld [vmem:[#allocation5 + $0x174] sm:$0xf]
        %v5398 = vld [vmem:[#allocation5 + $0x178] sm:$0xf]
        %v5399 = vld [vmem:[#allocation5 + $0x17c] sm:$0xf]
        %v5400 = vld [vmem:[#allocation5 + $0x180] sm:$0xf]
        %v5401 = vld [vmem:[#allocation5 + $0x184] sm:$0xf]
        %v5402 = vld [vmem:[#allocation5 + $0x188] sm:$0xf]
        %v5403 = vld [vmem:[#allocation5 + $0x18c] sm:$0xf]
        %v5404 = vld [vmem:[#allocation5 + $0x190] sm:$0xf]
        %v5405 = vld [vmem:[#allocation5 + $0x194] sm:$0xf]
        %v5406 = vld [vmem:[#allocation5 + $0x198] sm:$0xf]
        %v5407 = vld [vmem:[#allocation5 + $0x19c] sm:$0xf]
        %v5408 = vld [vmem:[#allocation5 + $0x1a0] sm:$0xf]
        %v5409 = vld [vmem:[#allocation5 + $0x1a4] sm:$0xf]
        %v5410 = vld [vmem:[#allocation5 + $0x1a8] sm:$0xf]
        %v5411 = vld [vmem:[#allocation5 + $0x1ac] sm:$0xf]
        %v5412 = vld [vmem:[#allocation5 + $0x1b0] sm:$0xf]
        %v5413 = vld [vmem:[#allocation5 + $0x1b4] sm:$0xf]
        %v5414 = vld [vmem:[#allocation5 + $0x1b8] sm:$0xf]
        %v5415 = vld [vmem:[#allocation5 + $0x1bc] sm:$0xf]
        %v5416 = vld [vmem:[#allocation5 + $0x1c0] sm:$0xf]
        %v5417 = vld [vmem:[#allocation5 + $0x1c4] sm:$0xf]
        %v5418 = vld [vmem:[#allocation5 + $0x1c8] sm:$0xf]
        %v5419 = vld [vmem:[#allocation5 + $0x1cc] sm:$0xf]
        %v5420 = vld [vmem:[#allocation5 + $0x1d0] sm:$0xf]
        %v5421 = vld [vmem:[#allocation5 + $0x1d4] sm:$0xf]
        %v5422 = vld [vmem:[#allocation5 + $0x1d8] sm:$0xf]
        %v5423 = vld [vmem:[#allocation5 + $0x1dc] sm:$0xf]
        %v5424 = vld [vmem:[#allocation5 + $0x1e0] sm:$0xf]
        %v5425 = vld [vmem:[#allocation5 + $0x1e4] sm:$0xf]
        %v5426 = vld [vmem:[#allocation5 + $0x1e8] sm:$0xf]
        %v5427 = vld [vmem:[#allocation5 + $0x1ec] sm:$0xf]
        %v5428 = vld [vmem:[#allocation5 + $0x1f0] sm:$0xf]
        %v5429 = vld [vmem:[#allocation5 + $0x1f4] sm:$0xf]
        %v5430 = vld [vmem:[#allocation5 + $0x1f8] sm:$0xf]
        %v5431 = vld [vmem:[#allocation5 + $0x1fc] sm:$0xf]
        %v5432 = vld [vmem:[#allocation5 + $0x200] sm:$0xf]
        %v5433 = vld [vmem:[#allocation5 + $0x204] sm:$0xf]
        %v5434 = vld [vmem:[#allocation5 + $0x208] sm:$0xf]
        %v5435 = vld [vmem:[#allocation5 + $0x20c] sm:$0xf]
        %v5436 = vld [vmem:[#allocation5 + $0x210] sm:$0xf]
        %v5437 = vld [vmem:[#allocation5 + $0x214] sm:$0xf]
        %v5438 = vld [vmem:[#allocation5 + $0x218] sm:$0xf]
        %v5439 = vld [vmem:[#allocation5 + $0x21c] sm:$0xf]
        %v5440 = vld [vmem:[#allocation5 + $0x220] sm:$0xf]
        %v5441 = vld [vmem:[#allocation5 + $0x224] sm:$0xf]
        %v5442 = vld [vmem:[#allocation5 + $0x228] sm:$0xf]
        %v5443 = vld [vmem:[#allocation5 + $0x22c] sm:$0xf]
        %v5444 = vld [vmem:[#allocation5 + $0x230] sm:$0xf]
        %v5445 = vld [vmem:[#allocation5 + $0x234] sm:$0xf]
        %v5446 = vld [vmem:[#allocation5 + $0x238] sm:$0xf]
        %v5447 = vld [vmem:[#allocation5 + $0x23c] sm:$0xf]
        %v5448 = vld [vmem:[%s4] sm:$0x1]
        %v5450 = vlaneseq
        %v5451 = vshrl.u32 %v5450, 7
        %v5452 = vsub.s32 0, %v5451
        %v5453 = vrot.slane %v5448, %v5452
        %v5535 = vunpack.c.l.b16 %v5224
        %v5536 = vunpack.c.h.b16 %v5224
        %v5537 = vunpack.c.l.b16 %v5225
        %v5538 = vunpack.c.h.b16 %v5225
        %v5539 = vunpack.c.l.b16 %v5226
        %v5540 = vunpack.c.h.b16 %v5226
        %v5541 = vunpack.c.l.b16 %v5227
        %v5542 = vunpack.c.h.b16 %v5227
        %v5543 = vunpack.c.l.b16 %v5228
        %v5544 = vunpack.c.l.b16 %v5229
        %v5545 = vunpack.c.h.b16 %v5229
        %v5546 = vunpack.c.l.b16 %v5230
        %v5547 = vunpack.c.h.b16 %v5230
        %v5548 = vunpack.c.l.b16 %v5231
        %v5549 = vunpack.c.h.b16 %v5231
        %v5550 = vunpack.c.l.b16 %v5232
        %v5551 = vunpack.c.h.b16 %v5232
        %v5552 = vunpack.c.l.b16 %v5233
        %v5553 = vunpack.c.l.b16 %v5234
        %v5554 = vunpack.c.h.b16 %v5234
        %v5555 = vunpack.c.l.b16 %v5235
        %v5556 = vunpack.c.h.b16 %v5235
        %v5557 = vunpack.c.l.b16 %v5236
        %v5558 = vunpack.c.h.b16 %v5236
        %v5559 = vunpack.c.l.b16 %v5237
        %v5560 = vunpack.c.h.b16 %v5237
        %v5561 = vunpack.c.l.b16 %v5238
        %v5562 = vunpack.c.l.b16 %v5239
        %v5563 = vunpack.c.h.b16 %v5239
        %v5564 = vunpack.c.l.b16 %v5240
        %v5565 = vunpack.c.h.b16 %v5240
        %v5566 = vunpack.c.l.b16 %v5241
        %v5567 = vunpack.c.h.b16 %v5241
        %v5568 = vunpack.c.l.b16 %v5242
        %v5569 = vunpack.c.h.b16 %v5242
        %v5570 = vunpack.c.l.b16 %v5243
        %v5571 = vunpack.c.l.b16 %v5244
        %v5572 = vunpack.c.h.b16 %v5244
        %v5573 = vunpack.c.l.b16 %v5245
        %v5574 = vunpack.c.h.b16 %v5245
        %v5575 = vunpack.c.l.b16 %v5246
        %v5576 = vunpack.c.h.b16 %v5246
        %v5577 = vunpack.c.l.b16 %v5247
        %v5578 = vunpack.c.h.b16 %v5247
        %v5579 = vunpack.c.l.b16 %v5248
        %v5580 = vunpack.c.l.b16 %v5249
        %v5581 = vunpack.c.h.b16 %v5249
        %v5582 = vunpack.c.l.b16 %v5250
        %v5583 = vunpack.c.h.b16 %v5250
        %v5584 = vunpack.c.l.b16 %v5251
        %v5585 = vunpack.c.h.b16 %v5251
        %v5586 = vunpack.c.l.b16 %v5252
        %v5587 = vunpack.c.h.b16 %v5252
        %v5588 = vunpack.c.l.b16 %v5253
        %v5589 = vunpack.c.l.b16 %v5254
        %v5590 = vunpack.c.h.b16 %v5254
        %v5591 = vunpack.c.l.b16 %v5255
        %v5592 = vunpack.c.h.b16 %v5255
        %v5593 = vunpack.c.l.b16 %v5256
        %v5594 = vunpack.c.h.b16 %v5256
        %v5595 = vunpack.c.l.b16 %v5257
        %v5596 = vunpack.c.h.b16 %v5257
        %v5597 = vunpack.c.l.b16 %v5258
        %v5598 = vunpack.c.l.b16 %v5259
        %v5599 = vunpack.c.h.b16 %v5259
        %v5600 = vunpack.c.l.b16 %v5260
        %v5601 = vunpack.c.h.b16 %v5260
        %v5602 = vunpack.c.l.b16 %v5261
        %v5603 = vunpack.c.h.b16 %v5261
        %v5604 = vunpack.c.l.b16 %v5262
        %v5605 = vunpack.c.h.b16 %v5262
        %v5606 = vunpack.c.l.b16 %v5263
        %v5607 = vunpack.c.l.b16 %v5264
        %v5608 = vunpack.c.h.b16 %v5264
        %v5609 = vunpack.c.l.b16 %v5265
        %v5610 = vunpack.c.h.b16 %v5265
        %v5611 = vunpack.c.l.b16 %v5266
        %v5612 = vunpack.c.h.b16 %v5266
        %v5613 = vunpack.c.l.b16 %v5267
        %v5614 = vunpack.c.h.b16 %v5267
        %v5615 = vunpack.c.l.b16 %v5268
        %v5616 = vunpack.c.l.b16 %v5269
        %v5617 = vunpack.c.h.b16 %v5269
        %v5618 = vunpack.c.l.b16 %v5270
        %v5619 = vunpack.c.h.b16 %v5270
        %v5620 = vunpack.c.l.b16 %v5271
        %v5621 = vunpack.c.h.b16 %v5271
        %v5622 = vunpack.c.l.b16 %v5272
        %v5623 = vunpack.c.h.b16 %v5272
        %v5624 = vunpack.c.l.b16 %v5273
        %v5625 = vunpack.c.l.b16 %v5274
        %v5626 = vunpack.c.h.b16 %v5274
        %v5627 = vunpack.c.l.b16 %v5275
        %v5628 = vunpack.c.h.b16 %v5275
        %v5629 = vunpack.c.l.b16 %v5276
        %v5630 = vunpack.c.h.b16 %v5276
        %v5631 = vunpack.c.l.b16 %v5277
        %v5632 = vunpack.c.h.b16 %v5277
        %v5633 = vunpack.c.l.b16 %v5278
        %v5634 = vunpack.c.l.b16 %v5279
        %v5635 = vunpack.c.h.b16 %v5279
        %v5636 = vunpack.c.l.b16 %v5280
        %v5637 = vunpack.c.h.b16 %v5280
        %v5638 = vunpack.c.l.b16 %v5281
        %v5639 = vunpack.c.h.b16 %v5281
        %v5640 = vunpack.c.l.b16 %v5282
        %v5641 = vunpack.c.h.b16 %v5282
        %v5642 = vunpack.c.l.b16 %v5283
        %v5643 = vunpack.c.l.b16 %v5284
        %v5644 = vunpack.c.h.b16 %v5284
        %v5645 = vunpack.c.l.b16 %v5285
        %v5646 = vunpack.c.h.b16 %v5285
        %v5647 = vunpack.c.l.b16 %v5286
        %v5648 = vunpack.c.h.b16 %v5286
        %v5649 = vunpack.c.l.b16 %v5287
        %v5650 = vunpack.c.h.b16 %v5287
        %v5651 = vunpack.c.l.b16 %v5288
        %v5652 = vunpack.c.l.b16 %v5289
        %v5653 = vunpack.c.h.b16 %v5289
        %v5654 = vunpack.c.l.b16 %v5290
        %v5655 = vunpack.c.h.b16 %v5290
        %v5656 = vunpack.c.l.b16 %v5291
        %v5657 = vunpack.c.h.b16 %v5291
        %v5658 = vunpack.c.l.b16 %v5292
        %v5659 = vunpack.c.h.b16 %v5292
        %v5660 = vunpack.c.l.b16 %v5293
        %v5661 = vunpack.c.l.b16 %v5294
        %v5662 = vunpack.c.h.b16 %v5294
        %v5663 = vunpack.c.l.b16 %v5295
        %v5664 = vunpack.c.h.b16 %v5295
        %v5665 = vunpack.c.l.b16 %v5296
        %v5666 = vunpack.c.h.b16 %v5296
        %v5667 = vunpack.c.l.b16 %v5297
        %v5668 = vunpack.c.h.b16 %v5297
        %v5669 = vunpack.c.l.b16 %v5298
        %v5670 = vunpack.c.l.b16 %v5299
        %v5671 = vunpack.c.h.b16 %v5299
        %v5672 = vunpack.c.l.b16 %v5300
        %v5673 = vunpack.c.h.b16 %v5300
        %v5674 = vunpack.c.l.b16 %v5301
        %v5675 = vunpack.c.h.b16 %v5301
        %v5676 = vunpack.c.l.b16 %v5302
        %v5677 = vunpack.c.h.b16 %v5302
        %v5678 = vunpack.c.l.b16 %v5303
        %v5679 = vpack.c.b16 %v5544, %v5535
        %v5680 = vpack.c.b16 %v5545, %v5536
        %v5681 = vpack.c.b16 %v5546, %v5537
        %v5682 = vpack.c.b16 %v5547, %v5538
        %v5683 = vpack.c.b16 %v5548, %v5539
        %v5684 = vpack.c.b16 %v5549, %v5540
        %v5685 = vpack.c.b16 %v5550, %v5541
        %v5686 = vpack.c.b16 %v5551, %v5542
        %v5687 = vpack.c.b16 %v5552, %v5543
        %v5688 = vpack.c.b16 %v5562, %v5553
        %v5689 = vpack.c.b16 %v5563, %v5554
        %v5690 = vpack.c.b16 %v5564, %v5555
        %v5691 = vpack.c.b16 %v5565, %v5556
        %v5692 = vpack.c.b16 %v5566, %v5557
        %v5693 = vpack.c.b16 %v5567, %v5558
        %v5694 = vpack.c.b16 %v5568, %v5559
        %v5695 = vpack.c.b16 %v5569, %v5560
        %v5696 = vpack.c.b16 %v5570, %v5561
        %v5697 = vpack.c.b16 %v5580, %v5571
        %v5698 = vpack.c.b16 %v5581, %v5572
        %v5699 = vpack.c.b16 %v5582, %v5573
        %v5700 = vpack.c.b16 %v5583, %v5574
        %v5701 = vpack.c.b16 %v5584, %v5575
        %v5702 = vpack.c.b16 %v5585, %v5576
        %v5703 = vpack.c.b16 %v5586, %v5577
        %v5704 = vpack.c.b16 %v5587, %v5578
        %v5705 = vpack.c.b16 %v5588, %v5579
        %v5706 = vpack.c.b16 %v5598, %v5589
        %v5707 = vpack.c.b16 %v5599, %v5590
        %v5708 = vpack.c.b16 %v5600, %v5591
        %v5709 = vpack.c.b16 %v5601, %v5592
        %v5710 = vpack.c.b16 %v5602, %v5593
        %v5711 = vpack.c.b16 %v5603, %v5594
        %v5712 = vpack.c.b16 %v5604, %v5595
        %v5713 = vpack.c.b16 %v5605, %v5596
        %v5714 = vpack.c.b16 %v5606, %v5597
        %v5715 = vpack.c.b16 %v5616, %v5607
        %v5716 = vpack.c.b16 %v5617, %v5608
        %v5717 = vpack.c.b16 %v5618, %v5609
        %v5718 = vpack.c.b16 %v5619, %v5610
        %v5719 = vpack.c.b16 %v5620, %v5611
        %v5720 = vpack.c.b16 %v5621, %v5612
        %v5721 = vpack.c.b16 %v5622, %v5613
        %v5722 = vpack.c.b16 %v5623, %v5614
        %v5723 = vpack.c.b16 %v5624, %v5615
        %v5724 = vpack.c.b16 %v5634, %v5625
        %v5725 = vpack.c.b16 %v5635, %v5626
        %v5726 = vpack.c.b16 %v5636, %v5627
        %v5727 = vpack.c.b16 %v5637, %v5628
        %v5728 = vpack.c.b16 %v5638, %v5629
        %v5729 = vpack.c.b16 %v5639, %v5630
        %v5730 = vpack.c.b16 %v5640, %v5631
        %v5731 = vpack.c.b16 %v5641, %v5632
        %v5732 = vpack.c.b16 %v5642, %v5633
        %v5733 = vpack.c.b16 %v5652, %v5643
        %v5734 = vpack.c.b16 %v5653, %v5644
        %v5735 = vpack.c.b16 %v5654, %v5645
        %v5736 = vpack.c.b16 %v5655, %v5646
        %v5737 = vpack.c.b16 %v5656, %v5647
        %v5738 = vpack.c.b16 %v5657, %v5648
        %v5739 = vpack.c.b16 %v5658, %v5649
        %v5740 = vpack.c.b16 %v5659, %v5650
        %v5741 = vpack.c.b16 %v5660, %v5651
        %v5742 = vpack.c.b16 %v5670, %v5661
        %v5743 = vpack.c.b16 %v5671, %v5662
        %v5744 = vpack.c.b16 %v5672, %v5663
        %v5745 = vpack.c.b16 %v5673, %v5664
        %v5746 = vpack.c.b16 %v5674, %v5665
        %v5747 = vpack.c.b16 %v5675, %v5666
        %v5748 = vpack.c.b16 %v5676, %v5667
        %v5749 = vpack.c.b16 %v5677, %v5668
        %v5750 = vpack.c.b16 %v5678, %v5669
        %v5967 = vunpack.c.l.b16 %v5304
        %v5968 = vunpack.c.l.b16 %v5305
        %v5969 = vunpack.c.l.b16 %v5306
        %v5970 = vunpack.c.l.b16 %v5307
        %v5971 = vunpack.c.l.b16 %v5308
        %v5972 = vunpack.c.l.b16 %v5309
        %v5973 = vunpack.c.l.b16 %v5310
        %v5974 = vunpack.c.l.b16 %v5311
        %v5975 = vunpack.c.l.b16 %v5312
        %v5976 = vunpack.c.l.b16 %v5313
        %v5977 = vunpack.c.l.b16 %v5314
        %v5978 = vunpack.c.l.b16 %v5315
        %v5979 = vunpack.c.l.b16 %v5316
        %v5980 = vunpack.c.l.b16 %v5317
        %v5981 = vunpack.c.l.b16 %v5318
        %v5982 = vunpack.c.l.b16 %v5319
        %v5983 = vunpack.c.l.b16 %v5320
        %v5984 = vunpack.c.l.b16 %v5321
        %v5985 = vunpack.c.l.b16 %v5322
        %v5986 = vunpack.c.l.b16 %v5323
        %v5987 = vunpack.c.l.b16 %v5324
        %v5988 = vunpack.c.l.b16 %v5325
        %v5989 = vunpack.c.l.b16 %v5326
        %v5990 = vunpack.c.l.b16 %v5327
        %v5991 = vunpack.c.l.b16 %v5328
        %v5992 = vunpack.c.l.b16 %v5329
        %v5993 = vunpack.c.l.b16 %v5330
        %v5994 = vunpack.c.l.b16 %v5331
        %v5995 = vunpack.c.l.b16 %v5332
        %v5996 = vunpack.c.l.b16 %v5333
        %v5997 = vunpack.c.l.b16 %v5334
        %v5998 = vunpack.c.l.b16 %v5335
        %v5999 = vunpack.c.l.b16 %v5336
        %v6000 = vunpack.c.l.b16 %v5337
        %v6001 = vunpack.c.l.b16 %v5338
        %v6002 = vunpack.c.l.b16 %v5339
        %v6003 = vunpack.c.l.b16 %v5340
        %v6004 = vunpack.c.l.b16 %v5341
        %v6005 = vunpack.c.l.b16 %v5342
        %v6006 = vunpack.c.l.b16 %v5343
        %v6007 = vunpack.c.l.b16 %v5344
        %v6008 = vunpack.c.l.b16 %v5345
        %v6009 = vunpack.c.l.b16 %v5346
        %v6010 = vunpack.c.l.b16 %v5347
        %v6011 = vunpack.c.l.b16 %v5348
        %v6012 = vunpack.c.l.b16 %v5349
        %v6013 = vunpack.c.l.b16 %v5350
        %v6014 = vunpack.c.l.b16 %v5351
        %v6015 = vunpack.c.l.b16 %v5352
        %v6016 = vunpack.c.l.b16 %v5353
        %v6017 = vunpack.c.l.b16 %v5354
        %v6018 = vunpack.c.l.b16 %v5355
        %v6019 = vunpack.c.l.b16 %v5356
        %v6020 = vunpack.c.l.b16 %v5357
        %v6021 = vunpack.c.l.b16 %v5358
        %v6022 = vunpack.c.l.b16 %v5359
        %v6023 = vunpack.c.l.b16 %v5360
        %v6024 = vunpack.c.l.b16 %v5361
        %v6025 = vunpack.c.l.b16 %v5362
        %v6026 = vunpack.c.l.b16 %v5363
        %v6027 = vunpack.c.l.b16 %v5364
        %v6028 = vunpack.c.l.b16 %v5365
        %v6029 = vunpack.c.l.b16 %v5366
        %v6030 = vunpack.c.l.b16 %v5367
        %v6031 = vunpack.c.l.b16 %v5368
        %v6032 = vunpack.c.l.b16 %v5369
        %v6033 = vunpack.c.l.b16 %v5370
        %v6034 = vunpack.c.l.b16 %v5371
        %v6035 = vunpack.c.l.b16 %v5372
        %v6036 = vunpack.c.l.b16 %v5373
        %v6037 = vunpack.c.l.b16 %v5374
        %v6038 = vunpack.c.l.b16 %v5375
        %v6039 = vunpack.c.l.b16 %v5376
        %v6040 = vunpack.c.l.b16 %v5377
        %v6041 = vunpack.c.l.b16 %v5378
        %v6042 = vunpack.c.l.b16 %v5379
        %v6043 = vunpack.c.l.b16 %v5380
        %v6044 = vunpack.c.l.b16 %v5381
        %v6045 = vunpack.c.l.b16 %v5382
        %v6046 = vunpack.c.l.b16 %v5383
        %v6047 = vunpack.c.l.b16 %v5384
        %v6048 = vunpack.c.l.b16 %v5385
        %v6049 = vunpack.c.l.b16 %v5386
        %v6050 = vunpack.c.l.b16 %v5387
        %v6051 = vunpack.c.l.b16 %v5388
        %v6052 = vunpack.c.l.b16 %v5389
        %v6053 = vunpack.c.l.b16 %v5390
        %v6054 = vunpack.c.l.b16 %v5391
        %v6055 = vunpack.c.l.b16 %v5392
        %v6056 = vunpack.c.l.b16 %v5393
        %v6057 = vunpack.c.l.b16 %v5394
        %v6058 = vunpack.c.l.b16 %v5395
        %v6059 = vunpack.c.l.b16 %v5396
        %v6060 = vunpack.c.l.b16 %v5397
        %v6061 = vunpack.c.l.b16 %v5398
        %v6062 = vunpack.c.l.b16 %v5399
        %v6063 = vunpack.c.l.b16 %v5400
        %v6064 = vunpack.c.l.b16 %v5401
        %v6065 = vunpack.c.l.b16 %v5402
        %v6066 = vunpack.c.l.b16 %v5403
        %v6067 = vunpack.c.l.b16 %v5404
        %v6068 = vunpack.c.l.b16 %v5405
        %v6069 = vunpack.c.l.b16 %v5406
        %v6070 = vunpack.c.l.b16 %v5407
        %v6071 = vunpack.c.l.b16 %v5408
        %v6072 = vunpack.c.l.b16 %v5409
        %v6073 = vunpack.c.l.b16 %v5410
        %v6074 = vunpack.c.l.b16 %v5411
        %v6075 = vunpack.c.l.b16 %v5412
        %v6076 = vunpack.c.l.b16 %v5413
        %v6077 = vunpack.c.l.b16 %v5414
        %v6078 = vunpack.c.l.b16 %v5415
        %v6079 = vunpack.c.l.b16 %v5416
        %v6080 = vunpack.c.l.b16 %v5417
        %v6081 = vunpack.c.l.b16 %v5418
        %v6082 = vunpack.c.l.b16 %v5419
        %v6083 = vunpack.c.l.b16 %v5420
        %v6084 = vunpack.c.l.b16 %v5421
        %v6085 = vunpack.c.l.b16 %v5422
        %v6086 = vunpack.c.l.b16 %v5423
        %v6087 = vunpack.c.l.b16 %v5424
        %v6088 = vunpack.c.l.b16 %v5425
        %v6089 = vunpack.c.l.b16 %v5426
        %v6090 = vunpack.c.l.b16 %v5427
        %v6091 = vunpack.c.l.b16 %v5428
        %v6092 = vunpack.c.l.b16 %v5429
        %v6093 = vunpack.c.l.b16 %v5430
        %v6094 = vunpack.c.l.b16 %v5431
        %v6095 = vunpack.c.l.b16 %v5432
        %v6096 = vunpack.c.l.b16 %v5433
        %v6097 = vunpack.c.l.b16 %v5434
        %v6098 = vunpack.c.l.b16 %v5435
        %v6099 = vunpack.c.l.b16 %v5436
        %v6100 = vunpack.c.l.b16 %v5437
        %v6101 = vunpack.c.l.b16 %v5438
        %v6102 = vunpack.c.l.b16 %v5439
        %v6103 = vunpack.c.l.b16 %v5440
        %v6104 = vunpack.c.l.b16 %v5441
        %v6105 = vunpack.c.l.b16 %v5442
        %v6106 = vunpack.c.l.b16 %v5443
        %v6107 = vunpack.c.l.b16 %v5444
        %v6108 = vunpack.c.l.b16 %v5445
        %v6109 = vunpack.c.l.b16 %v5446
        %v6110 = vunpack.c.l.b16 %v5447
        %v6111 = vpack.c.b16 %v5968, %v5967
        %v6112 = vpack.c.b16 %v5970, %v5969
        %v6113 = vpack.c.b16 %v5972, %v5971
        %v6114 = vpack.c.b16 %v5974, %v5973
        %v6115 = vpack.c.b16 %v5976, %v5975
        %v6116 = vpack.c.b16 %v5978, %v5977
        %v6117 = vpack.c.b16 %v5980, %v5979
        %v6118 = vpack.c.b16 %v5982, %v5981
        %v6119 = vpack.c.b16 %v5984, %v5983
        %v6120 = vpack.c.b16 %v5986, %v5985
        %v6121 = vpack.c.b16 %v5988, %v5987
        %v6122 = vpack.c.b16 %v5990, %v5989
        %v6123 = vpack.c.b16 %v5992, %v5991
        %v6124 = vpack.c.b16 %v5994, %v5993
        %v6125 = vpack.c.b16 %v5996, %v5995
        %v6126 = vpack.c.b16 %v5998, %v5997
        %v6127 = vpack.c.b16 %v6000, %v5999
        %v6128 = vpack.c.b16 %v6002, %v6001
        %v6129 = vpack.c.b16 %v6004, %v6003
        %v6130 = vpack.c.b16 %v6006, %v6005
        %v6131 = vpack.c.b16 %v6008, %v6007
        %v6132 = vpack.c.b16 %v6010, %v6009
        %v6133 = vpack.c.b16 %v6012, %v6011
        %v6134 = vpack.c.b16 %v6014, %v6013
        %v6135 = vpack.c.b16 %v6016, %v6015
        %v6136 = vpack.c.b16 %v6018, %v6017
        %v6137 = vpack.c.b16 %v6020, %v6019
        %v6138 = vpack.c.b16 %v6022, %v6021
        %v6139 = vpack.c.b16 %v6024, %v6023
        %v6140 = vpack.c.b16 %v6026, %v6025
        %v6141 = vpack.c.b16 %v6028, %v6027
        %v6142 = vpack.c.b16 %v6030, %v6029
        %v6143 = vpack.c.b16 %v6032, %v6031
        %v6144 = vpack.c.b16 %v6034, %v6033
        %v6145 = vpack.c.b16 %v6036, %v6035
        %v6146 = vpack.c.b16 %v6038, %v6037
        %v6147 = vpack.c.b16 %v6040, %v6039
        %v6148 = vpack.c.b16 %v6042, %v6041
        %v6149 = vpack.c.b16 %v6044, %v6043
        %v6150 = vpack.c.b16 %v6046, %v6045
        %v6151 = vpack.c.b16 %v6048, %v6047
        %v6152 = vpack.c.b16 %v6050, %v6049
        %v6153 = vpack.c.b16 %v6052, %v6051
        %v6154 = vpack.c.b16 %v6054, %v6053
        %v6155 = vpack.c.b16 %v6056, %v6055
        %v6156 = vpack.c.b16 %v6058, %v6057
        %v6157 = vpack.c.b16 %v6060, %v6059
        %v6158 = vpack.c.b16 %v6062, %v6061
        %v6159 = vpack.c.b16 %v6064, %v6063
        %v6160 = vpack.c.b16 %v6066, %v6065
        %v6161 = vpack.c.b16 %v6068, %v6067
        %v6162 = vpack.c.b16 %v6070, %v6069
        %v6163 = vpack.c.b16 %v6072, %v6071
        %v6164 = vpack.c.b16 %v6074, %v6073
        %v6165 = vpack.c.b16 %v6076, %v6075
        %v6166 = vpack.c.b16 %v6078, %v6077
        %v6167 = vpack.c.b16 %v6080, %v6079
        %v6168 = vpack.c.b16 %v6082, %v6081
        %v6169 = vpack.c.b16 %v6084, %v6083
        %v6170 = vpack.c.b16 %v6086, %v6085
        %v6171 = vpack.c.b16 %v6088, %v6087
        %v6172 = vpack.c.b16 %v6090, %v6089
        %v6173 = vpack.c.b16 %v6092, %v6091
        %v6174 = vpack.c.b16 %v6094, %v6093
        %v6175 = vpack.c.b16 %v6096, %v6095
        %v6176 = vpack.c.b16 %v6098, %v6097
        %v6177 = vpack.c.b16 %v6100, %v6099
        %v6178 = vpack.c.b16 %v6102, %v6101
        %v6179 = vpack.c.b16 %v6104, %v6103
        %v6180 = vpack.c.b16 %v6106, %v6105
        %v6181 = vpack.c.b16 %v6108, %v6107
        %v6182 = vpack.c.b16 %v6110, %v6109
        %6255 = vmatprep.subr.bf16.mxu0 0
        %6256 = vmatpush1.bf16.msra.mxu0 %v6118
        %6257 = vmatprep.subr.bf16.mxu0 0
        %6258 = vmatpush1.bf16.msra.mxu0 %v6117
        %6259 = vmatprep.subr.bf16.mxu0 0
        %6260 = vmatpush1.bf16.msra.mxu0 %v6116
        %6261 = vmatprep.subr.bf16.mxu0 0
        %6262 = vmatpush1.bf16.msra.mxu0 %v6115
        %6263 = vmatprep.subr.bf16.mxu0 0
        %6264 = vmatpush1.bf16.msra.mxu0 %v6114
        %6265 = vmatprep.subr.bf16.mxu0 0
        %6266 = vmatpush1.bf16.msra.mxu0 %v6113
        %6267 = vmatprep.subr.bf16.mxu0 0
        %6268 = vmatpush1.bf16.msra.mxu0 %v6112
        %6269 = vmatprep.subr.bf16.mxu0 0
        %6270 = vmatpush1.bf16.msra.mxu0 %v6111
        %6271 = vmatprep.subr.bf16.mxu0 0
        %6272 = vmatpush2.bf16.msra.mxu0 %v6126
        %6273 = vmatprep.subr.bf16.mxu0 0
        %6274 = vmatpush2.bf16.msra.mxu0 %v6125
        %6275 = vmatprep.subr.bf16.mxu0 0
        %6276 = vmatpush2.bf16.msra.mxu0 %v6124
        %6277 = vmatprep.subr.bf16.mxu0 0
        %6278 = vmatpush2.bf16.msra.mxu0 %v6123
        %6279 = vmatprep.subr.bf16.mxu0 0
        %6280 = vmatpush2.bf16.msra.mxu0 %v6122
        %6281 = vmatprep.subr.bf16.mxu0 0
        %6282 = vmatpush2.bf16.msra.mxu0 %v6121
        %6283 = vmatprep.subr.bf16.mxu0 0
        %6284 = vmatpush2.bf16.msra.mxu0 %v6120
        %6285 = vmatprep.subr.bf16.mxu0 0
        %6286 = vmatpush2.bf16.msra.mxu0 %v6119
        %6287 = vmatprep.mubr.bf16.mxu0 %v5680
        %6288 = vmatmul.mubr.bf16.gmra.mxu0 %v5679
        %v6289 = vpop.f32.mrf.mxu0
        %v6290 = vadd.f32 %v5453, %v6289
        %v6291 = vpop.f32.mrf.mxu0
        %v6292 = vpop.f32.mrf.mxu0
        %v6293 = vadd.f32 %v5453, %v6292
        %v6294 = vpop.f32.mrf.mxu0
        %6295 = vmatprep.mubr.bf16.mxu0 %v5689
        %6296 = vmatmul.mubr.bf16.gmra.mxu0 %v5688
        %v6297 = vpop.f32.mrf.mxu0
        %v6298 = vadd.f32 %v5453, %v6297
        %v6299 = vpop.f32.mrf.mxu0
        %v6300 = vpop.f32.mrf.mxu0
        %v6301 = vadd.f32 %v5453, %v6300
        %v6302 = vpop.f32.mrf.mxu0
        %6303 = vmatprep.mubr.bf16.mxu0 %v5698
        %6304 = vmatmul.mubr.bf16.gmra.mxu0 %v5697
        %v6305 = vpop.f32.mrf.mxu0
        %v6306 = vadd.f32 %v5453, %v6305
        %v6307 = vpop.f32.mrf.mxu0
        %v6308 = vpop.f32.mrf.mxu0
        %v6309 = vadd.f32 %v5453, %v6308
        %v6310 = vpop.f32.mrf.mxu0
        %6311 = vmatprep.mubr.bf16.mxu0 %v5707
        %6312 = vmatmul.mubr.bf16.gmra.mxu0 %v5706
        %v6313 = vpop.f32.mrf.mxu0
        %v6314 = vadd.f32 %v5453, %v6313
        %v6315 = vpop.f32.mrf.mxu0
        %v6316 = vpop.f32.mrf.mxu0
        %v6317 = vadd.f32 %v5453, %v6316
        %v6318 = vpop.f32.mrf.mxu0
        %6319 = vmatprep.mubr.bf16.mxu0 %v5716
        %6320 = vmatmul.mubr.bf16.gmra.mxu0 %v5715
        %v6321 = vpop.f32.mrf.mxu0
        %v6322 = vadd.f32 %v5453, %v6321
        %v6323 = vpop.f32.mrf.mxu0
        %v6324 = vpop.f32.mrf.mxu0
        %v6325 = vadd.f32 %v5453, %v6324
        %v6326 = vpop.f32.mrf.mxu0
        %6327 = vmatprep.mubr.bf16.mxu0 %v5725
        %6328 = vmatmul.mubr.bf16.gmra.mxu0 %v5724
        %v6329 = vpop.f32.mrf.mxu0
        %v6330 = vadd.f32 %v5453, %v6329
        %v6331 = vpop.f32.mrf.mxu0
        %v6332 = vpop.f32.mrf.mxu0
        %v6333 = vadd.f32 %v5453, %v6332
        %v6334 = vpop.f32.mrf.mxu0
        %6335 = vmatprep.mubr.bf16.mxu0 %v5734
        %6336 = vmatmul.mubr.bf16.gmra.mxu0 %v5733
        %v6337 = vpop.f32.mrf.mxu0
        %v6338 = vadd.f32 %v5453, %v6337
        %v6339 = vpop.f32.mrf.mxu0
        %v6340 = vpop.f32.mrf.mxu0
        %v6341 = vadd.f32 %v5453, %v6340
        %v6342 = vpop.f32.mrf.mxu0
        %6343 = vmatprep.mubr.bf16.mxu0 %v5743
        %6344 = vmatmul.mubr.bf16.gmra.mxu0 %v5742
        %v6345 = vpop.f32.mrf.mxu0
        %v6346 = vadd.f32 %v5453, %v6345
        %v6347 = vpop.f32.mrf.mxu0
        %v6348 = vpop.f32.mrf.mxu0
        %v6349 = vadd.f32 %v5453, %v6348
        %v6350 = vpop.f32.mrf.mxu0
        %6351 = vdwg.mxu0
        %6352 = vmatprep.subr.bf16.mxu0 0
        %6353 = vmatpush1.bf16.msra.mxu0 %v6134
        %6354 = vmatprep.subr.bf16.mxu0 0
        %6355 = vmatpush1.bf16.msra.mxu0 %v6133
        %6356 = vmatprep.subr.bf16.mxu0 0
        %6357 = vmatpush1.bf16.msra.mxu0 %v6132
        %6358 = vmatprep.subr.bf16.mxu0 0
        %6359 = vmatpush1.bf16.msra.mxu0 %v6131
        %6360 = vmatprep.subr.bf16.mxu0 0
        %6361 = vmatpush1.bf16.msra.mxu0 %v6130
        %6362 = vmatprep.subr.bf16.mxu0 0
        %6363 = vmatpush1.bf16.msra.mxu0 %v6129
        %6364 = vmatprep.subr.bf16.mxu0 0
        %6365 = vmatpush1.bf16.msra.mxu0 %v6128
        %6366 = vmatprep.subr.bf16.mxu0 0
        %6367 = vmatpush1.bf16.msra.mxu0 %v6127
        %6368 = vmatprep.subr.bf16.mxu0 0
        %6369 = vmatpush2.bf16.msra.mxu0 %v6142
        %6370 = vmatprep.subr.bf16.mxu0 0
        %6371 = vmatpush2.bf16.msra.mxu0 %v6141
        %6372 = vmatprep.subr.bf16.mxu0 0
        %6373 = vmatpush2.bf16.msra.mxu0 %v6140
        %6374 = vmatprep.subr.bf16.mxu0 0
        %6375 = vmatpush2.bf16.msra.mxu0 %v6139
        %6376 = vmatprep.subr.bf16.mxu0 0
        %6377 = vmatpush2.bf16.msra.mxu0 %v6138
        %6378 = vmatprep.subr.bf16.mxu0 0
        %6379 = vmatpush2.bf16.msra.mxu0 %v6137
        %6380 = vmatprep.subr.bf16.mxu0 0
        %6381 = vmatpush2.bf16.msra.mxu0 %v6136
        %6382 = vmatprep.subr.bf16.mxu0 0
        %6383 = vmatpush2.bf16.msra.mxu0 %v6135
        %6384 = vmatprep.mubr.bf16.mxu0 %v5682
        %6385 = vmatmul.mubr.bf16.gmra.mxu0 %v5681
        %v6386 = vpop.f32.mrf.mxu0
        %v6387 = vadd.f32 %v6290, %v6386
        %v6388 = vpop.f32.mrf.mxu0
        %v6389 = vpop.f32.mrf.mxu0
        %v6390 = vadd.f32 %v6293, %v6389
        %v6391 = vpop.f32.mrf.mxu0
        %6392 = vmatprep.mubr.bf16.mxu0 %v5691
        %6393 = vmatmul.mubr.bf16.gmra.mxu0 %v5690
        %v6394 = vpop.f32.mrf.mxu0
        %v6395 = vadd.f32 %v6298, %v6394
        %v6396 = vpop.f32.mrf.mxu0
        %v6397 = vpop.f32.mrf.mxu0
        %v6398 = vadd.f32 %v6301, %v6397
        %v6399 = vpop.f32.mrf.mxu0
        %6400 = vmatprep.mubr.bf16.mxu0 %v5700
        %6401 = vmatmul.mubr.bf16.gmra.mxu0 %v5699
        %v6402 = vpop.f32.mrf.mxu0
        %v6403 = vadd.f32 %v6306, %v6402
        %v6404 = vpop.f32.mrf.mxu0
        %v6405 = vpop.f32.mrf.mxu0
        %v6406 = vadd.f32 %v6309, %v6405
        %v6407 = vpop.f32.mrf.mxu0
        %6408 = vmatprep.mubr.bf16.mxu0 %v5709
        %6409 = vmatmul.mubr.bf16.gmra.mxu0 %v5708
        %v6410 = vpop.f32.mrf.mxu0
        %v6411 = vadd.f32 %v6314, %v6410
        %v6412 = vpop.f32.mrf.mxu0
        %v6413 = vpop.f32.mrf.mxu0
        %v6414 = vadd.f32 %v6317, %v6413
        %v6415 = vpop.f32.mrf.mxu0
        %6416 = vmatprep.mubr.bf16.mxu0 %v5718
        %6417 = vmatmul.mubr.bf16.gmra.mxu0 %v5717
        %v6418 = vpop.f32.mrf.mxu0
        %v6419 = vadd.f32 %v6322, %v6418
        %v6420 = vpop.f32.mrf.mxu0
        %v6421 = vpop.f32.mrf.mxu0
        %v6422 = vadd.f32 %v6325, %v6421
        %v6423 = vpop.f32.mrf.mxu0
        %6424 = vmatprep.mubr.bf16.mxu0 %v5727
        %6425 = vmatmul.mubr.bf16.gmra.mxu0 %v5726
        %v6426 = vpop.f32.mrf.mxu0
        %v6427 = vadd.f32 %v6330, %v6426
        %v6428 = vpop.f32.mrf.mxu0
        %v6429 = vpop.f32.mrf.mxu0
        %v6430 = vadd.f32 %v6333, %v6429
        %v6431 = vpop.f32.mrf.mxu0
        %6432 = vmatprep.mubr.bf16.mxu0 %v5736
        %6433 = vmatmul.mubr.bf16.gmra.mxu0 %v5735
        %v6434 = vpop.f32.mrf.mxu0
        %v6435 = vadd.f32 %v6338, %v6434
        %v6436 = vpop.f32.mrf.mxu0
        %v6437 = vpop.f32.mrf.mxu0
        %v6438 = vadd.f32 %v6341, %v6437
        %v6439 = vpop.f32.mrf.mxu0
        %6440 = vmatprep.mubr.bf16.mxu0 %v5745
        %6441 = vmatmul.mubr.bf16.gmra.mxu0 %v5744
        %v6442 = vpop.f32.mrf.mxu0
        %v6443 = vadd.f32 %v6346, %v6442
        %v6444 = vpop.f32.mrf.mxu0
        %v6445 = vpop.f32.mrf.mxu0
        %v6446 = vadd.f32 %v6349, %v6445
        %v6447 = vpop.f32.mrf.mxu0
        %6448 = vdwg.mxu0
        %6449 = vmatprep.subr.bf16.mxu0 0
        %6450 = vmatpush1.bf16.msra.mxu0 %v6150
        %6451 = vmatprep.subr.bf16.mxu0 0
        %6452 = vmatpush1.bf16.msra.mxu0 %v6149
        %6453 = vmatprep.subr.bf16.mxu0 0
        %6454 = vmatpush1.bf16.msra.mxu0 %v6148
        %6455 = vmatprep.subr.bf16.mxu0 0
        %6456 = vmatpush1.bf16.msra.mxu0 %v6147
        %6457 = vmatprep.subr.bf16.mxu0 0
        %6458 = vmatpush1.bf16.msra.mxu0 %v6146
        %6459 = vmatprep.subr.bf16.mxu0 0
        %6460 = vmatpush1.bf16.msra.mxu0 %v6145
        %6461 = vmatprep.subr.bf16.mxu0 0
        %6462 = vmatpush1.bf16.msra.mxu0 %v6144
        %6463 = vmatprep.subr.bf16.mxu0 0
        %6464 = vmatpush1.bf16.msra.mxu0 %v6143
        %6465 = vmatprep.subr.bf16.mxu0 0
        %6466 = vmatpush2.bf16.msra.mxu0 %v6158
        %6467 = vmatprep.subr.bf16.mxu0 0
        %6468 = vmatpush2.bf16.msra.mxu0 %v6157
        %6469 = vmatprep.subr.bf16.mxu0 0
        %6470 = vmatpush2.bf16.msra.mxu0 %v6156
        %6471 = vmatprep.subr.bf16.mxu0 0
        %6472 = vmatpush2.bf16.msra.mxu0 %v6155
        %6473 = vmatprep.subr.bf16.mxu0 0
        %6474 = vmatpush2.bf16.msra.mxu0 %v6154
        %6475 = vmatprep.subr.bf16.mxu0 0
        %6476 = vmatpush2.bf16.msra.mxu0 %v6153
        %6477 = vmatprep.subr.bf16.mxu0 0
        %6478 = vmatpush2.bf16.msra.mxu0 %v6152
        %6479 = vmatprep.subr.bf16.mxu0 0
        %6480 = vmatpush2.bf16.msra.mxu0 %v6151
        %6481 = vmatprep.mubr.bf16.mxu0 %v5684
        %6482 = vmatmul.mubr.bf16.gmra.mxu0 %v5683
        %v6483 = vpop.f32.mrf.mxu0
        %v6484 = vadd.f32 %v6387, %v6483
        %v6485 = vpop.f32.mrf.mxu0
        %v6486 = vpop.f32.mrf.mxu0
        %v6487 = vadd.f32 %v6390, %v6486
        %v6488 = vpop.f32.mrf.mxu0
        %6489 = vmatprep.mubr.bf16.mxu0 %v5693
        %6490 = vmatmul.mubr.bf16.gmra.mxu0 %v5692
        %v6491 = vpop.f32.mrf.mxu0
        %v6492 = vadd.f32 %v6395, %v6491
        %v6493 = vpop.f32.mrf.mxu0
        %v6494 = vpop.f32.mrf.mxu0
        %v6495 = vadd.f32 %v6398, %v6494
        %v6496 = vpop.f32.mrf.mxu0
        %6497 = vmatprep.mubr.bf16.mxu0 %v5702
        %6498 = vmatmul.mubr.bf16.gmra.mxu0 %v5701
        %v6499 = vpop.f32.mrf.mxu0
        %v6500 = vadd.f32 %v6403, %v6499
        %v6501 = vpop.f32.mrf.mxu0
        %v6502 = vpop.f32.mrf.mxu0
        %v6503 = vadd.f32 %v6406, %v6502
        %v6504 = vpop.f32.mrf.mxu0
        %6505 = vmatprep.mubr.bf16.mxu0 %v5711
        %6506 = vmatmul.mubr.bf16.gmra.mxu0 %v5710
        %v6507 = vpop.f32.mrf.mxu0
        %v6508 = vadd.f32 %v6411, %v6507
        %v6509 = vpop.f32.mrf.mxu0
        %v6510 = vpop.f32.mrf.mxu0
        %v6511 = vadd.f32 %v6414, %v6510
        %v6512 = vpop.f32.mrf.mxu0
        %6513 = vmatprep.mubr.bf16.mxu0 %v5720
        %6514 = vmatmul.mubr.bf16.gmra.mxu0 %v5719
        %v6515 = vpop.f32.mrf.mxu0
        %v6516 = vadd.f32 %v6419, %v6515
        %v6517 = vpop.f32.mrf.mxu0
        %v6518 = vpop.f32.mrf.mxu0
        %v6519 = vadd.f32 %v6422, %v6518
        %v6520 = vpop.f32.mrf.mxu0
        %6521 = vmatprep.mubr.bf16.mxu0 %v5729
        %6522 = vmatmul.mubr.bf16.gmra.mxu0 %v5728
        %v6523 = vpop.f32.mrf.mxu0
        %v6524 = vadd.f32 %v6427, %v6523
        %v6525 = vpop.f32.mrf.mxu0
        %v6526 = vpop.f32.mrf.mxu0
        %v6527 = vadd.f32 %v6430, %v6526
        %v6528 = vpop.f32.mrf.mxu0
        %6529 = vmatprep.mubr.bf16.mxu0 %v5738
        %6530 = vmatmul.mubr.bf16.gmra.mxu0 %v5737
        %v6531 = vpop.f32.mrf.mxu0
        %v6532 = vadd.f32 %v6435, %v6531
        %v6533 = vpop.f32.mrf.mxu0
        %v6534 = vpop.f32.mrf.mxu0
        %v6535 = vadd.f32 %v6438, %v6534
        %v6536 = vpop.f32.mrf.mxu0
        %6537 = vmatprep.mubr.bf16.mxu0 %v5747
        %6538 = vmatmul.mubr.bf16.gmra.mxu0 %v5746
        %v6539 = vpop.f32.mrf.mxu0
        %v6540 = vadd.f32 %v6443, %v6539
        %v6541 = vpop.f32.mrf.mxu0
        %v6542 = vpop.f32.mrf.mxu0
        %v6543 = vadd.f32 %v6446, %v6542
        %v6544 = vpop.f32.mrf.mxu0
        %6545 = vdwg.mxu0
        %6546 = vmatprep.subr.bf16.mxu0 0
        %6547 = vmatpush1.bf16.msra.mxu0 %v6166
        %6548 = vmatprep.subr.bf16.mxu0 0
        %6549 = vmatpush1.bf16.msra.mxu0 %v6165
        %6550 = vmatprep.subr.bf16.mxu0 0
        %6551 = vmatpush1.bf16.msra.mxu0 %v6164
        %6552 = vmatprep.subr.bf16.mxu0 0
        %6553 = vmatpush1.bf16.msra.mxu0 %v6163
        %6554 = vmatprep.subr.bf16.mxu0 0
        %6555 = vmatpush1.bf16.msra.mxu0 %v6162
        %6556 = vmatprep.subr.bf16.mxu0 0
        %6557 = vmatpush1.bf16.msra.mxu0 %v6161
        %6558 = vmatprep.subr.bf16.mxu0 0
        %6559 = vmatpush1.bf16.msra.mxu0 %v6160
        %6560 = vmatprep.subr.bf16.mxu0 0
        %6561 = vmatpush1.bf16.msra.mxu0 %v6159
        %6562 = vmatprep.subr.bf16.mxu0 0
        %6563 = vmatpush2.bf16.msra.mxu0 %v6174
        %6564 = vmatprep.subr.bf16.mxu0 0
        %6565 = vmatpush2.bf16.msra.mxu0 %v6173
        %6566 = vmatprep.subr.bf16.mxu0 0
        %6567 = vmatpush2.bf16.msra.mxu0 %v6172
        %6568 = vmatprep.subr.bf16.mxu0 0
        %6569 = vmatpush2.bf16.msra.mxu0 %v6171
        %6570 = vmatprep.subr.bf16.mxu0 0
        %6571 = vmatpush2.bf16.msra.mxu0 %v6170
        %6572 = vmatprep.subr.bf16.mxu0 0
        %6573 = vmatpush2.bf16.msra.mxu0 %v6169
        %6574 = vmatprep.subr.bf16.mxu0 0
        %6575 = vmatpush2.bf16.msra.mxu0 %v6168
        %6576 = vmatprep.subr.bf16.mxu0 0
        %6577 = vmatpush2.bf16.msra.mxu0 %v6167
        %6578 = vmatprep.mubr.bf16.mxu0 %v5686
        %6579 = vmatmul.mubr.bf16.gmra.mxu0 %v5685
        %v6580 = vpop.f32.mrf.mxu0
        %v6581 = vadd.f32 %v6484, %v6580
        %v6582 = vpop.f32.mrf.mxu0
        %v6583 = vpop.f32.mrf.mxu0
        %v6584 = vadd.f32 %v6487, %v6583
        %v6585 = vpop.f32.mrf.mxu0
        %6586 = vmatprep.mubr.bf16.mxu0 %v5695
        %6587 = vmatmul.mubr.bf16.gmra.mxu0 %v5694
        %v6588 = vpop.f32.mrf.mxu0
        %v6589 = vadd.f32 %v6492, %v6588
        %v6590 = vpop.f32.mrf.mxu0
        %v6591 = vpop.f32.mrf.mxu0
        %v6592 = vadd.f32 %v6495, %v6591
        %v6593 = vpop.f32.mrf.mxu0
        %6594 = vmatprep.mubr.bf16.mxu0 %v5704
        %6595 = vmatmul.mubr.bf16.gmra.mxu0 %v5703
        %v6596 = vpop.f32.mrf.mxu0
        %v6597 = vadd.f32 %v6500, %v6596
        %v6598 = vpop.f32.mrf.mxu0
        %v6599 = vpop.f32.mrf.mxu0
        %v6600 = vadd.f32 %v6503, %v6599
        %v6601 = vpop.f32.mrf.mxu0
        %6602 = vmatprep.mubr.bf16.mxu0 %v5713
        %6603 = vmatmul.mubr.bf16.gmra.mxu0 %v5712
        %v6604 = vpop.f32.mrf.mxu0
        %v6605 = vadd.f32 %v6508, %v6604
        %v6606 = vpop.f32.mrf.mxu0
        %v6607 = vpop.f32.mrf.mxu0
        %v6608 = vadd.f32 %v6511, %v6607
        %v6609 = vpop.f32.mrf.mxu0
        %6610 = vmatprep.mubr.bf16.mxu0 %v5722
        %6611 = vmatmul.mubr.bf16.gmra.mxu0 %v5721
        %v6612 = vpop.f32.mrf.mxu0
        %v6613 = vadd.f32 %v6516, %v6612
        %v6614 = vpop.f32.mrf.mxu0
        %v6615 = vpop.f32.mrf.mxu0
        %v6616 = vadd.f32 %v6519, %v6615
        %v6617 = vpop.f32.mrf.mxu0
        %6618 = vmatprep.mubr.bf16.mxu0 %v5731
        %6619 = vmatmul.mubr.bf16.gmra.mxu0 %v5730
        %v6620 = vpop.f32.mrf.mxu0
        %v6621 = vadd.f32 %v6524, %v6620
        %v6622 = vpop.f32.mrf.mxu0
        %v6623 = vpop.f32.mrf.mxu0
        %v6624 = vadd.f32 %v6527, %v6623
        %v6625 = vpop.f32.mrf.mxu0
        %6626 = vmatprep.mubr.bf16.mxu0 %v5740
        %6627 = vmatmul.mubr.bf16.gmra.mxu0 %v5739
        %v6628 = vpop.f32.mrf.mxu0
        %v6629 = vadd.f32 %v6532, %v6628
        %v6630 = vpop.f32.mrf.mxu0
        %v6631 = vpop.f32.mrf.mxu0
        %v6632 = vadd.f32 %v6535, %v6631
        %v6633 = vpop.f32.mrf.mxu0
        %6634 = vmatprep.mubr.bf16.mxu0 %v5749
        %6635 = vmatmul.mubr.bf16.gmra.mxu0 %v5748
        %v6636 = vpop.f32.mrf.mxu0
        %v6637 = vadd.f32 %v6540, %v6636
        %v6638 = vpop.f32.mrf.mxu0
        %v6639 = vpop.f32.mrf.mxu0
        %v6640 = vadd.f32 %v6543, %v6639
        %v6641 = vpop.f32.mrf.mxu0
        %6642 = vdwg.mxu0
        %6643 = vmatprep.subr.bf16.mxu0 0
        %6644 = vmatpush1.bf16.msra.mxu0 %v6182
        %6645 = vmatprep.subr.bf16.mxu0 0
        %6646 = vmatpush1.bf16.msra.mxu0 %v6181
        %6647 = vmatprep.subr.bf16.mxu0 0
        %6648 = vmatpush1.bf16.msra.mxu0 %v6180
        %6649 = vmatprep.subr.bf16.mxu0 0
        %6650 = vmatpush1.bf16.msra.mxu0 %v6179
        %6651 = vmatprep.subr.bf16.mxu0 0
        %6652 = vmatpush1.bf16.msra.mxu0 %v6178
        %6653 = vmatprep.subr.bf16.mxu0 0
        %6654 = vmatpush1.bf16.msra.mxu0 %v6177
        %6655 = vmatprep.subr.bf16.mxu0 0
        %6656 = vmatpush1.bf16.msra.mxu0 %v6176
        %6657 = vmatprep.subr.bf16.mxu0 0
        %6658 = vmatpush1.bf16.msra.mxu0 %v6175
        %6659 = vmatprep.subr.bf16.mxu0 0
        %6660 = vmatpush2.bf16.msra.mxu0 0
        %6661 = vmatprep.subr.bf16.mxu0 0
        %6662 = vmatpush2.bf16.msra.mxu0 0
        %6663 = vmatprep.subr.bf16.mxu0 0
        %6664 = vmatpush2.bf16.msra.mxu0 0
        %6665 = vmatprep.subr.bf16.mxu0 0
        %6666 = vmatpush2.bf16.msra.mxu0 0
        %6667 = vmatprep.subr.bf16.mxu0 0
        %6668 = vmatpush2.bf16.msra.mxu0 0
        %6669 = vmatprep.subr.bf16.mxu0 0
        %6670 = vmatpush2.bf16.msra.mxu0 0
        %6671 = vmatprep.subr.bf16.mxu0 0
        %6672 = vmatpush2.bf16.msra.mxu0 0
        %6673 = vmatprep.subr.bf16.mxu0 0
        %6674 = vmatpush2.bf16.msra.mxu0 0
        %6675 = vmatprep.mubr.bf16.mxu0 0
        %6676 = vmatmul.mubr.bf16.gmra.mxu0 %v5687
        %v6677 = vpop.f32.mrf.mxu0
        %v6678 = vadd.f32 %v6581, %v6677
        %v6679 = vpop.f32.mrf.mxu0
        %v6680 = vpop.f32.mrf.mxu0
        %v6681 = vadd.f32 %v6584, %v6680
        %v6682 = vpop.f32.mrf.mxu0
        %6683 = vmatprep.mubr.bf16.mxu0 0
        %6684 = vmatmul.mubr.bf16.gmra.mxu0 %v5696
        %v6685 = vpop.f32.mrf.mxu0
        %v6686 = vadd.f32 %v6589, %v6685
        %v6687 = vpop.f32.mrf.mxu0
        %v6688 = vpop.f32.mrf.mxu0
        %v6689 = vadd.f32 %v6592, %v6688
        %v6690 = vpop.f32.mrf.mxu0
        %6691 = vmatprep.mubr.bf16.mxu0 0
        %6692 = vmatmul.mubr.bf16.gmra.mxu0 %v5705
        %v6693 = vpop.f32.mrf.mxu0
        %v6694 = vadd.f32 %v6597, %v6693
        %v6695 = vpop.f32.mrf.mxu0
        %v6696 = vpop.f32.mrf.mxu0
        %v6697 = vadd.f32 %v6600, %v6696
        %v6698 = vpop.f32.mrf.mxu0
        %6699 = vmatprep.mubr.bf16.mxu0 0
        %6700 = vmatmul.mubr.bf16.gmra.mxu0 %v5714
        %v6701 = vpop.f32.mrf.mxu0
        %v6702 = vadd.f32 %v6605, %v6701
        %v6703 = vpop.f32.mrf.mxu0
        %v6704 = vpop.f32.mrf.mxu0
        %v6705 = vadd.f32 %v6608, %v6704
        %v6706 = vpop.f32.mrf.mxu0
        %6707 = vmatprep.mubr.bf16.mxu0 0
        %6708 = vmatmul.mubr.bf16.gmra.mxu0 %v5723
        %v6709 = vpop.f32.mrf.mxu0
        %v6710 = vadd.f32 %v6613, %v6709
        %v6711 = vpop.f32.mrf.mxu0
        %v6712 = vpop.f32.mrf.mxu0
        %v6713 = vadd.f32 %v6616, %v6712
        %v6714 = vpop.f32.mrf.mxu0
        %6715 = vmatprep.mubr.bf16.mxu0 0
        %6716 = vmatmul.mubr.bf16.gmra.mxu0 %v5732
        %v6717 = vpop.f32.mrf.mxu0
        %v6718 = vadd.f32 %v6621, %v6717
        %v6719 = vpop.f32.mrf.mxu0
        %v6720 = vpop.f32.mrf.mxu0
        %v6721 = vadd.f32 %v6624, %v6720
        %v6722 = vpop.f32.mrf.mxu0
        %6723 = vmatprep.mubr.bf16.mxu0 0
        %6724 = vmatmul.mubr.bf16.gmra.mxu0 %v5741
        %v6725 = vpop.f32.mrf.mxu0
        %v6726 = vadd.f32 %v6629, %v6725
        %v6727 = vpop.f32.mrf.mxu0
        %v6728 = vpop.f32.mrf.mxu0
        %v6729 = vadd.f32 %v6632, %v6728
        %v6730 = vpop.f32.mrf.mxu0
        %6731 = vmatprep.mubr.bf16.mxu0 0
        %6732 = vmatmul.mubr.bf16.gmra.mxu0 %v5750
        %v6733 = vpop.f32.mrf.mxu0
        %v6734 = vadd.f32 %v6637, %v6733
        %v6735 = vpop.f32.mrf.mxu0
        %v6736 = vpop.f32.mrf.mxu0
        %v6737 = vadd.f32 %v6640, %v6736
        %v6738 = vpop.f32.mrf.mxu0
        %6739 = vdwg.mxu0
        %v6740 = vmax.f32 %v6678, 0.0
        %v6741 = vmax.f32 %v6681, 0.0
        %v6742 = vmax.f32 %v6686, 0.0
        %v6743 = vmax.f32 %v6689, 0.0
        %v6744 = vmax.f32 %v6694, 0.0
        %v6745 = vmax.f32 %v6697, 0.0
        %v6746 = vmax.f32 %v6702, 0.0
        %v6747 = vmax.f32 %v6705, 0.0
        %v6748 = vmax.f32 %v6710, 0.0
        %v6749 = vmax.f32 %v6713, 0.0
        %v6750 = vmax.f32 %v6718, 0.0
        %v6751 = vmax.f32 %v6721, 0.0
        %v6752 = vmax.f32 %v6726, 0.0
        %v6753 = vmax.f32 %v6729, 0.0
        %v6754 = vmax.f32 %v6734, 0.0
        %v6755 = vmax.f32 %v6737, 0.0
        %6756 = vst [vmem:[%s246] sm:$0xff] %v6740
        %6757 = vst [vmem:[%s246 + $0x8] sm:$0xff] %v6741
        %6758 = vst [vmem:[%s246 + $0x10] sm:$0xff] %v6742
        %6759 = vst [vmem:[%s246 + $0x18] sm:$0xff] %v6743
        %6760 = vst [vmem:[%s246 + $0x20] sm:$0xff] %v6744
        %6761 = vst [vmem:[%s246 + $0x28] sm:$0xff] %v6745
        %6762 = vst [vmem:[%s246 + $0x30] sm:$0xff] %v6746
        %6763 = vst [vmem:[%s246 + $0x38] sm:$0xff] %v6747
        %6764 = vst [vmem:[%s246 + $0x40] sm:$0xff] %v6748
        %6765 = vst [vmem:[%s246 + $0x48] sm:$0xff] %v6749
        %6766 = vst [vmem:[%s246 + $0x50] sm:$0xff] %v6750
        %6767 = vst [vmem:[%s246 + $0x58] sm:$0xff] %v6751
        %6768 = vst [vmem:[%s246 + $0x60] sm:$0xff] %v6752
        %6769 = vst [vmem:[%s246 + $0x68] sm:$0xff] %v6753
        %6770 = vst [vmem:[%s246 + $0x70] sm:$0xff] %v6754
        %6771 = vst [vmem:[%s246 + $0x78] sm:$0xff] %v6755
        %s6772 = sand.u32 %s152, 1
        %s6773 = scalar_lea.sflag [#allocation7], %s6772
        %s6774 = sand.u32 %s152, 1
        %s6775 = smul.addr %s6774, 128
        %s6776 = scalar_lea.vmem [#allocation8], %s6775
        // Predicated region
        $region53: #{tpu_custom_call.1} parent=39 // pred_check
          %p6777 = pneg %p162
        $region54: #{tpu_custom_call.1} parent=39 // pred_check_branch
          %6779 = sbr.rel (%p6777) target = $region56
        $region55: #{tpu_custom_call.1} parent=39 // pred_region
          %s6780 = smul.u32 8, %s25
          %s6782 = ssub.s32 2048, 2048
          %6783 = vsyncadd %s6773, %s6782
          %s6784 = smul.addr %s6780, 2
          %s6785 = smul.addr %s24, 32
          %s6786 = sadd.s32 %s6784, %s6785
          %s6787 = smul.addr %s6786, 128
          %s6788 = scalar_lea.hbm %s5, %s6787
          %s6789 = sshll.u32 %s6776, 4
          %s6790 = int_to_ptr.vmem [resolvable:$true] %s6789
          %6795 = dma.vmem_to_hbm [thread:$0]  %s6790, 2048, %s6788, %s6773, 128, 128, 8
        $region56: #{tpu_custom_call.1} parent=39 // pred_fallthru
          _
      $region40: #{tpu_custom_call.1} parent=5 // pred_fallthru
        _
      %p6796 = scmp.le.s32.totalorder 2, %s15
      // Predicated region
      $region57: #{tpu_custom_call.1} parent=5 // pred_check
        %p6797 = pneg %p6796
      $region58: #{tpu_custom_call.1} parent=5 // pred_check_branch
        %6799 = sbr.rel (%p6797) target = $region60
      $region59: #{tpu_custom_call.1} parent=5 // pred_region
        %s6800 = ssub.s32 %s15, 2
        // Predicated region
        $region61: #{tpu_custom_call.1} parent=59 // pred_check
          %p6801 = pneg %p168
        $region62: #{tpu_custom_call.1} parent=59 // pred_check_branch
          %6803 = sbr.rel (%p6801) target = $region64
        $region63: #{tpu_custom_call.1} parent=59 // pred_region
          %s6804 = sand.u32 %s153, 1
          %s6805 = scalar_lea.sflag [#allocation7], %s6804
          %s6806 = sand.u32 %s153, 1
          %s6807 = smul.addr %s6806, 128
          %s6808 = scalar_lea.vmem [#allocation8], %s6807
          %6809 = dma.done %s6805, 2048
        $region64: #{tpu_custom_call.1} parent=59 // pred_fallthru
          _
      $region60: #{tpu_custom_call.1} parent=5 // pred_fallthru
        _
    $region6: #{tpu_custom_call.1} parent=1 // loop_footer
      %s19 = sadd.s32 1, %s15
    $region7: #{tpu_custom_call.1} parent=1 // loop_footer_branch
      %14 = sbr.rel target = $region3
    $region8: #{tpu_custom_call.1} parent=1 // loop_exit
      _
    %6810 = vsyncpa [#allocation6], 1
    %s6811 = scalar_lea.sflag [#allocation6], 1
    %6812 = vsyncpa %s6811, 1
    %6813 = vsyncpa [#allocation7], 1
    %s6814 = scalar_lea.sflag [#allocation7], 1
    %6815 = vsyncpa %s6814, 1

</llo_original>
